<compile_context>
chip_gen: v7x
topology: tpu7x:2x2x1
jax: 0.10.0
libtpu: 0.0.40
codegen_flags: <defaults>
</compile_context>

<pallas_src>
import jax
import jax.numpy as jnp
from jax.experimental import pallas as pl
from jax.experimental.pallas import tpu as pltpu

N_ITERS = 7
N_NODE_FEATURES = 10   # H
N_NODE_INPUTS = 9
N_EDGE_FEATURES = 11
N_NODE_OUTPUTS = 9
MSG_HIDDEN = 96
OUT_PAD = 128          # lane-dense output width

_F32 = jnp.float32
_BF16 = jnp.bfloat16


def _mm(a_bf, b_bf):
    """MXU matmul on pre-cast bf16 operands, f32 accumulation."""
    return jnp.dot(a_bf, b_bf, preferred_element_type=_F32)


def _gnn_kernel(
    node_inputs_ref, ids_stacked_ref, dst_ids_row_ref,
    w1s_ref, w1d_ref, b1_ref, w2_ref, b2_ref, w3_ref, b3_ref,
    w_in_ref, b_ih_ref, w_gru_ref, b_hh_arr_ref,
    wo_ref, bo_ref,
    out_ref, h_all_ref,
):
    H = N_NODE_FEATURES
    n_nodes = node_inputs_ref.shape[0]
    n_edges = dst_ids_row_ref.shape[1]
    two_e = ids_stacked_ref.shape[0]

    # ---- one-hot gather/scatter masks built in-kernel from int32 ids (exact in bf16)
    ids_st = ids_stacked_ref[...]                                     # (2E, 1) i32
    oh_stacked = (jax.lax.broadcasted_iota(jnp.int32, (two_e, n_nodes), 1)
                  == ids_st).astype(_BF16)                            # (2E, N) [src; dst]
    dst_row = dst_ids_row_ref[...]                                    # (1, E) i32
    dst_oh_t = (jax.lax.broadcasted_iota(jnp.int32, (n_nodes, n_edges), 0)
                == dst_row).astype(_BF16)                             # (N, E) scatter

    # ---- loop-invariant hoists (JAX does not CSE broadcast_in_dim) ----
    b1 = jnp.broadcast_to(b1_ref[...], (n_edges, MSG_HIDDEN))
    b2 = jnp.broadcast_to(b2_ref[...], (n_edges, MSG_HIDDEN))
    b3 = jnp.broadcast_to(b3_ref[...], (n_edges, N_EDGE_FEATURES))

    # node_inputs' contribution to the GRU input gates never changes:
    # gi_node = [gi_r | gi_z | gi_n] (+ b_ih), combined with rearranged b_hh into the
    # per-iteration bias of the fused gate matmul (lanes [r+hr | z+hz | n_in | n_hid]).
    gi_node = _mm(node_inputs_ref[...].astype(_BF16), w_in_ref[...]) + b_ih_ref[...]  # (N, 3H)
    bias_all = (jnp.concatenate([gi_node, jnp.zeros((n_nodes, H), _F32)], axis=1)
                + b_hh_arr_ref[...])                                  # (N, 4H)

    hidden = jnp.zeros((n_nodes, H), dtype=_F32)

    # n_iters is small & static -> fully unrolled inside the kernel.
    for i in range(N_ITERS):
        hidden_bf = hidden.astype(_BF16)                              # single cast / iter

        # Fused src+dst gather: one (2E,N)@(N,H) matmul, split at a sublane boundary.
        both = _mm(oh_stacked, hidden_bf).astype(_BF16)               # exact (0/1 mask)
        src_msg = both[:n_edges]                                      # (E, H)
        dst_msg = both[n_edges:]                                      # (E, H)

        # msg_net: Linear(2H,96)+ReLU -> Linear(96,96)+ReLU -> Linear(96,11).
        # Input concat replaced by two dots on the split W1 halves.
        h1 = jnp.maximum(
            _mm(src_msg, w1s_ref[...]) + _mm(dst_msg, w1d_ref[...]) + b1, 0.0)
        h2 = jnp.maximum(_mm(h1.astype(_BF16), w2_ref[...]) + b2, 0.0)
        message = _mm(h2.astype(_BF16), w3_ref[...]) + b3             # (E, 11)

        # index_add_ over dst_ids == dst_onehot^T @ message (duplicates sum).
        agg = _mm(dst_oh_t, message.astype(_BF16))                    # (N, 11)

        # GRU cell (PyTorch gate order [r, z, n]): ONE fused matmul.
        #   lanes [0:2H)  -> (gi_r+gh_r | gi_z+gh_z)  summed inside the matmul
        #   lanes [2H:3H) -> gi_n (agg rows only)
        #   lanes [3H:4H) -> gh_n (hidden rows only)
        comb = jnp.concatenate([agg.astype(_BF16), hidden_bf], axis=1)   # (N, 11+H)
        g = _mm(comb, w_gru_ref[...]) + bias_all                         # (N, 4H)
        rz = jax.nn.sigmoid(g[:, :2 * H])
        r = rz[:, :H]
        z = rz[:, H:]
        n = jnp.tanh(g[:, 2 * H:3 * H] + r * g[:, 3 * H:])
        hidden = (1.0 - z) * n + z * hidden                           # f32 state

        h_all_ref[i * n_nodes:(i + 1) * n_nodes, :] = hidden          # static row slice

    # Output head: Linear(10, 9) padded to 128 lanes, applied once to all 7 states.
    out_ref[...] = _mm(h_all_ref[...].astype(_BF16), wo_ref[...]) + bo_ref[...]


def gnn_forward(node_inputs, src_ids, dst_ids, params):
    n_nodes = node_inputs.shape[0]
    n_edges = src_ids.shape[0]
    H = N_NODE_FEATURES

    bf = lambda w: w.astype(_BF16)
    w1, w_ih, w_hh = params["w1"], params["w_ih"], params["w_hh"]
    b_ih, b_hh = params["b_ih"], params["b_hh"]

    # ids in the 2-D layouts the kernel compares against iota (no dense one-hots in HBM).
    ids_stacked = jnp.concatenate([src_ids, dst_ids]).astype(jnp.int32).reshape(2 * n_edges, 1)
    dst_ids_row = dst_ids.astype(jnp.int32).reshape(1, n_edges)

    # Fused GRU gate weight: rows 0:11 act on agg, rows 11:11+H act on hidden.
    #   cols [0:2H)  = [w_ia_r; w_hh_r | w_ia_z; w_hh_z]  (r/z input+hidden summed)
    #   cols [2H:3H) = [w_ia_n; 0],  cols [3H:4H) = [0; w_hh_n]
    w_ia = w_ih[N_NODE_INPUTS:]                                        # (11, 3H)
    top = jnp.concatenate([w_ia, jnp.zeros((N_EDGE_FEATURES, H), _F32)], axis=1)
    bot = jnp.concatenate([w_hh[:, :2 * H], jnp.zeros((H, H), _F32), w_hh[:, 2 * H:]], axis=1)
    w_gru = jnp.concatenate([top, bot], axis=0)                        # (11+H, 4H)
    b_hh_arr = jnp.concatenate(
        [b_hh[:, :2 * H], jnp.zeros((1, H), _F32), b_hh[:, 2 * H:]], axis=1)  # (1, 4H)

    # Lane-dense output head (avoid masked vst on a 9-wide last dim).
    wo_pad = jnp.zeros((H, OUT_PAD), _F32).at[:, :N_NODE_OUTPUTS].set(params["wo"])
    bo_pad = jnp.zeros((1, OUT_PAD), _F32).at[:, :N_NODE_OUTPUTS].set(params["bo"])

    args = (
        node_inputs.astype(_F32), ids_stacked, dst_ids_row,
        # msg_net: W1 split into src/dst halves.
        bf(w1[:H]), bf(w1[H:]), params["b1"],
        bf(params["w2"]), params["b2"],
        bf(params["w3"]), params["b3"],
        # GRU: node-input slice (loop-invariant), fused agg+hidden gate matrix.
        bf(w_ih[:N_NODE_INPUTS]), b_ih,
        bf(w_gru), b_hh_arr,
        # output head
        bf(wo_pad), bo_pad,
    )

    vmem = pltpu.MemorySpace.VMEM
    out_flat = pl.pallas_call(
        _gnn_kernel,
        out_shape=jax.ShapeDtypeStruct((N_ITERS * n_nodes, OUT_PAD), _F32),
        in_specs=[pl.BlockSpec(memory_space=vmem)] * len(args),
        out_specs=pl.BlockSpec(memory_space=vmem),
        scratch_shapes=[pltpu.VMEM((N_ITERS * n_nodes, H), _F32)],
    )(*args)
    # rows [i*N:(i+1)*N] hold iteration i -> (n_iters, n_nodes, n_node_outputs)
    return out_flat[:, :N_NODE_OUTPUTS].reshape(N_ITERS, n_nodes, N_NODE_OUTPUTS)


def init_params(key):
    """Deterministic PyTorch-style uniform init. Weights stored transposed (in, out)."""
    def linear(k, fan_in, fan_out, bound):
        kw, kb = jax.random.split(k)
        w = jax.random.uniform(kw, (fan_in, fan_out), jnp.float32, -bound, bound)
        b = jax.random.uniform(kb, (1, fan_out), jnp.float32, -bound, bound)
        return w, b

    ks = jax.random.split(key, 6)
    p = {}
    # msg_net
    p["w1"], p["b1"] = linear(ks[0], 2 * N_NODE_FEATURES, MSG_HIDDEN,
                              1.0 / (2 * N_NODE_FEATURES) ** 0.5)
    p["w2"], p["b2"] = linear(ks[1], MSG_HIDDEN, MSG_HIDDEN, 1.0 / MSG_HIDDEN ** 0.5)
    p["w3"], p["b3"] = linear(ks[2], MSG_HIDDEN, N_EDGE_FEATURES, 1.0 / MSG_HIDDEN ** 0.5)
    # GRU (input_size = n_node_inputs + n_edge_features = 20, hidden = 10),
    # gate order [r, z, n] along the output (3H) axis, as in PyTorch.
    gru_in = N_NODE_INPUTS + N_EDGE_FEATURES
    gru_bound = 1.0 / N_NODE_FEATURES ** 0.5
    p["w_ih"], p["b_ih"] = linear(ks[3], gru_in, 3 * N_NODE_FEATURES, gru_bound)
    p["w_hh"], p["b_hh"] = linear(ks[4], N_NODE_FEATURES, 3 * N_NODE_FEATURES, gru_bound)
    # output head
    p["wo"], p["bo"] = linear(ks[5], N_NODE_FEATURES, N_NODE_OUTPUTS,
                              1.0 / N_NODE_FEATURES ** 0.5)
    return p


if __name__ == "__main__":
    key = jax.random.PRNGKey(0)
    k_in, k_src, k_dst, k_par = jax.random.split(key, 4)

    n_nodes, n_edges = 16, 32
    node_inputs = jax.random.normal(k_in, (n_nodes, N_NODE_INPUTS), jnp.float32)
    src_ids = jax.random.randint(k_src, (n_edges,), 0, n_nodes, dtype=jnp.int32)
    dst_ids = jax.random.randint(k_dst, (n_edges,), 0, n_nodes, dtype=jnp.int32)

    params = init_params(k_par)

    out = gnn_forward(node_inputs, src_ids, dst_ids, params)
    out = jax.block_until_ready(out)

    assert out.shape == (N_ITERS, n_nodes, N_NODE_OUTPUTS), out.shape
    assert bool(jnp.all(jnp.isfinite(out)))
    print("KERNEL_OK")
</pallas_src>

<mosaic_0001>
module attributes {stable_mosaic.version = 11 : i64} {
  func.func @_gnn_kernel(%arg0: memref<16x9xf32, #tpu.memory_space<vmem>>, %arg1: memref<64x1xi32, #tpu.memory_space<vmem>>, %arg2: memref<1x32xi32, #tpu.memory_space<vmem>>, %arg3: memref<10x96xbf16, #tpu.memory_space<vmem>>, %arg4: memref<10x96xbf16, #tpu.memory_space<vmem>>, %arg5: memref<1x96xf32, #tpu.memory_space<vmem>>, %arg6: memref<96x96xbf16, #tpu.memory_space<vmem>>, %arg7: memref<1x96xf32, #tpu.memory_space<vmem>>, %arg8: memref<96x11xbf16, #tpu.memory_space<vmem>>, %arg9: memref<1x11xf32, #tpu.memory_space<vmem>>, %arg10: memref<9x30xbf16, #tpu.memory_space<vmem>>, %arg11: memref<1x30xf32, #tpu.memory_space<vmem>>, %arg12: memref<21x40xbf16, #tpu.memory_space<vmem>>, %arg13: memref<1x40xf32, #tpu.memory_space<vmem>>, %arg14: memref<10x128xbf16, #tpu.memory_space<vmem>>, %arg15: memref<1x128xf32, #tpu.memory_space<vmem>>, %arg16: memref<112x128xf32, #tpu.memory_space<vmem>>, %arg17: memref<112x10xf32, #tpu.memory_space<vmem>>) attributes {dimension_semantics = [], scalar_prefetch = 0 : i64, scratch_operands = 1 : i64, tpu.core_type = #tpu.core_type<tc>} {
    %c0 = arith.constant 0 : index
    %c0_0 = arith.constant 0 : index
    %0 = vector.load %arg1[%c0, %c0_0] : memref<64x1xi32, #tpu.memory_space<vmem>>, vector<64x1xi32>
    %1 = tpu.iota {dimensions = array<i32: 1>} : vector<64x16xi32>
    %2 = vector.broadcast %0 : vector<64x1xi32> to vector<64x16xi32>
    %3 = arith.cmpi eq, %1, %2 : vector<64x16xi32>
    %4 = arith.extui %3 : vector<64x16xi1> to vector<64x16xi32>
    %5 = arith.sitofp %4 : vector<64x16xi32> to vector<64x16xf32>
    %6 = arith.truncf %5 : vector<64x16xf32> to vector<64x16xbf16>
    %c0_1 = arith.constant 0 : index
    %c0_2 = arith.constant 0 : index
    %7 = vector.load %arg2[%c0_1, %c0_2] : memref<1x32xi32, #tpu.memory_space<vmem>>, vector<1x32xi32>
    %8 = tpu.iota {dimensions = array<i32: 0>} : vector<16x32xi32>
    %9 = vector.broadcast %7 : vector<1x32xi32> to vector<16x32xi32>
    %10 = arith.cmpi eq, %8, %9 : vector<16x32xi32>
    %11 = arith.extui %10 : vector<16x32xi1> to vector<16x32xi32>
    %12 = arith.sitofp %11 : vector<16x32xi32> to vector<16x32xf32>
    %13 = arith.truncf %12 : vector<16x32xf32> to vector<16x32xbf16>
    %c0_3 = arith.constant 0 : index
    %c0_4 = arith.constant 0 : index
    %14 = vector.load %arg5[%c0_3, %c0_4] : memref<1x96xf32, #tpu.memory_space<vmem>>, vector<1x96xf32>
    %15 = vector.shape_cast %14 : vector<1x96xf32> to vector<1x96xf32>
    %16 = vector.broadcast %15 : vector<1x96xf32> to vector<32x96xf32>
    %c0_5 = arith.constant 0 : index
    %c0_6 = arith.constant 0 : index
    %17 = vector.load %arg7[%c0_5, %c0_6] : memref<1x96xf32, #tpu.memory_space<vmem>>, vector<1x96xf32>
    %18 = vector.shape_cast %17 : vector<1x96xf32> to vector<1x96xf32>
    %19 = vector.broadcast %18 : vector<1x96xf32> to vector<32x96xf32>
    %c0_7 = arith.constant 0 : index
    %c0_8 = arith.constant 0 : index
    %20 = vector.load %arg9[%c0_7, %c0_8] : memref<1x11xf32, #tpu.memory_space<vmem>>, vector<1x11xf32>
    %21 = vector.shape_cast %20 : vector<1x11xf32> to vector<1x11xf32>
    %22 = vector.broadcast %21 : vector<1x11xf32> to vector<32x11xf32>
    %c0_9 = arith.constant 0 : index
    %c0_10 = arith.constant 0 : index
    %23 = vector.load %arg0[%c0_9, %c0_10] : memref<16x9xf32, #tpu.memory_space<vmem>>, vector<16x9xf32>
    %24 = arith.truncf %23 : vector<16x9xf32> to vector<16x9xbf16>
    %c0_11 = arith.constant 0 : index
    %c0_12 = arith.constant 0 : index
    %25 = vector.load %arg10[%c0_11, %c0_12] : memref<9x30xbf16, #tpu.memory_space<vmem>>, vector<9x30xbf16>
    %cst = arith.constant dense<0.000000e+00> : vector<16x30xf32>
    %26 = tpu.matmul %24, %25, %cst {dimension_numbers = #tpu.dot_dimension_numbers<[1], [0], [0], [1], [0, 0, 1, 1], [], []>} : vector<16x9xbf16>, vector<9x30xbf16>, vector<16x30xf32> -> vector<16x30xf32>
    %c0_13 = arith.constant 0 : index
    %c0_14 = arith.constant 0 : index
    %27 = vector.load %arg11[%c0_13, %c0_14] : memref<1x30xf32, #tpu.memory_space<vmem>>, vector<1x30xf32>
    %28 = vector.broadcast %27 : vector<1x30xf32> to vector<16x30xf32>
    %29 = arith.addf %26, %28 : vector<16x30xf32>
    %cst_15 = arith.constant 0.000000e+00 : f32
    %30 = vector.broadcast %cst_15 : f32 to vector<16x10xf32>
    %31 = tpu.concatenate %29, %30 in 1 : vector<16x30xf32>, vector<16x10xf32> -> vector<16x40xf32>
    %c0_16 = arith.constant 0 : index
    %c0_17 = arith.constant 0 : index
    %32 = vector.load %arg13[%c0_16, %c0_17] : memref<1x40xf32, #tpu.memory_space<vmem>>, vector<1x40xf32>
    %33 = vector.broadcast %32 : vector<1x40xf32> to vector<16x40xf32>
    %34 = arith.addf %31, %33 : vector<16x40xf32>
    %cst_18 = arith.constant 0.000000e+00 : f32
    %35 = vector.broadcast %cst_18 : f32 to vector<16x10xf32>
    %36 = arith.truncf %35 : vector<16x10xf32> to vector<16x10xbf16>
    %cst_19 = arith.constant dense<0.000000e+00> : vector<64x10xf32>
    %37 = tpu.matmul %6, %36, %cst_19 {dimension_numbers = #tpu.dot_dimension_numbers<[1], [0], [0], [1], [0, 0, 1, 1], [], []>} : vector<64x16xbf16>, vector<16x10xbf16>, vector<64x10xf32> -> vector<64x10xf32>
    %38 = arith.truncf %37 : vector<64x10xf32> to vector<64x10xbf16>
    %39 = vector.extract_strided_slice %38 {offsets = [0, 0], sizes = [32, 10], strides = [1, 1]} : vector<64x10xbf16> to vector<32x10xbf16>
    %40 = vector.extract_strided_slice %38 {offsets = [32, 0], sizes = [32, 10], strides = [1, 1]} : vector<64x10xbf16> to vector<32x10xbf16>
    %c0_20 = arith.constant 0 : index
    %c0_21 = arith.constant 0 : index
    %41 = vector.load %arg3[%c0_20, %c0_21] : memref<10x96xbf16, #tpu.memory_space<vmem>>, vector<10x96xbf16>
    %cst_22 = arith.constant dense<0.000000e+00> : vector<32x96xf32>
    %42 = tpu.matmul %39, %41, %cst_22 {dimension_numbers = #tpu.dot_dimension_numbers<[1], [0], [0], [1], [0, 0, 1, 1], [], []>} : vector<32x10xbf16>, vector<10x96xbf16>, vector<32x96xf32> -> vector<32x96xf32>
    %c0_23 = arith.constant 0 : index
    %c0_24 = arith.constant 0 : index
    %43 = vector.load %arg4[%c0_23, %c0_24] : memref<10x96xbf16, #tpu.memory_space<vmem>>, vector<10x96xbf16>
    %cst_25 = arith.constant dense<0.000000e+00> : vector<32x96xf32>
    %44 = tpu.matmul %40, %43, %cst_25 {dimension_numbers = #tpu.dot_dimension_numbers<[1], [0], [0], [1], [0, 0, 1, 1], [], []>} : vector<32x10xbf16>, vector<10x96xbf16>, vector<32x96xf32> -> vector<32x96xf32>
    %45 = arith.addf %42, %44 : vector<32x96xf32>
    %46 = arith.addf %45, %16 : vector<32x96xf32>
    %cst_26 = arith.constant 0.000000e+00 : f32
    %47 = vector.broadcast %cst_26 : f32 to vector<32x96xf32>
    %48 = arith.maximumf %46, %47 : vector<32x96xf32>
    %49 = arith.truncf %48 : vector<32x96xf32> to vector<32x96xbf16>
    %c0_27 = arith.constant 0 : index
    %c0_28 = arith.constant 0 : index
    %50 = vector.load %arg6[%c0_27, %c0_28] : memref<96x96xbf16, #tpu.memory_space<vmem>>, vector<96x96xbf16>
    %cst_29 = arith.constant dense<0.000000e+00> : vector<32x96xf32>
    %51 = tpu.matmul %49, %50, %cst_29 {dimension_numbers = #tpu.dot_dimension_numbers<[1], [0], [0], [1], [0, 0, 1, 1], [], []>} : vector<32x96xbf16>, vector<96x96xbf16>, vector<32x96xf32> -> vector<32x96xf32>
    %52 = arith.addf %51, %19 : vector<32x96xf32>
    %cst_30 = arith.constant 0.000000e+00 : f32
    %53 = vector.broadcast %cst_30 : f32 to vector<32x96xf32>
    %54 = arith.maximumf %52, %53 : vector<32x96xf32>
    %55 = arith.truncf %54 : vector<32x96xf32> to vector<32x96xbf16>
    %c0_31 = arith.constant 0 : index
    %c0_32 = arith.constant 0 : index
    %56 = vector.load %arg8[%c0_31, %c0_32] : memref<96x11xbf16, #tpu.memory_space<vmem>>, vector<96x11xbf16>
    %cst_33 = arith.constant dense<0.000000e+00> : vector<32x11xf32>
    %57 = tpu.matmul %55, %56, %cst_33 {dimension_numbers = #tpu.dot_dimension_numbers<[1], [0], [0], [1], [0, 0, 1, 1], [], []>} : vector<32x96xbf16>, vector<96x11xbf16>, vector<32x11xf32> -> vector<32x11xf32>
    %58 = arith.addf %57, %22 : vector<32x11xf32>
    %59 = arith.truncf %58 : vector<32x11xf32> to vector<32x11xbf16>
    %cst_34 = arith.constant dense<0.000000e+00> : vector<16x11xf32>
    %60 = tpu.matmul %13, %59, %cst_34 {dimension_numbers = #tpu.dot_dimension_numbers<[1], [0], [0], [1], [0, 0, 1, 1], [], []>} : vector<16x32xbf16>, vector<32x11xbf16>, vector<16x11xf32> -> vector<16x11xf32>
    %61 = arith.truncf %60 : vector<16x11xf32> to vector<16x11xbf16>
    %62 = tpu.concatenate %61, %36 in 1 : vector<16x11xbf16>, vector<16x10xbf16> -> vector<16x21xbf16>
    %c0_35 = arith.constant 0 : index
    %c0_36 = arith.constant 0 : index
    %63 = vector.load %arg12[%c0_35, %c0_36] : memref<21x40xbf16, #tpu.memory_space<vmem>>, vector<21x40xbf16>
    %cst_37 = arith.constant dense<0.000000e+00> : vector<16x40xf32>
    %64 = tpu.matmul %62, %63, %cst_37 {dimension_numbers = #tpu.dot_dimension_numbers<[1], [0], [0], [1], [0, 0, 1, 1], [], []>} : vector<16x21xbf16>, vector<21x40xbf16>, vector<16x40xf32> -> vector<16x40xf32>
    %65 = arith.addf %64, %34 : vector<16x40xf32>
    %66 = vector.extract_strided_slice %65 {offsets = [0, 0], sizes = [16, 20], strides = [1, 1]} : vector<16x40xf32> to vector<16x20xf32>
    %67 = arith.negf %66 : vector<16x20xf32>
    %68 = math.exp %67 : vector<16x20xf32>
    %cst_38 = arith.constant 1.000000e+00 : f32
    %69 = vector.broadcast %cst_38 : f32 to vector<16x20xf32>
    %70 = arith.addf %69, %68 : vector<16x20xf32>
    %71 = arith.divf %69, %70 : vector<16x20xf32>
    %72 = vector.extract_strided_slice %71 {offsets = [0, 0], sizes = [16, 10], strides = [1, 1]} : vector<16x20xf32> to vector<16x10xf32>
    %73 = vector.extract_strided_slice %71 {offsets = [0, 10], sizes = [16, 10], strides = [1, 1]} : vector<16x20xf32> to vector<16x10xf32>
    %74 = vector.extract_strided_slice %65 {offsets = [0, 20], sizes = [16, 10], strides = [1, 1]} : vector<16x40xf32> to vector<16x10xf32>
    %75 = vector.extract_strided_slice %65 {offsets = [0, 30], sizes = [16, 10], strides = [1, 1]} : vector<16x40xf32> to vector<16x10xf32>
    %76 = arith.mulf %72, %75 : vector<16x10xf32>
    %77 = arith.addf %74, %76 : vector<16x10xf32>
    %78 = math.tanh %77 : vector<16x10xf32>
    %cst_39 = arith.constant 1.000000e+00 : f32
    %79 = vector.broadcast %cst_39 : f32 to vector<16x10xf32>
    %80 = arith.subf %79, %73 : vector<16x10xf32>
    %81 = arith.mulf %80, %78 : vector<16x10xf32>
    %82 = arith.mulf %73, %35 : vector<16x10xf32>
    %83 = arith.addf %81, %82 : vector<16x10xf32>
    %c0_40 = arith.constant 0 : index
    %c0_41 = arith.constant 0 : index
    %84 = vector.load %arg17[%c0_40, %c0_41] : memref<112x10xf32, #tpu.memory_space<vmem>>, vector<16x10xf32>
    tpu.vector_store %arg17[%c0_40, %c0_41], %83 {strides = array<i32>} : memref<112x10xf32, #tpu.memory_space<vmem>>, vector<16x10xf32>,
    %85 = arith.truncf %83 : vector<16x10xf32> to vector<16x10xbf16>
    %cst_42 = arith.constant dense<0.000000e+00> : vector<64x10xf32>
    %86 = tpu.matmul %6, %85, %cst_42 {dimension_numbers = #tpu.dot_dimension_numbers<[1], [0], [0], [1], [0, 0, 1, 1], [], []>} : vector<64x16xbf16>, vector<16x10xbf16>, vector<64x10xf32> -> vector<64x10xf32>
    %87 = arith.truncf %86 : vector<64x10xf32> to vector<64x10xbf16>
    %88 = vector.extract_strided_slice %87 {offsets = [0, 0], sizes = [32, 10], strides = [1, 1]} : vector<64x10xbf16> to vector<32x10xbf16>
    %89 = vector.extract_strided_slice %87 {offsets = [32, 0], sizes = [32, 10], strides = [1, 1]} : vector<64x10xbf16> to vector<32x10xbf16>
    %c0_43 = arith.constant 0 : index
    %c0_44 = arith.constant 0 : index
    %90 = vector.load %arg3[%c0_43, %c0_44] : memref<10x96xbf16, #tpu.memory_space<vmem>>, vector<10x96xbf16>
    %cst_45 = arith.constant dense<0.000000e+00> : vector<32x96xf32>
    %91 = tpu.matmul %88, %90, %cst_45 {dimension_numbers = #tpu.dot_dimension_numbers<[1], [0], [0], [1], [0, 0, 1, 1], [], []>} : vector<32x10xbf16>, vector<10x96xbf16>, vector<32x96xf32> -> vector<32x96xf32>
    %c0_46 = arith.constant 0 : index
    %c0_47 = arith.constant 0 : index
    %92 = vector.load %arg4[%c0_46, %c0_47] : memref<10x96xbf16, #tpu.memory_space<vmem>>, vector<10x96xbf16>
    %cst_48 = arith.constant dense<0.000000e+00> : vector<32x96xf32>
    %93 = tpu.matmul %89, %92, %cst_48 {dimension_numbers = #tpu.dot_dimension_numbers<[1], [0], [0], [1], [0, 0, 1, 1], [], []>} : vector<32x10xbf16>, vector<10x96xbf16>, vector<32x96xf32> -> vector<32x96xf32>
    %94 = arith.addf %91, %93 : vector<32x96xf32>
    %95 = arith.addf %94, %16 : vector<32x96xf32>
    %cst_49 = arith.constant 0.000000e+00 : f32
    %96 = vector.broadcast %cst_49 : f32 to vector<32x96xf32>
    %97 = arith.maximumf %95, %96 : vector<32x96xf32>
    %98 = arith.truncf %97 : vector<32x96xf32> to vector<32x96xbf16>
    %c0_50 = arith.constant 0 : index
    %c0_51 = arith.constant 0 : index
    %99 = vector.load %arg6[%c0_50, %c0_51] : memref<96x96xbf16, #tpu.memory_space<vmem>>, vector<96x96xbf16>
    %cst_52 = arith.constant dense<0.000000e+00> : vector<32x96xf32>
    %100 = tpu.matmul %98, %99, %cst_52 {dimension_numbers = #tpu.dot_dimension_numbers<[1], [0], [0], [1], [0, 0, 1, 1], [], []>} : vector<32x96xbf16>, vector<96x96xbf16>, vector<32x96xf32> -> vector<32x96xf32>
    %101 = arith.addf %100, %19 : vector<32x96xf32>
    %cst_53 = arith.constant 0.000000e+00 : f32
    %102 = vector.broadcast %cst_53 : f32 to vector<32x96xf32>
    %103 = arith.maximumf %101, %102 : vector<32x96xf32>
    %104 = arith.truncf %103 : vector<32x96xf32> to vector<32x96xbf16>
    %c0_54 = arith.constant 0 : index
    %c0_55 = arith.constant 0 : index
    %105 = vector.load %arg8[%c0_54, %c0_55] : memref<96x11xbf16, #tpu.memory_space<vmem>>, vector<96x11xbf16>
    %cst_56 = arith.constant dense<0.000000e+00> : vector<32x11xf32>
    %106 = tpu.matmul %104, %105, %cst_56 {dimension_numbers = #tpu.dot_dimension_numbers<[1], [0], [0], [1], [0, 0, 1, 1], [], []>} : vector<32x96xbf16>, vector<96x11xbf16>, vector<32x11xf32> -> vector<32x11xf32>
    %107 = arith.addf %106, %22 : vector<32x11xf32>
    %108 = arith.truncf %107 : vector<32x11xf32> to vector<32x11xbf16>
    %cst_57 = arith.constant dense<0.000000e+00> : vector<16x11xf32>
    %109 = tpu.matmul %13, %108, %cst_57 {dimension_numbers = #tpu.dot_dimension_numbers<[1], [0], [0], [1], [0, 0, 1, 1], [], []>} : vector<16x32xbf16>, vector<32x11xbf16>, vector<16x11xf32> -> vector<16x11xf32>
    %110 = arith.truncf %109 : vector<16x11xf32> to vector<16x11xbf16>
    %111 = tpu.concatenate %110, %85 in 1 : vector<16x11xbf16>, vector<16x10xbf16> -> vector<16x21xbf16>
    %c0_58 = arith.constant 0 : index
    %c0_59 = arith.constant 0 : index
    %112 = vector.load %arg12[%c0_58, %c0_59] : memref<21x40xbf16, #tpu.memory_space<vmem>>, vector<21x40xbf16>
    %cst_60 = arith.constant dense<0.000000e+00> : vector<16x40xf32>
    %113 = tpu.matmul %111, %112, %cst_60 {dimension_numbers = #tpu.dot_dimension_numbers<[1], [0], [0], [1], [0, 0, 1, 1], [], []>} : vector<16x21xbf16>, vector<21x40xbf16>, vector<16x40xf32> -> vector<16x40xf32>
    %114 = arith.addf %113, %34 : vector<16x40xf32>
    %115 = vector.extract_strided_slice %114 {offsets = [0, 0], sizes = [16, 20], strides = [1, 1]} : vector<16x40xf32> to vector<16x20xf32>
    %116 = arith.negf %115 : vector<16x20xf32>
    %117 = math.exp %116 : vector<16x20xf32>
    %cst_61 = arith.constant 1.000000e+00 : f32
    %118 = vector.broadcast %cst_61 : f32 to vector<16x20xf32>
    %119 = arith.addf %118, %117 : vector<16x20xf32>
    %120 = arith.divf %118, %119 : vector<16x20xf32>
    %121 = vector.extract_strided_slice %120 {offsets = [0, 0], sizes = [16, 10], strides = [1, 1]} : vector<16x20xf32> to vector<16x10xf32>
    %122 = vector.extract_strided_slice %120 {offsets = [0, 10], sizes = [16, 10], strides = [1, 1]} : vector<16x20xf32> to vector<16x10xf32>
    %123 = vector.extract_strided_slice %114 {offsets = [0, 20], sizes = [16, 10], strides = [1, 1]} : vector<16x40xf32> to vector<16x10xf32>
    %124 = vector.extract_strided_slice %114 {offsets = [0, 30], sizes = [16, 10], strides = [1, 1]} : vector<16x40xf32> to vector<16x10xf32>
    %125 = arith.mulf %121, %124 : vector<16x10xf32>
    %126 = arith.addf %123, %125 : vector<16x10xf32>
    %127 = math.tanh %126 : vector<16x10xf32>
    %cst_62 = arith.constant 1.000000e+00 : f32
    %128 = vector.broadcast %cst_62 : f32 to vector<16x10xf32>
    %129 = arith.subf %128, %122 : vector<16x10xf32>
    %130 = arith.mulf %129, %127 : vector<16x10xf32>
    %131 = arith.mulf %122, %83 : vector<16x10xf32>
    %132 = arith.addf %130, %131 : vector<16x10xf32>
    %c16 = arith.constant 16 : index
    %c0_63 = arith.constant 0 : index
    %133 = vector.load %arg17[%c16, %c0_63] : memref<112x10xf32, #tpu.memory_space<vmem>>, vector<16x10xf32>
    tpu.vector_store %arg17[%c16, %c0_63], %132 {strides = array<i32>} : memref<112x10xf32, #tpu.memory_space<vmem>>, vector<16x10xf32>,
    %134 = arith.truncf %132 : vector<16x10xf32> to vector<16x10xbf16>
    %cst_64 = arith.constant dense<0.000000e+00> : vector<64x10xf32>
    %135 = tpu.matmul %6, %134, %cst_64 {dimension_numbers = #tpu.dot_dimension_numbers<[1], [0], [0], [1], [0, 0, 1, 1], [], []>} : vector<64x16xbf16>, vector<16x10xbf16>, vector<64x10xf32> -> vector<64x10xf32>
    %136 = arith.truncf %135 : vector<64x10xf32> to vector<64x10xbf16>
    %137 = vector.extract_strided_slice %136 {offsets = [0, 0], sizes = [32, 10], strides = [1, 1]} : vector<64x10xbf16> to vector<32x10xbf16>
    %138 = vector.extract_strided_slice %136 {offsets = [32, 0], sizes = [32, 10], strides = [1, 1]} : vector<64x10xbf16> to vector<32x10xbf16>
    %c0_65 = arith.constant 0 : index
    %c0_66 = arith.constant 0 : index
    %139 = vector.load %arg3[%c0_65, %c0_66] : memref<10x96xbf16, #tpu.memory_space<vmem>>, vector<10x96xbf16>
    %cst_67 = arith.constant dense<0.000000e+00> : vector<32x96xf32>
    %140 = tpu.matmul %137, %139, %cst_67 {dimension_numbers = #tpu.dot_dimension_numbers<[1], [0], [0], [1], [0, 0, 1, 1], [], []>} : vector<32x10xbf16>, vector<10x96xbf16>, vector<32x96xf32> -> vector<32x96xf32>
    %c0_68 = arith.constant 0 : index
    %c0_69 = arith.constant 0 : index
    %141 = vector.load %arg4[%c0_68, %c0_69] : memref<10x96xbf16, #tpu.memory_space<vmem>>, vector<10x96xbf16>
    %cst_70 = arith.constant dense<0.000000e+00> : vector<32x96xf32>
    %142 = tpu.matmul %138, %141, %cst_70 {dimension_numbers = #tpu.dot_dimension_numbers<[1], [0], [0], [1], [0, 0, 1, 1], [], []>} : vector<32x10xbf16>, vector<10x96xbf16>, vector<32x96xf32> -> vector<32x96xf32>
    %143 = arith.addf %140, %142 : vector<32x96xf32>
    %144 = arith.addf %143, %16 : vector<32x96xf32>
    %cst_71 = arith.constant 0.000000e+00 : f32
    %145 = vector.broadcast %cst_71 : f32 to vector<32x96xf32>
    %146 = arith.maximumf %144, %145 : vector<32x96xf32>
    %147 = arith.truncf %146 : vector<32x96xf32> to vector<32x96xbf16>
    %c0_72 = arith.constant 0 : index
    %c0_73 = arith.constant 0 : index
    %148 = vector.load %arg6[%c0_72, %c0_73] : memref<96x96xbf16, #tpu.memory_space<vmem>>, vector<96x96xbf16>
    %cst_74 = arith.constant dense<0.000000e+00> : vector<32x96xf32>
    %149 = tpu.matmul %147, %148, %cst_74 {dimension_numbers = #tpu.dot_dimension_numbers<[1], [0], [0], [1], [0, 0, 1, 1], [], []>} : vector<32x96xbf16>, vector<96x96xbf16>, vector<32x96xf32> -> vector<32x96xf32>
    %150 = arith.addf %149, %19 : vector<32x96xf32>
    %cst_75 = arith.constant 0.000000e+00 : f32
    %151 = vector.broadcast %cst_75 : f32 to vector<32x96xf32>
    %152 = arith.maximumf %150, %151 : vector<32x96xf32>
    %153 = arith.truncf %152 : vector<32x96xf32> to vector<32x96xbf16>
    %c0_76 = arith.constant 0 : index
    %c0_77 = arith.constant 0 : index
    %154 = vector.load %arg8[%c0_76, %c0_77] : memref<96x11xbf16, #tpu.memory_space<vmem>>, vector<96x11xbf16>
    %cst_78 = arith.constant dense<0.000000e+00> : vector<32x11xf32>
    %155 = tpu.matmul %153, %154, %cst_78 {dimension_numbers = #tpu.dot_dimension_numbers<[1], [0], [0], [1], [0, 0, 1, 1], [], []>} : vector<32x96xbf16>, vector<96x11xbf16>, vector<32x11xf32> -> vector<32x11xf32>
    %156 = arith.addf %155, %22 : vector<32x11xf32>
    %157 = arith.truncf %156 : vector<32x11xf32> to vector<32x11xbf16>
    %cst_79 = arith.constant dense<0.000000e+00> : vector<16x11xf32>
    %158 = tpu.matmul %13, %157, %cst_79 {dimension_numbers = #tpu.dot_dimension_numbers<[1], [0], [0], [1], [0, 0, 1, 1], [], []>} : vector<16x32xbf16>, vector<32x11xbf16>, vector<16x11xf32> -> vector<16x11xf32>
    %159 = arith.truncf %158 : vector<16x11xf32> to vector<16x11xbf16>
    %160 = tpu.concatenate %159, %134 in 1 : vector<16x11xbf16>, vector<16x10xbf16> -> vector<16x21xbf16>
    %c0_80 = arith.constant 0 : index
    %c0_81 = arith.constant 0 : index
    %161 = vector.load %arg12[%c0_80, %c0_81] : memref<21x40xbf16, #tpu.memory_space<vmem>>, vector<21x40xbf16>
    %cst_82 = arith.constant dense<0.000000e+00> : vector<16x40xf32>
    %162 = tpu.matmul %160, %161, %cst_82 {dimension_numbers = #tpu.dot_dimension_numbers<[1], [0], [0], [1], [0, 0, 1, 1], [], []>} : vector<16x21xbf16>, vector<21x40xbf16>, vector<16x40xf32> -> vector<16x40xf32>
    %163 = arith.addf %162, %34 : vector<16x40xf32>
    %164 = vector.extract_strided_slice %163 {offsets = [0, 0], sizes = [16, 20], strides = [1, 1]} : vector<16x40xf32> to vector<16x20xf32>
    %165 = arith.negf %164 : vector<16x20xf32>
    %166 = math.exp %165 : vector<16x20xf32>
    %cst_83 = arith.constant 1.000000e+00 : f32
    %167 = vector.broadcast %cst_83 : f32 to vector<16x20xf32>
    %168 = arith.addf %167, %166 : vector<16x20xf32>
    %169 = arith.divf %167, %168 : vector<16x20xf32>
    %170 = vector.extract_strided_slice %169 {offsets = [0, 0], sizes = [16, 10], strides = [1, 1]} : vector<16x20xf32> to vector<16x10xf32>
    %171 = vector.extract_strided_slice %169 {offsets = [0, 10], sizes = [16, 10], strides = [1, 1]} : vector<16x20xf32> to vector<16x10xf32>
    %172 = vector.extract_strided_slice %163 {offsets = [0, 20], sizes = [16, 10], strides = [1, 1]} : vector<16x40xf32> to vector<16x10xf32>
    %173 = vector.extract_strided_slice %163 {offsets = [0, 30], sizes = [16, 10], strides = [1, 1]} : vector<16x40xf32> to vector<16x10xf32>
    %174 = arith.mulf %170, %173 : vector<16x10xf32>
    %175 = arith.addf %172, %174 : vector<16x10xf32>
    %176 = math.tanh %175 : vector<16x10xf32>
    %cst_84 = arith.constant 1.000000e+00 : f32
    %177 = vector.broadcast %cst_84 : f32 to vector<16x10xf32>
    %178 = arith.subf %177, %171 : vector<16x10xf32>
    %179 = arith.mulf %178, %176 : vector<16x10xf32>
    %180 = arith.mulf %171, %132 : vector<16x10xf32>
    %181 = arith.addf %179, %180 : vector<16x10xf32>
    %c32 = arith.constant 32 : index
    %c0_85 = arith.constant 0 : index
    %182 = vector.load %arg17[%c32, %c0_85] : memref<112x10xf32, #tpu.memory_space<vmem>>, vector<16x10xf32>
    tpu.vector_store %arg17[%c32, %c0_85], %181 {strides = array<i32>} : memref<112x10xf32, #tpu.memory_space<vmem>>, vector<16x10xf32>,
    %183 = arith.truncf %181 : vector<16x10xf32> to vector<16x10xbf16>
    %cst_86 = arith.constant dense<0.000000e+00> : vector<64x10xf32>
    %184 = tpu.matmul %6, %183, %cst_86 {dimension_numbers = #tpu.dot_dimension_numbers<[1], [0], [0], [1], [0, 0, 1, 1], [], []>} : vector<64x16xbf16>, vector<16x10xbf16>, vector<64x10xf32> -> vector<64x10xf32>
    %185 = arith.truncf %184 : vector<64x10xf32> to vector<64x10xbf16>
    %186 = vector.extract_strided_slice %185 {offsets = [0, 0], sizes = [32, 10], strides = [1, 1]} : vector<64x10xbf16> to vector<32x10xbf16>
    %187 = vector.extract_strided_slice %185 {offsets = [32, 0], sizes = [32, 10], strides = [1, 1]} : vector<64x10xbf16> to vector<32x10xbf16>
    %c0_87 = arith.constant 0 : index
    %c0_88 = arith.constant 0 : index
    %188 = vector.load %arg3[%c0_87, %c0_88] : memref<10x96xbf16, #tpu.memory_space<vmem>>, vector<10x96xbf16>
    %cst_89 = arith.constant dense<0.000000e+00> : vector<32x96xf32>
    %189 = tpu.matmul %186, %188, %cst_89 {dimension_numbers = #tpu.dot_dimension_numbers<[1], [0], [0], [1], [0, 0, 1, 1], [], []>} : vector<32x10xbf16>, vector<10x96xbf16>, vector<32x96xf32> -> vector<32x96xf32>
    %c0_90 = arith.constant 0 : index
    %c0_91 = arith.constant 0 : index
    %190 = vector.load %arg4[%c0_90, %c0_91] : memref<10x96xbf16, #tpu.memory_space<vmem>>, vector<10x96xbf16>
    %cst_92 = arith.constant dense<0.000000e+00> : vector<32x96xf32>
    %191 = tpu.matmul %187, %190, %cst_92 {dimension_numbers = #tpu.dot_dimension_numbers<[1], [0], [0], [1], [0, 0, 1, 1], [], []>} : vector<32x10xbf16>, vector<10x96xbf16>, vector<32x96xf32> -> vector<32x96xf32>
    %192 = arith.addf %189, %191 : vector<32x96xf32>
    %193 = arith.addf %192, %16 : vector<32x96xf32>
    %cst_93 = arith.constant 0.000000e+00 : f32
    %194 = vector.broadcast %cst_93 : f32 to vector<32x96xf32>
    %195 = arith.maximumf %193, %194 : vector<32x96xf32>
    %196 = arith.truncf %195 : vector<32x96xf32> to vector<32x96xbf16>
    %c0_94 = arith.constant 0 : index
    %c0_95 = arith.constant 0 : index
    %197 = vector.load %arg6[%c0_94, %c0_95] : memref<96x96xbf16, #tpu.memory_space<vmem>>, vector<96x96xbf16>
    %cst_96 = arith.constant dense<0.000000e+00> : vector<32x96xf32>
    %198 = tpu.matmul %196, %197, %cst_96 {dimension_numbers = #tpu.dot_dimension_numbers<[1], [0], [0], [1], [0, 0, 1, 1], [], []>} : vector<32x96xbf16>, vector<96x96xbf16>, vector<32x96xf32> -> vector<32x96xf32>
    %199 = arith.addf %198, %19 : vector<32x96xf32>
    %cst_97 = arith.constant 0.000000e+00 : f32
    %200 = vector.broadcast %cst_97 : f32 to vector<32x96xf32>
    %201 = arith.maximumf %199, %200 : vector<32x96xf32>
    %202 = arith.truncf %201 : vector<32x96xf32> to vector<32x96xbf16>
    %c0_98 = arith.constant 0 : index
    %c0_99 = arith.constant 0 : index
    %203 = vector.load %arg8[%c0_98, %c0_99] : memref<96x11xbf16, #tpu.memory_space<vmem>>, vector<96x11xbf16>
    %cst_100 = arith.constant dense<0.000000e+00> : vector<32x11xf32>
    %204 = tpu.matmul %202, %203, %cst_100 {dimension_numbers = #tpu.dot_dimension_numbers<[1], [0], [0], [1], [0, 0, 1, 1], [], []>} : vector<32x96xbf16>, vector<96x11xbf16>, vector<32x11xf32> -> vector<32x11xf32>
    %205 = arith.addf %204, %22 : vector<32x11xf32>
    %206 = arith.truncf %205 : vector<32x11xf32> to vector<32x11xbf16>
    %cst_101 = arith.constant dense<0.000000e+00> : vector<16x11xf32>
    %207 = tpu.matmul %13, %206, %cst_101 {dimension_numbers = #tpu.dot_dimension_numbers<[1], [0], [0], [1], [0, 0, 1, 1], [], []>} : vector<16x32xbf16>, vector<32x11xbf16>, vector<16x11xf32> -> vector<16x11xf32>
    %208 = arith.truncf %207 : vector<16x11xf32> to vector<16x11xbf16>
    %209 = tpu.concatenate %208, %183 in 1 : vector<16x11xbf16>, vector<16x10xbf16> -> vector<16x21xbf16>
    %c0_102 = arith.constant 0 : index
    %c0_103 = arith.constant 0 : index
    %210 = vector.load %arg12[%c0_102, %c0_103] : memref<21x40xbf16, #tpu.memory_space<vmem>>, vector<21x40xbf16>
    %cst_104 = arith.constant dense<0.000000e+00> : vector<16x40xf32>
    %211 = tpu.matmul %209, %210, %cst_104 {dimension_numbers = #tpu.dot_dimension_numbers<[1], [0], [0], [1], [0, 0, 1, 1], [], []>} : vector<16x21xbf16>, vector<21x40xbf16>, vector<16x40xf32> -> vector<16x40xf32>
    %212 = arith.addf %211, %34 : vector<16x40xf32>
    %213 = vector.extract_strided_slice %212 {offsets = [0, 0], sizes = [16, 20], strides = [1, 1]} : vector<16x40xf32> to vector<16x20xf32>
    %214 = arith.negf %213 : vector<16x20xf32>
    %215 = math.exp %214 : vector<16x20xf32>
    %cst_105 = arith.constant 1.000000e+00 : f32
    %216 = vector.broadcast %cst_105 : f32 to vector<16x20xf32>
    %217 = arith.addf %216, %215 : vector<16x20xf32>
    %218 = arith.divf %216, %217 : vector<16x20xf32>
    %219 = vector.extract_strided_slice %218 {offsets = [0, 0], sizes = [16, 10], strides = [1, 1]} : vector<16x20xf32> to vector<16x10xf32>
    %220 = vector.extract_strided_slice %218 {offsets = [0, 10], sizes = [16, 10], strides = [1, 1]} : vector<16x20xf32> to vector<16x10xf32>
    %221 = vector.extract_strided_slice %212 {offsets = [0, 20], sizes = [16, 10], strides = [1, 1]} : vector<16x40xf32> to vector<16x10xf32>
    %222 = vector.extract_strided_slice %212 {offsets = [0, 30], sizes = [16, 10], strides = [1, 1]} : vector<16x40xf32> to vector<16x10xf32>
    %223 = arith.mulf %219, %222 : vector<16x10xf32>
    %224 = arith.addf %221, %223 : vector<16x10xf32>
    %225 = math.tanh %224 : vector<16x10xf32>
    %cst_106 = arith.constant 1.000000e+00 : f32
    %226 = vector.broadcast %cst_106 : f32 to vector<16x10xf32>
    %227 = arith.subf %226, %220 : vector<16x10xf32>
    %228 = arith.mulf %227, %225 : vector<16x10xf32>
    %229 = arith.mulf %220, %181 : vector<16x10xf32>
    %230 = arith.addf %228, %229 : vector<16x10xf32>
    %c48 = arith.constant 48 : index
    %c0_107 = arith.constant 0 : index
    %231 = vector.load %arg17[%c48, %c0_107] : memref<112x10xf32, #tpu.memory_space<vmem>>, vector<16x10xf32>
    tpu.vector_store %arg17[%c48, %c0_107], %230 {strides = array<i32>} : memref<112x10xf32, #tpu.memory_space<vmem>>, vector<16x10xf32>,
    %232 = arith.truncf %230 : vector<16x10xf32> to vector<16x10xbf16>
    %cst_108 = arith.constant dense<0.000000e+00> : vector<64x10xf32>
    %233 = tpu.matmul %6, %232, %cst_108 {dimension_numbers = #tpu.dot_dimension_numbers<[1], [0], [0], [1], [0, 0, 1, 1], [], []>} : vector<64x16xbf16>, vector<16x10xbf16>, vector<64x10xf32> -> vector<64x10xf32>
    %234 = arith.truncf %233 : vector<64x10xf32> to vector<64x10xbf16>
    %235 = vector.extract_strided_slice %234 {offsets = [0, 0], sizes = [32, 10], strides = [1, 1]} : vector<64x10xbf16> to vector<32x10xbf16>
    %236 = vector.extract_strided_slice %234 {offsets = [32, 0], sizes = [32, 10], strides = [1, 1]} : vector<64x10xbf16> to vector<32x10xbf16>
    %c0_109 = arith.constant 0 : index
    %c0_110 = arith.constant 0 : index
    %237 = vector.load %arg3[%c0_109, %c0_110] : memref<10x96xbf16, #tpu.memory_space<vmem>>, vector<10x96xbf16>
    %cst_111 = arith.constant dense<0.000000e+00> : vector<32x96xf32>
    %238 = tpu.matmul %235, %237, %cst_111 {dimension_numbers = #tpu.dot_dimension_numbers<[1], [0], [0], [1], [0, 0, 1, 1], [], []>} : vector<32x10xbf16>, vector<10x96xbf16>, vector<32x96xf32> -> vector<32x96xf32>
    %c0_112 = arith.constant 0 : index
    %c0_113 = arith.constant 0 : index
    %239 = vector.load %arg4[%c0_112, %c0_113] : memref<10x96xbf16, #tpu.memory_space<vmem>>, vector<10x96xbf16>
    %cst_114 = arith.constant dense<0.000000e+00> : vector<32x96xf32>
    %240 = tpu.matmul %236, %239, %cst_114 {dimension_numbers = #tpu.dot_dimension_numbers<[1], [0], [0], [1], [0, 0, 1, 1], [], []>} : vector<32x10xbf16>, vector<10x96xbf16>, vector<32x96xf32> -> vector<32x96xf32>
    %241 = arith.addf %238, %240 : vector<32x96xf32>
    %242 = arith.addf %241, %16 : vector<32x96xf32>
    %cst_115 = arith.constant 0.000000e+00 : f32
    %243 = vector.broadcast %cst_115 : f32 to vector<32x96xf32>
    %244 = arith.maximumf %242, %243 : vector<32x96xf32>
    %245 = arith.truncf %244 : vector<32x96xf32> to vector<32x96xbf16>
    %c0_116 = arith.constant 0 : index
    %c0_117 = arith.constant 0 : index
    %246 = vector.load %arg6[%c0_116, %c0_117] : memref<96x96xbf16, #tpu.memory_space<vmem>>, vector<96x96xbf16>
    %cst_118 = arith.constant dense<0.000000e+00> : vector<32x96xf32>
    %247 = tpu.matmul %245, %246, %cst_118 {dimension_numbers = #tpu.dot_dimension_numbers<[1], [0], [0], [1], [0, 0, 1, 1], [], []>} : vector<32x96xbf16>, vector<96x96xbf16>, vector<32x96xf32> -> vector<32x96xf32>
    %248 = arith.addf %247, %19 : vector<32x96xf32>
    %cst_119 = arith.constant 0.000000e+00 : f32
    %249 = vector.broadcast %cst_119 : f32 to vector<32x96xf32>
    %250 = arith.maximumf %248, %249 : vector<32x96xf32>
    %251 = arith.truncf %250 : vector<32x96xf32> to vector<32x96xbf16>
    %c0_120 = arith.constant 0 : index
    %c0_121 = arith.constant 0 : index
    %252 = vector.load %arg8[%c0_120, %c0_121] : memref<96x11xbf16, #tpu.memory_space<vmem>>, vector<96x11xbf16>
    %cst_122 = arith.constant dense<0.000000e+00> : vector<32x11xf32>
    %253 = tpu.matmul %251, %252, %cst_122 {dimension_numbers = #tpu.dot_dimension_numbers<[1], [0], [0], [1], [0, 0, 1, 1], [], []>} : vector<32x96xbf16>, vector<96x11xbf16>, vector<32x11xf32> -> vector<32x11xf32>
    %254 = arith.addf %253, %22 : vector<32x11xf32>
    %255 = arith.truncf %254 : vector<32x11xf32> to vector<32x11xbf16>
    %cst_123 = arith.constant dense<0.000000e+00> : vector<16x11xf32>
    %256 = tpu.matmul %13, %255, %cst_123 {dimension_numbers = #tpu.dot_dimension_numbers<[1], [0], [0], [1], [0, 0, 1, 1], [], []>} : vector<16x32xbf16>, vector<32x11xbf16>, vector<16x11xf32> -> vector<16x11xf32>
    %257 = arith.truncf %256 : vector<16x11xf32> to vector<16x11xbf16>
    %258 = tpu.concatenate %257, %232 in 1 : vector<16x11xbf16>, vector<16x10xbf16> -> vector<16x21xbf16>
    %c0_124 = arith.constant 0 : index
    %c0_125 = arith.constant 0 : index
    %259 = vector.load %arg12[%c0_124, %c0_125] : memref<21x40xbf16, #tpu.memory_space<vmem>>, vector<21x40xbf16>
    %cst_126 = arith.constant dense<0.000000e+00> : vector<16x40xf32>
    %260 = tpu.matmul %258, %259, %cst_126 {dimension_numbers = #tpu.dot_dimension_numbers<[1], [0], [0], [1], [0, 0, 1, 1], [], []>} : vector<16x21xbf16>, vector<21x40xbf16>, vector<16x40xf32> -> vector<16x40xf32>
    %261 = arith.addf %260, %34 : vector<16x40xf32>
    %262 = vector.extract_strided_slice %261 {offsets = [0, 0], sizes = [16, 20], strides = [1, 1]} : vector<16x40xf32> to vector<16x20xf32>
    %263 = arith.negf %262 : vector<16x20xf32>
    %264 = math.exp %263 : vector<16x20xf32>
    %cst_127 = arith.constant 1.000000e+00 : f32
    %265 = vector.broadcast %cst_127 : f32 to vector<16x20xf32>
    %266 = arith.addf %265, %264 : vector<16x20xf32>
    %267 = arith.divf %265, %266 : vector<16x20xf32>
    %268 = vector.extract_strided_slice %267 {offsets = [0, 0], sizes = [16, 10], strides = [1, 1]} : vector<16x20xf32> to vector<16x10xf32>
    %269 = vector.extract_strided_slice %267 {offsets = [0, 10], sizes = [16, 10], strides = [1, 1]} : vector<16x20xf32> to vector<16x10xf32>
    %270 = vector.extract_strided_slice %261 {offsets = [0, 20], sizes = [16, 10], strides = [1, 1]} : vector<16x40xf32> to vector<16x10xf32>
    %271 = vector.extract_strided_slice %261 {offsets = [0, 30], sizes = [16, 10], strides = [1, 1]} : vector<16x40xf32> to vector<16x10xf32>
    %272 = arith.mulf %268, %271 : vector<16x10xf32>
    %273 = arith.addf %270, %272 : vector<16x10xf32>
    %274 = math.tanh %273 : vector<16x10xf32>
    %cst_128 = arith.constant 1.000000e+00 : f32
    %275 = vector.broadcast %cst_128 : f32 to vector<16x10xf32>
    %276 = arith.subf %275, %269 : vector<16x10xf32>
    %277 = arith.mulf %276, %274 : vector<16x10xf32>
    %278 = arith.mulf %269, %230 : vector<16x10xf32>
    %279 = arith.addf %277, %278 : vector<16x10xf32>
    %c64 = arith.constant 64 : index
    %c0_129 = arith.constant 0 : index
    %280 = vector.load %arg17[%c64, %c0_129] : memref<112x10xf32, #tpu.memory_space<vmem>>, vector<16x10xf32>
    tpu.vector_store %arg17[%c64, %c0_129], %279 {strides = array<i32>} : memref<112x10xf32, #tpu.memory_space<vmem>>, vector<16x10xf32>,
    %281 = arith.truncf %279 : vector<16x10xf32> to vector<16x10xbf16>
    %cst_130 = arith.constant dense<0.000000e+00> : vector<64x10xf32>
    %282 = tpu.matmul %6, %281, %cst_130 {dimension_numbers = #tpu.dot_dimension_numbers<[1], [0], [0], [1], [0, 0, 1, 1], [], []>} : vector<64x16xbf16>, vector<16x10xbf16>, vector<64x10xf32> -> vector<64x10xf32>
    %283 = arith.truncf %282 : vector<64x10xf32> to vector<64x10xbf16>
    %284 = vector.extract_strided_slice %283 {offsets = [0, 0], sizes = [32, 10], strides = [1, 1]} : vector<64x10xbf16> to vector<32x10xbf16>
    %285 = vector.extract_strided_slice %283 {offsets = [32, 0], sizes = [32, 10], strides = [1, 1]} : vector<64x10xbf16> to vector<32x10xbf16>
    %c0_131 = arith.constant 0 : index
    %c0_132 = arith.constant 0 : index
    %286 = vector.load %arg3[%c0_131, %c0_132] : memref<10x96xbf16, #tpu.memory_space<vmem>>, vector<10x96xbf16>
    %cst_133 = arith.constant dense<0.000000e+00> : vector<32x96xf32>
    %287 = tpu.matmul %284, %286, %cst_133 {dimension_numbers = #tpu.dot_dimension_numbers<[1], [0], [0], [1], [0, 0, 1, 1], [], []>} : vector<32x10xbf16>, vector<10x96xbf16>, vector<32x96xf32> -> vector<32x96xf32>
    %c0_134 = arith.constant 0 : index
    %c0_135 = arith.constant 0 : index
    %288 = vector.load %arg4[%c0_134, %c0_135] : memref<10x96xbf16, #tpu.memory_space<vmem>>, vector<10x96xbf16>
    %cst_136 = arith.constant dense<0.000000e+00> : vector<32x96xf32>
    %289 = tpu.matmul %285, %288, %cst_136 {dimension_numbers = #tpu.dot_dimension_numbers<[1], [0], [0], [1], [0, 0, 1, 1], [], []>} : vector<32x10xbf16>, vector<10x96xbf16>, vector<32x96xf32> -> vector<32x96xf32>
    %290 = arith.addf %287, %289 : vector<32x96xf32>
    %291 = arith.addf %290, %16 : vector<32x96xf32>
    %cst_137 = arith.constant 0.000000e+00 : f32
    %292 = vector.broadcast %cst_137 : f32 to vector<32x96xf32>
    %293 = arith.maximumf %291, %292 : vector<32x96xf32>
    %294 = arith.truncf %293 : vector<32x96xf32> to vector<32x96xbf16>
    %c0_138 = arith.constant 0 : index
    %c0_139 = arith.constant 0 : index
    %295 = vector.load %arg6[%c0_138, %c0_139] : memref<96x96xbf16, #tpu.memory_space<vmem>>, vector<96x96xbf16>
    %cst_140 = arith.constant dense<0.000000e+00> : vector<32x96xf32>
    %296 = tpu.matmul %294, %295, %cst_140 {dimension_numbers = #tpu.dot_dimension_numbers<[1], [0], [0], [1], [0, 0, 1, 1], [], []>} : vector<32x96xbf16>, vector<96x96xbf16>, vector<32x96xf32> -> vector<32x96xf32>
    %297 = arith.addf %296, %19 : vector<32x96xf32>
    %cst_141 = arith.constant 0.000000e+00 : f32
    %298 = vector.broadcast %cst_141 : f32 to vector<32x96xf32>
    %299 = arith.maximumf %297, %298 : vector<32x96xf32>
    %300 = arith.truncf %299 : vector<32x96xf32> to vector<32x96xbf16>
    %c0_142 = arith.constant 0 : index
    %c0_143 = arith.constant 0 : index
    %301 = vector.load %arg8[%c0_142, %c0_143] : memref<96x11xbf16, #tpu.memory_space<vmem>>, vector<96x11xbf16>
    %cst_144 = arith.constant dense<0.000000e+00> : vector<32x11xf32>
    %302 = tpu.matmul %300, %301, %cst_144 {dimension_numbers = #tpu.dot_dimension_numbers<[1], [0], [0], [1], [0, 0, 1, 1], [], []>} : vector<32x96xbf16>, vector<96x11xbf16>, vector<32x11xf32> -> vector<32x11xf32>
    %303 = arith.addf %302, %22 : vector<32x11xf32>
    %304 = arith.truncf %303 : vector<32x11xf32> to vector<32x11xbf16>
    %cst_145 = arith.constant dense<0.000000e+00> : vector<16x11xf32>
    %305 = tpu.matmul %13, %304, %cst_145 {dimension_numbers = #tpu.dot_dimension_numbers<[1], [0], [0], [1], [0, 0, 1, 1], [], []>} : vector<16x32xbf16>, vector<32x11xbf16>, vector<16x11xf32> -> vector<16x11xf32>
    %306 = arith.truncf %305 : vector<16x11xf32> to vector<16x11xbf16>
    %307 = tpu.concatenate %306, %281 in 1 : vector<16x11xbf16>, vector<16x10xbf16> -> vector<16x21xbf16>
    %c0_146 = arith.constant 0 : index
    %c0_147 = arith.constant 0 : index
    %308 = vector.load %arg12[%c0_146, %c0_147] : memref<21x40xbf16, #tpu.memory_space<vmem>>, vector<21x40xbf16>
    %cst_148 = arith.constant dense<0.000000e+00> : vector<16x40xf32>
    %309 = tpu.matmul %307, %308, %cst_148 {dimension_numbers = #tpu.dot_dimension_numbers<[1], [0], [0], [1], [0, 0, 1, 1], [], []>} : vector<16x21xbf16>, vector<21x40xbf16>, vector<16x40xf32> -> vector<16x40xf32>
    %310 = arith.addf %309, %34 : vector<16x40xf32>
    %311 = vector.extract_strided_slice %310 {offsets = [0, 0], sizes = [16, 20], strides = [1, 1]} : vector<16x40xf32> to vector<16x20xf32>
    %312 = arith.negf %311 : vector<16x20xf32>
    %313 = math.exp %312 : vector<16x20xf32>
    %cst_149 = arith.constant 1.000000e+00 : f32
    %314 = vector.broadcast %cst_149 : f32 to vector<16x20xf32>
    %315 = arith.addf %314, %313 : vector<16x20xf32>
    %316 = arith.divf %314, %315 : vector<16x20xf32>
    %317 = vector.extract_strided_slice %316 {offsets = [0, 0], sizes = [16, 10], strides = [1, 1]} : vector<16x20xf32> to vector<16x10xf32>
    %318 = vector.extract_strided_slice %316 {offsets = [0, 10], sizes = [16, 10], strides = [1, 1]} : vector<16x20xf32> to vector<16x10xf32>
    %319 = vector.extract_strided_slice %310 {offsets = [0, 20], sizes = [16, 10], strides = [1, 1]} : vector<16x40xf32> to vector<16x10xf32>
    %320 = vector.extract_strided_slice %310 {offsets = [0, 30], sizes = [16, 10], strides = [1, 1]} : vector<16x40xf32> to vector<16x10xf32>
    %321 = arith.mulf %317, %320 : vector<16x10xf32>
    %322 = arith.addf %319, %321 : vector<16x10xf32>
    %323 = math.tanh %322 : vector<16x10xf32>
    %cst_150 = arith.constant 1.000000e+00 : f32
    %324 = vector.broadcast %cst_150 : f32 to vector<16x10xf32>
    %325 = arith.subf %324, %318 : vector<16x10xf32>
    %326 = arith.mulf %325, %323 : vector<16x10xf32>
    %327 = arith.mulf %318, %279 : vector<16x10xf32>
    %328 = arith.addf %326, %327 : vector<16x10xf32>
    %c80 = arith.constant 80 : index
    %c0_151 = arith.constant 0 : index
    %329 = vector.load %arg17[%c80, %c0_151] : memref<112x10xf32, #tpu.memory_space<vmem>>, vector<16x10xf32>
    tpu.vector_store %arg17[%c80, %c0_151], %328 {strides = array<i32>} : memref<112x10xf32, #tpu.memory_space<vmem>>, vector<16x10xf32>,
    %330 = arith.truncf %328 : vector<16x10xf32> to vector<16x10xbf16>
    %cst_152 = arith.constant dense<0.000000e+00> : vector<64x10xf32>
    %331 = tpu.matmul %6, %330, %cst_152 {dimension_numbers = #tpu.dot_dimension_numbers<[1], [0], [0], [1], [0, 0, 1, 1], [], []>} : vector<64x16xbf16>, vector<16x10xbf16>, vector<64x10xf32> -> vector<64x10xf32>
    %332 = arith.truncf %331 : vector<64x10xf32> to vector<64x10xbf16>
    %333 = vector.extract_strided_slice %332 {offsets = [0, 0], sizes = [32, 10], strides = [1, 1]} : vector<64x10xbf16> to vector<32x10xbf16>
    %334 = vector.extract_strided_slice %332 {offsets = [32, 0], sizes = [32, 10], strides = [1, 1]} : vector<64x10xbf16> to vector<32x10xbf16>
    %c0_153 = arith.constant 0 : index
    %c0_154 = arith.constant 0 : index
    %335 = vector.load %arg3[%c0_153, %c0_154] : memref<10x96xbf16, #tpu.memory_space<vmem>>, vector<10x96xbf16>
    %cst_155 = arith.constant dense<0.000000e+00> : vector<32x96xf32>
    %336 = tpu.matmul %333, %335, %cst_155 {dimension_numbers = #tpu.dot_dimension_numbers<[1], [0], [0], [1], [0, 0, 1, 1], [], []>} : vector<32x10xbf16>, vector<10x96xbf16>, vector<32x96xf32> -> vector<32x96xf32>
    %c0_156 = arith.constant 0 : index
    %c0_157 = arith.constant 0 : index
    %337 = vector.load %arg4[%c0_156, %c0_157] : memref<10x96xbf16, #tpu.memory_space<vmem>>, vector<10x96xbf16>
    %cst_158 = arith.constant dense<0.000000e+00> : vector<32x96xf32>
    %338 = tpu.matmul %334, %337, %cst_158 {dimension_numbers = #tpu.dot_dimension_numbers<[1], [0], [0], [1], [0, 0, 1, 1], [], []>} : vector<32x10xbf16>, vector<10x96xbf16>, vector<32x96xf32> -> vector<32x96xf32>
    %339 = arith.addf %336, %338 : vector<32x96xf32>
    %340 = arith.addf %339, %16 : vector<32x96xf32>
    %cst_159 = arith.constant 0.000000e+00 : f32
    %341 = vector.broadcast %cst_159 : f32 to vector<32x96xf32>
    %342 = arith.maximumf %340, %341 : vector<32x96xf32>
    %343 = arith.truncf %342 : vector<32x96xf32> to vector<32x96xbf16>
    %c0_160 = arith.constant 0 : index
    %c0_161 = arith.constant 0 : index
    %344 = vector.load %arg6[%c0_160, %c0_161] : memref<96x96xbf16, #tpu.memory_space<vmem>>, vector<96x96xbf16>
    %cst_162 = arith.constant dense<0.000000e+00> : vector<32x96xf32>
    %345 = tpu.matmul %343, %344, %cst_162 {dimension_numbers = #tpu.dot_dimension_numbers<[1], [0], [0], [1], [0, 0, 1, 1], [], []>} : vector<32x96xbf16>, vector<96x96xbf16>, vector<32x96xf32> -> vector<32x96xf32>
    %346 = arith.addf %345, %19 : vector<32x96xf32>
    %cst_163 = arith.constant 0.000000e+00 : f32
    %347 = vector.broadcast %cst_163 : f32 to vector<32x96xf32>
    %348 = arith.maximumf %346, %347 : vector<32x96xf32>
    %349 = arith.truncf %348 : vector<32x96xf32> to vector<32x96xbf16>
    %c0_164 = arith.constant 0 : index
    %c0_165 = arith.constant 0 : index
    %350 = vector.load %arg8[%c0_164, %c0_165] : memref<96x11xbf16, #tpu.memory_space<vmem>>, vector<96x11xbf16>
    %cst_166 = arith.constant dense<0.000000e+00> : vector<32x11xf32>
    %351 = tpu.matmul %349, %350, %cst_166 {dimension_numbers = #tpu.dot_dimension_numbers<[1], [0], [0], [1], [0, 0, 1, 1], [], []>} : vector<32x96xbf16>, vector<96x11xbf16>, vector<32x11xf32> -> vector<32x11xf32>
    %352 = arith.addf %351, %22 : vector<32x11xf32>
    %353 = arith.truncf %352 : vector<32x11xf32> to vector<32x11xbf16>
    %cst_167 = arith.constant dense<0.000000e+00> : vector<16x11xf32>
    %354 = tpu.matmul %13, %353, %cst_167 {dimension_numbers = #tpu.dot_dimension_numbers<[1], [0], [0], [1], [0, 0, 1, 1], [], []>} : vector<16x32xbf16>, vector<32x11xbf16>, vector<16x11xf32> -> vector<16x11xf32>
    %355 = arith.truncf %354 : vector<16x11xf32> to vector<16x11xbf16>
    %356 = tpu.concatenate %355, %330 in 1 : vector<16x11xbf16>, vector<16x10xbf16> -> vector<16x21xbf16>
    %c0_168 = arith.constant 0 : index
    %c0_169 = arith.constant 0 : index
    %357 = vector.load %arg12[%c0_168, %c0_169] : memref<21x40xbf16, #tpu.memory_space<vmem>>, vector<21x40xbf16>
    %cst_170 = arith.constant dense<0.000000e+00> : vector<16x40xf32>
    %358 = tpu.matmul %356, %357, %cst_170 {dimension_numbers = #tpu.dot_dimension_numbers<[1], [0], [0], [1], [0, 0, 1, 1], [], []>} : vector<16x21xbf16>, vector<21x40xbf16>, vector<16x40xf32> -> vector<16x40xf32>
    %359 = arith.addf %358, %34 : vector<16x40xf32>
    %360 = vector.extract_strided_slice %359 {offsets = [0, 0], sizes = [16, 20], strides = [1, 1]} : vector<16x40xf32> to vector<16x20xf32>
    %361 = arith.negf %360 : vector<16x20xf32>
    %362 = math.exp %361 : vector<16x20xf32>
    %cst_171 = arith.constant 1.000000e+00 : f32
    %363 = vector.broadcast %cst_171 : f32 to vector<16x20xf32>
    %364 = arith.addf %363, %362 : vector<16x20xf32>
    %365 = arith.divf %363, %364 : vector<16x20xf32>
    %366 = vector.extract_strided_slice %365 {offsets = [0, 0], sizes = [16, 10], strides = [1, 1]} : vector<16x20xf32> to vector<16x10xf32>
    %367 = vector.extract_strided_slice %365 {offsets = [0, 10], sizes = [16, 10], strides = [1, 1]} : vector<16x20xf32> to vector<16x10xf32>
    %368 = vector.extract_strided_slice %359 {offsets = [0, 20], sizes = [16, 10], strides = [1, 1]} : vector<16x40xf32> to vector<16x10xf32>
    %369 = vector.extract_strided_slice %359 {offsets = [0, 30], sizes = [16, 10], strides = [1, 1]} : vector<16x40xf32> to vector<16x10xf32>
    %370 = arith.mulf %366, %369 : vector<16x10xf32>
    %371 = arith.addf %368, %370 : vector<16x10xf32>
    %372 = math.tanh %371 : vector<16x10xf32>
    %cst_172 = arith.constant 1.000000e+00 : f32
    %373 = vector.broadcast %cst_172 : f32 to vector<16x10xf32>
    %374 = arith.subf %373, %367 : vector<16x10xf32>
    %375 = arith.mulf %374, %372 : vector<16x10xf32>
    %376 = arith.mulf %367, %328 : vector<16x10xf32>
    %377 = arith.addf %375, %376 : vector<16x10xf32>
    %c96 = arith.constant 96 : index
    %c0_173 = arith.constant 0 : index
    %378 = vector.load %arg17[%c96, %c0_173] : memref<112x10xf32, #tpu.memory_space<vmem>>, vector<16x10xf32>
    tpu.vector_store %arg17[%c96, %c0_173], %377 {strides = array<i32>} : memref<112x10xf32, #tpu.memory_space<vmem>>, vector<16x10xf32>,
    %c0_174 = arith.constant 0 : index
    %c0_175 = arith.constant 0 : index
    %379 = vector.load %arg17[%c0_174, %c0_175] : memref<112x10xf32, #tpu.memory_space<vmem>>, vector<112x10xf32>
    %380 = arith.truncf %379 : vector<112x10xf32> to vector<112x10xbf16>
    %c0_176 = arith.constant 0 : index
    %c0_177 = arith.constant 0 : index
    %381 = vector.load %arg14[%c0_176, %c0_177] : memref<10x128xbf16, #tpu.memory_space<vmem>>, vector<10x128xbf16>
    %cst_178 = arith.constant dense<0.000000e+00> : vector<112x128xf32>
    %382 = tpu.matmul %380, %381, %cst_178 {dimension_numbers = #tpu.dot_dimension_numbers<[1], [0], [0], [1], [0, 0, 1, 1], [], []>} : vector<112x10xbf16>, vector<10x128xbf16>, vector<112x128xf32> -> vector<112x128xf32>
    %c0_179 = arith.constant 0 : index
    %c0_180 = arith.constant 0 : index
    %383 = vector.load %arg15[%c0_179, %c0_180] : memref<1x128xf32, #tpu.memory_space<vmem>>, vector<1x128xf32>
    %384 = vector.broadcast %383 : vector<1x128xf32> to vector<112x128xf32>
    %385 = arith.addf %382, %384 : vector<112x128xf32>
    %c0_181 = arith.constant 0 : index
    %c0_182 = arith.constant 0 : index
    %386 = vector.load %arg16[%c0_181, %c0_182] : memref<112x128xf32, #tpu.memory_space<vmem>>, vector<112x128xf32>
    tpu.vector_store %arg16[%c0_181, %c0_182], %385 {strides = array<i32>} : memref<112x128xf32, #tpu.memory_space<vmem>>, vector<112x128xf32>,
    return
  }
}

</mosaic_0001>

<llo_original>
// kernel: tpu_custom_call.1
$region0: #{tpu_custom_call.1}
  #allocation0 [shape = 'u32[]', space=smem, size = 0x4, offset = 0x4, fixed_abs, tag = 'smem constant byte address 0x4 - core index']
  #allocation1 [shape = 'u32[144,128]{1,0:T(1,128)}', space=vmem, size = 0x12000, scoped, tag = 'internal scratch']
  #allocation2 [shape = 'f32[112,10]{1,0:T(8,128)}', space=vmem, size = 0xe000, scoped, tag = 'scratch operand']
  %s0 = inlined_call_operand.vmem [shape: f32[16,9], index: 0, kind: input, shape index: {}]
  %s1 = inlined_call_operand.vmem [shape: s32[64,1], index: 1, kind: input, shape index: {}]
  %s2 = inlined_call_operand.vmem [shape: s32[1,32], index: 2, kind: input, shape index: {}]
  %s3 = inlined_call_operand.vmem [shape: bf16[10,96], index: 3, kind: input, shape index: {}]
  %s4 = inlined_call_operand.vmem [shape: bf16[10,96], index: 4, kind: input, shape index: {}]
  %s5 = inlined_call_operand.vmem [shape: f32[1,96], index: 5, kind: input, shape index: {}]
  %s6 = inlined_call_operand.vmem [shape: bf16[96,96], index: 6, kind: input, shape index: {}]
  %s7 = inlined_call_operand.vmem [shape: f32[1,96], index: 7, kind: input, shape index: {}]
  %s8 = inlined_call_operand.vmem [shape: bf16[96,11], index: 8, kind: input, shape index: {}]
  %s9 = inlined_call_operand.vmem [shape: f32[1,11], index: 9, kind: input, shape index: {}]
  %s10 = inlined_call_operand.vmem [shape: bf16[9,30], index: 10, kind: input, shape index: {}]
  %s11 = inlined_call_operand.vmem [shape: f32[1,30], index: 11, kind: input, shape index: {}]
  %s12 = inlined_call_operand.vmem [shape: bf16[21,40], index: 12, kind: input, shape index: {}]
  %s13 = inlined_call_operand.vmem [shape: f32[1,40], index: 13, kind: input, shape index: {}]
  %s14 = inlined_call_operand.vmem [shape: bf16[10,128], index: 14, kind: input, shape index: {}]
  %s15 = inlined_call_operand.vmem [shape: f32[1,128], index: 15, kind: input, shape index: {}]
  %s16 = inlined_call_operand.hbm [shape: f32[112,128], index: 16, kind: output, shape index: {}]
  %s17 = sld [smem:[#allocation0]]
  $region74: #{tpu_custom_call.1} parent=0
    _
  %s19 = ssub.s32 1, %s17
  %s20 = scalar_select 0, %s19, %s17
  $region1: #{tpu_custom_call.1} parent=0
    #allocation3 [shape = 'u8[57344]{0}', space=vmem, size = 0xe000, scoped, tag = 'output window, operand 0, single buffered']
    #allocation4 [shape = 's32[1]{0}', space=sflag, size = 0x4, scoped, tag = 'scoped memory for tpu_custom_call.1']
    %21 = vsyncpa [#allocation4], 0
    // Predicated region
    $region2: #{tpu_custom_call.1} parent=1 // pred_check
      _
    $region3: #{tpu_custom_call.1} parent=1 // pred_check_branch
      %23 = sbr.rel (0) target = $region5
    $region4: #{tpu_custom_call.1} parent=1 // pred_region
      _
    $region5: #{tpu_custom_call.1} parent=1 // pred_fallthru
      _
    // Predicated region
    $region6: #{tpu_custom_call.1} parent=1 // pred_check
      _
    $region7: #{tpu_custom_call.1} parent=1 // pred_check_branch
      %25 = sbr.rel (0) target = $region9
    $region8: #{tpu_custom_call.1} parent=1 // pred_region
      _
    $region9: #{tpu_custom_call.1} parent=1 // pred_fallthru
      _
    // Predicated region
    $region10: #{tpu_custom_call.1} parent=1 // pred_check
      _
    $region11: #{tpu_custom_call.1} parent=1 // pred_check_branch
      %27 = sbr.rel (0) target = $region13
    $region12: #{tpu_custom_call.1} parent=1 // pred_region
      _
    $region13: #{tpu_custom_call.1} parent=1 // pred_fallthru
      _
    // Predicated region
    $region14: #{tpu_custom_call.1} parent=1 // pred_check
      _
    $region15: #{tpu_custom_call.1} parent=1 // pred_check_branch
      %29 = sbr.rel (0) target = $region17
    $region16: #{tpu_custom_call.1} parent=1 // pred_region
      _
    $region17: #{tpu_custom_call.1} parent=1 // pred_fallthru
      _
    // Predicated region
    $region18: #{tpu_custom_call.1} parent=1 // pred_check
      _
    $region19: #{tpu_custom_call.1} parent=1 // pred_check_branch
      %31 = sbr.rel (0) target = $region21
    $region20: #{tpu_custom_call.1} parent=1 // pred_region
      _
    $region21: #{tpu_custom_call.1} parent=1 // pred_fallthru
      _
    // Predicated region
    $region22: #{tpu_custom_call.1} parent=1 // pred_check
      _
    $region23: #{tpu_custom_call.1} parent=1 // pred_check_branch
      %33 = sbr.rel (0) target = $region25
    $region24: #{tpu_custom_call.1} parent=1 // pred_region
      _
    $region25: #{tpu_custom_call.1} parent=1 // pred_fallthru
      _
    // Predicated region
    $region26: #{tpu_custom_call.1} parent=1 // pred_check
      _
    $region27: #{tpu_custom_call.1} parent=1 // pred_check_branch
      %35 = sbr.rel (0) target = $region29
    $region28: #{tpu_custom_call.1} parent=1 // pred_region
      _
    $region29: #{tpu_custom_call.1} parent=1 // pred_fallthru
      _
    // Predicated region
    $region30: #{tpu_custom_call.1} parent=1 // pred_check
      _
    $region31: #{tpu_custom_call.1} parent=1 // pred_check_branch
      %37 = sbr.rel (0) target = $region33
    $region32: #{tpu_custom_call.1} parent=1 // pred_region
      _
    $region33: #{tpu_custom_call.1} parent=1 // pred_fallthru
      _
    // Predicated region
    $region34: #{tpu_custom_call.1} parent=1 // pred_check
      _
    $region35: #{tpu_custom_call.1} parent=1 // pred_check_branch
      %39 = sbr.rel (0) target = $region37
    $region36: #{tpu_custom_call.1} parent=1 // pred_region
      _
    $region37: #{tpu_custom_call.1} parent=1 // pred_fallthru
      _
    // Predicated region
    $region38: #{tpu_custom_call.1} parent=1 // pred_check
      _
    $region39: #{tpu_custom_call.1} parent=1 // pred_check_branch
      %41 = sbr.rel (0) target = $region41
    $region40: #{tpu_custom_call.1} parent=1 // pred_region
      _
    $region41: #{tpu_custom_call.1} parent=1 // pred_fallthru
      _
    // Predicated region
    $region42: #{tpu_custom_call.1} parent=1 // pred_check
      _
    $region43: #{tpu_custom_call.1} parent=1 // pred_check_branch
      %43 = sbr.rel (0) target = $region45
    $region44: #{tpu_custom_call.1} parent=1 // pred_region
      _
    $region45: #{tpu_custom_call.1} parent=1 // pred_fallthru
      _
    // Predicated region
    $region46: #{tpu_custom_call.1} parent=1 // pred_check
      _
    $region47: #{tpu_custom_call.1} parent=1 // pred_check_branch
      %45 = sbr.rel (0) target = $region49
    $region48: #{tpu_custom_call.1} parent=1 // pred_region
      _
    $region49: #{tpu_custom_call.1} parent=1 // pred_fallthru
      _
    // Predicated region
    $region50: #{tpu_custom_call.1} parent=1 // pred_check
      _
    $region51: #{tpu_custom_call.1} parent=1 // pred_check_branch
      %47 = sbr.rel (0) target = $region53
    $region52: #{tpu_custom_call.1} parent=1 // pred_region
      _
    $region53: #{tpu_custom_call.1} parent=1 // pred_fallthru
      _
    // Predicated region
    $region54: #{tpu_custom_call.1} parent=1 // pred_check
      _
    $region55: #{tpu_custom_call.1} parent=1 // pred_check_branch
      %49 = sbr.rel (0) target = $region57
    $region56: #{tpu_custom_call.1} parent=1 // pred_region
      _
    $region57: #{tpu_custom_call.1} parent=1 // pred_fallthru
      _
    // Predicated region
    $region58: #{tpu_custom_call.1} parent=1 // pred_check
      _
    $region59: #{tpu_custom_call.1} parent=1 // pred_check_branch
      %51 = sbr.rel (0) target = $region61
    $region60: #{tpu_custom_call.1} parent=1 // pred_region
      _
    $region61: #{tpu_custom_call.1} parent=1 // pred_fallthru
      _
    // Predicated region
    $region62: #{tpu_custom_call.1} parent=1 // pred_check
      _
    $region63: #{tpu_custom_call.1} parent=1 // pred_check_branch
      %53 = sbr.rel (0) target = $region65
    $region64: #{tpu_custom_call.1} parent=1 // pred_region
      _
    $region65: #{tpu_custom_call.1} parent=1 // pred_fallthru
      _
    %v55 = vld [vmem:[%s1] sm:$0xff]
    %v56 = vld [vmem:[%s1 + $0x8] sm:$0xff]
    %v57 = vld [vmem:[%s1 + $0x10] sm:$0xff]
    %v58 = vld [vmem:[%s1 + $0x18] sm:$0xff]
    %v59 = vld [vmem:[%s1 + $0x20] sm:$0xff]
    %v60 = vld [vmem:[%s1 + $0x28] sm:$0xff]
    %v61 = vld [vmem:[%s1 + $0x30] sm:$0xff]
    %v62 = vld [vmem:[%s1 + $0x38] sm:$0xff]
    %v63 = vlaneseq
    %v64 = vand.u32 %v63, 127
    %65 = vset.pattern.permute.xlu0 0
    %66 = vperm.xlu0 %65, %v55
    %v67 = vpop.permute.xlu0 %66
    %68 = vset.pattern.permute.xlu0 0
    %69 = vperm.xlu0 %68, %v56
    %v70 = vpop.permute.xlu0 %69
    %71 = vset.pattern.permute.xlu0 0
    %72 = vperm.xlu0 %71, %v57
    %v73 = vpop.permute.xlu0 %72
    %74 = vset.pattern.permute.xlu0 0
    %75 = vperm.xlu0 %74, %v58
    %v76 = vpop.permute.xlu0 %75
    %77 = vset.pattern.permute.xlu0 0
    %78 = vperm.xlu0 %77, %v59
    %v79 = vpop.permute.xlu0 %78
    %80 = vset.pattern.permute.xlu0 0
    %81 = vperm.xlu0 %80, %v60
    %v82 = vpop.permute.xlu0 %81
    %83 = vset.pattern.permute.xlu0 0
    %84 = vperm.xlu0 %83, %v61
    %v85 = vpop.permute.xlu0 %84
    %86 = vset.pattern.permute.xlu0 0
    %87 = vperm.xlu0 %86, %v62
    %v88 = vpop.permute.xlu0 %87
    %vm89 = vcmp.eq.s32.totalorder %v64, %v67
    %vm90 = vcmp.eq.s32.totalorder %v64, %v70
    %vm91 = vcmp.eq.s32.totalorder %v64, %v73
    %vm92 = vcmp.eq.s32.totalorder %v64, %v76
    %vm93 = vcmp.eq.s32.totalorder %v64, %v79
    %vm94 = vcmp.eq.s32.totalorder %v64, %v82
    %vm95 = vcmp.eq.s32.totalorder %v64, %v85
    %vm96 = vcmp.eq.s32.totalorder %v64, %v88
    %v97 = vsel %vm89, 1, 0
    %v98 = vsel %vm90, 1, 0
    %v99 = vsel %vm91, 1, 0
    %v100 = vsel %vm92, 1, 0
    %v101 = vsel %vm93, 1, 0
    %v102 = vsel %vm94, 1, 0
    %v103 = vsel %vm95, 1, 0
    %v104 = vsel %vm96, 1, 0
    %v105 = vcvt.s32.f32 %v97
    %v106 = vcvt.s32.f32 %v98
    %v107 = vcvt.s32.f32 %v99
    %v108 = vcvt.s32.f32 %v100
    %v109 = vcvt.s32.f32 %v101
    %v110 = vcvt.s32.f32 %v102
    %v111 = vcvt.s32.f32 %v103
    %v112 = vcvt.s32.f32 %v104
    %v113 = vpack.c.bf16 %v106, %v105
    %v114 = vpack.c.bf16 %v108, %v107
    %v115 = vpack.c.bf16 %v110, %v109
    %v116 = vpack.c.bf16 %v112, %v111
    %v117 = vld [vmem:[%s2] sm:$0x1]
    %v118 = vlaneseq
    %v119 = vshrl.u32 %v118, 7
    %v120 = vadd.s32 %v119, 8
    %v121 = vlaneseq
    %v122 = vshrl.u32 %v121, 7
    %v123 = vsub.s32 0, %v122
    %v124 = vrot.slane %v117, %v123
    %vm125 = vcmp.eq.s32.totalorder %v119, %v124
    %vm126 = vcmp.eq.s32.totalorder %v120, %v124
    %v127 = vsel %vm125, 1, 0
    %v128 = vsel %vm126, 1, 0
    %v129 = vcvt.s32.f32 %v127
    %v130 = vcvt.s32.f32 %v128
    %v131 = vpack.c.bf16 %v130, %v129
    %v132 = vld [vmem:[%s5] sm:$0x1]
    %v134 = vlaneseq
    %v135 = vshrl.u32 %v134, 7
    %v136 = vsub.s32 0, %v135
    %v137 = vrot.slane %v132, %v136
    %v139 = vld [vmem:[%s7] sm:$0x1]
    %v141 = vlaneseq
    %v142 = vshrl.u32 %v141, 7
    %v143 = vsub.s32 0, %v142
    %v144 = vrot.slane %v139, %v143
    %v146 = vld [vmem:[%s9] sm:$0x1]
    %v148 = vlaneseq
    %v149 = vshrl.u32 %v148, 7
    %v150 = vsub.s32 0, %v149
    %v151 = vrot.slane %v146, %v150
    %v153 = vld [vmem:[%s0] sm:$0xff]
    %v154 = vld [vmem:[%s0 + $0x8] sm:$0xff]
    %v155 = vpack.c.bf16 %v154, %v153
    %v156 = vld [vmem:[%s10] sm:$0xf]
    %v157 = vld [vmem:[%s10 + $0x4] sm:$0x1]
    %v158 = vld [vmem:[%s11] sm:$0x1]
    %v160 = vlaneseq
    %v161 = vshrl.u32 %v160, 7
    %v162 = vsub.s32 0, %v161
    %v163 = vrot.slane %v158, %v162
    %v167 = vunpack.c.l.b16 %v156
    %v168 = vunpack.c.l.b16 %v157
    %v169 = vpack.c.b16 %v168, %v167
    %vm170 = vcmask 72704
    %v172 = vsel %vm170, %v155, 0
    %vm174 = vcmask 1043456
    %vm175 = vcmask 1044480
    %v176 = vsel %vm174, 4294967295, 65535
    %v177 = vsel %vm175, %v176, 0
    %v179 = vand.u32 %v169, %v177
    %181 = vmatprep.subr.bf16.mxu0 0
    %182 = vmatpush1.bf16.msra.mxu0 %v179
    %183 = vmatprep.subr.bf16.mxu0 0
    %184 = vmatpush1.bf16.msra.mxu0 0
    %185 = vmatprep.subr.bf16.mxu0 0
    %186 = vmatpush1.bf16.msra.mxu0 0
    %187 = vmatprep.subr.bf16.mxu0 0
    %188 = vmatpush1.bf16.msra.mxu0 0
    %189 = vmatprep.subr.bf16.mxu0 0
    %190 = vmatpush1.bf16.msra.mxu0 0
    %191 = vmatprep.subr.bf16.mxu0 0
    %192 = vmatpush1.bf16.msra.mxu0 0
    %193 = vmatprep.subr.bf16.mxu0 0
    %194 = vmatpush1.bf16.msra.mxu0 0
    %195 = vmatprep.subr.bf16.mxu0 0
    %196 = vmatpush1.bf16.msra.mxu0 0
    %197 = vmatprep.subr.bf16.mxu0 0
    %198 = vmatpush1.bf16.msra.mxu0 0
    %199 = vmatprep.subr.bf16.mxu0 0
    %200 = vmatpush1.bf16.msra.mxu0 0
    %201 = vmatprep.subr.bf16.mxu0 0
    %202 = vmatpush1.bf16.msra.mxu0 0
    %203 = vmatprep.subr.bf16.mxu0 0
    %204 = vmatpush1.bf16.msra.mxu0 0
    %205 = vmatprep.subr.bf16.mxu0 0
    %206 = vmatpush1.bf16.msra.mxu0 0
    %207 = vmatprep.subr.bf16.mxu0 0
    %208 = vmatpush1.bf16.msra.mxu0 0
    %209 = vmatprep.subr.bf16.mxu0 0
    %210 = vmatpush1.bf16.msra.mxu0 0
    %211 = vmatprep.subr.bf16.mxu0 0
    %212 = vmatpush1.bf16.msra.mxu0 0
    %213 = vmatprep.mubr.bf16.mxu0 0
    %214 = vmatmul.mubr.bf16.gmra.mrb[0].mxu0 %v172
    %v215 = vpop.f32.mrb[0].mxu0
    %v216 = vadd.f32 %v163, %v215
    %v217 = vpop.f32.mrb[0].mxu0
    %v218 = vpop.f32.mrb[0].mxu0
    %v219 = vadd.f32 %v163, %v218
    %v220 = vpop.f32.mrb[0].mxu0
    %221 = vdwg.mxu0
    %vm222 = vcmask 244736
    %v223 = vsel %vm222, %v216, 0.0
    %v224 = vsel %vm222, %v219, 0.0
    %v225 = vld [vmem:[%s13] sm:$0x1]
    %v227 = vlaneseq
    %v228 = vshrl.u32 %v227, 7
    %v229 = vsub.s32 0, %v228
    %v230 = vrot.slane %v225, %v229
    %v232 = vadd.f32 %v223, %v230
    %v233 = vadd.f32 %v224, %v230
    %vm234 = vcmask 130048
    %v236 = vsel %vm234, %v113, 0
    %v239 = vsel %vm234, %v114, 0
    %v242 = vsel %vm234, %v115, 0
    %v245 = vsel %vm234, %v116, 0
    %247 = vmatprep.subr.bf16.mxu0 0
    %248 = vmatpush1.bf16.msra.mxu0 0
    %249 = vmatprep.subr.bf16.mxu0 0
    %250 = vmatpush1.bf16.msra.mxu0 0
    %251 = vmatprep.subr.bf16.mxu0 0
    %252 = vmatpush1.bf16.msra.mxu0 0
    %253 = vmatprep.subr.bf16.mxu0 0
    %254 = vmatpush1.bf16.msra.mxu0 0
    %255 = vmatprep.subr.bf16.mxu0 0
    %256 = vmatpush1.bf16.msra.mxu0 0
    %257 = vmatprep.subr.bf16.mxu0 0
    %258 = vmatpush1.bf16.msra.mxu0 0
    %259 = vmatprep.subr.bf16.mxu0 0
    %260 = vmatpush1.bf16.msra.mxu0 0
    %261 = vmatprep.subr.bf16.mxu0 0
    %262 = vmatpush1.bf16.msra.mxu0 0
    %263 = vmatprep.subr.bf16.mxu0 0
    %264 = vmatpush1.bf16.msra.mxu0 0
    %265 = vmatprep.subr.bf16.mxu0 0
    %266 = vmatpush1.bf16.msra.mxu0 0
    %267 = vmatprep.subr.bf16.mxu0 0
    %268 = vmatpush1.bf16.msra.mxu0 0
    %269 = vmatprep.subr.bf16.mxu0 0
    %270 = vmatpush1.bf16.msra.mxu0 0
    %271 = vmatprep.subr.bf16.mxu0 0
    %272 = vmatpush1.bf16.msra.mxu0 0
    %273 = vmatprep.subr.bf16.mxu0 0
    %274 = vmatpush1.bf16.msra.mxu0 0
    %275 = vmatprep.subr.bf16.mxu0 0
    %276 = vmatpush1.bf16.msra.mxu0 0
    %277 = vmatprep.subr.bf16.mxu0 0
    %278 = vmatpush1.bf16.msra.mxu0 0
    %279 = vmatprep.mubr.bf16.mxu0 0
    %280 = vmatmul.mubr.bf16.gmra.mrb[0].mxu0 %v236
    %v281 = vpop.f32.mrb[0].mxu0
    %v282 = vadd.f32 0.0, %v281
    %v283 = vpop.f32.mrb[0].mxu0
    %v284 = vpop.f32.mrb[0].mxu0
    %v285 = vadd.f32 0.0, %v284
    %v286 = vpop.f32.mrb[0].mxu0
    %287 = vmatprep.mubr.bf16.mxu0 0
    %288 = vmatmul.mubr.bf16.gmra.mrb[0].mxu0 %v239
    %v289 = vpop.f32.mrb[0].mxu0
    %v290 = vadd.f32 0.0, %v289
    %v291 = vpop.f32.mrb[0].mxu0
    %v292 = vpop.f32.mrb[0].mxu0
    %v293 = vadd.f32 0.0, %v292
    %v294 = vpop.f32.mrb[0].mxu0
    %295 = vmatprep.mubr.bf16.mxu0 0
    %296 = vmatmul.mubr.bf16.gmra.mrb[0].mxu0 %v242
    %v297 = vpop.f32.mrb[0].mxu0
    %v298 = vadd.f32 0.0, %v297
    %v299 = vpop.f32.mrb[0].mxu0
    %v300 = vpop.f32.mrb[0].mxu0
    %v301 = vadd.f32 0.0, %v300
    %v302 = vpop.f32.mrb[0].mxu0
    %303 = vmatprep.mubr.bf16.mxu0 0
    %304 = vmatmul.mubr.bf16.gmra.mrb[0].mxu0 %v245
    %v305 = vpop.f32.mrb[0].mxu0
    %v306 = vadd.f32 0.0, %v305
    %v307 = vpop.f32.mrb[0].mxu0
    %v308 = vpop.f32.mrb[0].mxu0
    %v309 = vadd.f32 0.0, %v308
    %v310 = vpop.f32.mrb[0].mxu0
    %311 = vdwg.mxu0
    %v312 = vpack.c.bf16 %v285, %v282
    %v313 = vpack.c.bf16 %v293, %v290
    %v314 = vpack.c.bf16 %v301, %v298
    %v315 = vpack.c.bf16 %v309, %v306
    %v316 = vld [vmem:[%s3] sm:$0xf]
    %v317 = vld [vmem:[%s3 + $0x4] sm:$0x1]
    %v318 = vld [vmem:[%s4] sm:$0xf]
    %v319 = vld [vmem:[%s4 + $0x4] sm:$0x1]
    %v322 = vunpack.c.l.b16 %v318
    %v323 = vunpack.c.l.b16 %v319
    %v324 = vpack.c.b16 %v323, %v322
    %vm325 = vcmask 80896
    %v327 = vsel %vm325, %v314, 0
    %v330 = vsel %vm325, %v315, 0
    %v333 = vsel %vm175, %v324, 0
    %335 = vmatprep.subr.bf16.mxu0 0
    %336 = vmatpush1.bf16.msra.mxu0 %v333
    %337 = vmatprep.subr.bf16.mxu0 0
    %338 = vmatpush1.bf16.msra.mxu0 0
    %339 = vmatprep.subr.bf16.mxu0 0
    %340 = vmatpush1.bf16.msra.mxu0 0
    %341 = vmatprep.subr.bf16.mxu0 0
    %342 = vmatpush1.bf16.msra.mxu0 0
    %343 = vmatprep.subr.bf16.mxu0 0
    %344 = vmatpush1.bf16.msra.mxu0 0
    %345 = vmatprep.subr.bf16.mxu0 0
    %346 = vmatpush1.bf16.msra.mxu0 0
    %347 = vmatprep.subr.bf16.mxu0 0
    %348 = vmatpush1.bf16.msra.mxu0 0
    %349 = vmatprep.subr.bf16.mxu0 0
    %350 = vmatpush1.bf16.msra.mxu0 0
    %351 = vmatprep.subr.bf16.mxu0 0
    %352 = vmatpush1.bf16.msra.mxu0 0
    %353 = vmatprep.subr.bf16.mxu0 0
    %354 = vmatpush1.bf16.msra.mxu0 0
    %355 = vmatprep.subr.bf16.mxu0 0
    %356 = vmatpush1.bf16.msra.mxu0 0
    %357 = vmatprep.subr.bf16.mxu0 0
    %358 = vmatpush1.bf16.msra.mxu0 0
    %359 = vmatprep.subr.bf16.mxu0 0
    %360 = vmatpush1.bf16.msra.mxu0 0
    %361 = vmatprep.subr.bf16.mxu0 0
    %362 = vmatpush1.bf16.msra.mxu0 0
    %363 = vmatprep.subr.bf16.mxu0 0
    %364 = vmatpush1.bf16.msra.mxu0 0
    %365 = vmatprep.subr.bf16.mxu0 0
    %366 = vmatpush1.bf16.msra.mxu0 0
    %367 = vmatprep.mubr.bf16.mxu0 0
    %368 = vmatmul.mubr.bf16.gmra.mrb[0].mxu0 %v327
    %v369 = vpop.f32.mrb[0].mxu0
    %v370 = vadd.f32 0.0, %v369
    %v371 = vpop.f32.mrb[0].mxu0
    %v372 = vpop.f32.mrb[0].mxu0
    %v373 = vadd.f32 0.0, %v372
    %v374 = vpop.f32.mrb[0].mxu0
    %375 = vmatprep.mubr.bf16.mxu0 0
    %376 = vmatmul.mubr.bf16.gmra.mrb[0].mxu0 %v330
    %v377 = vpop.f32.mrb[0].mxu0
    %v378 = vadd.f32 0.0, %v377
    %v379 = vpop.f32.mrb[0].mxu0
    %v380 = vpop.f32.mrb[0].mxu0
    %v381 = vadd.f32 0.0, %v380
    %v382 = vpop.f32.mrb[0].mxu0
    %383 = vdwg.mxu0
    %v386 = vunpack.c.l.b16 %v316
    %v387 = vunpack.c.l.b16 %v317
    %v388 = vpack.c.b16 %v387, %v386
    %v390 = vsel %vm325, %v312, 0
    %v393 = vsel %vm325, %v313, 0
    %v396 = vsel %vm175, %v388, 0
    %398 = vmatprep.subr.bf16.mxu0 0
    %399 = vmatpush1.bf16.msra.mxu0 %v396
    %400 = vmatprep.subr.bf16.mxu0 0
    %401 = vmatpush1.bf16.msra.mxu0 0
    %402 = vmatprep.subr.bf16.mxu0 0
    %403 = vmatpush1.bf16.msra.mxu0 0
    %404 = vmatprep.subr.bf16.mxu0 0
    %405 = vmatpush1.bf16.msra.mxu0 0
    %406 = vmatprep.subr.bf16.mxu0 0
    %407 = vmatpush1.bf16.msra.mxu0 0
    %408 = vmatprep.subr.bf16.mxu0 0
    %409 = vmatpush1.bf16.msra.mxu0 0
    %410 = vmatprep.subr.bf16.mxu0 0
    %411 = vmatpush1.bf16.msra.mxu0 0
    %412 = vmatprep.subr.bf16.mxu0 0
    %413 = vmatpush1.bf16.msra.mxu0 0
    %414 = vmatprep.subr.bf16.mxu0 0
    %415 = vmatpush1.bf16.msra.mxu0 0
    %416 = vmatprep.subr.bf16.mxu0 0
    %417 = vmatpush1.bf16.msra.mxu0 0
    %418 = vmatprep.subr.bf16.mxu0 0
    %419 = vmatpush1.bf16.msra.mxu0 0
    %420 = vmatprep.subr.bf16.mxu0 0
    %421 = vmatpush1.bf16.msra.mxu0 0
    %422 = vmatprep.subr.bf16.mxu0 0
    %423 = vmatpush1.bf16.msra.mxu0 0
    %424 = vmatprep.subr.bf16.mxu0 0
    %425 = vmatpush1.bf16.msra.mxu0 0
    %426 = vmatprep.subr.bf16.mxu0 0
    %427 = vmatpush1.bf16.msra.mxu0 0
    %428 = vmatprep.subr.bf16.mxu0 0
    %429 = vmatpush1.bf16.msra.mxu0 0
    %430 = vmatprep.mubr.bf16.mxu0 0
    %431 = vmatmul.mubr.bf16.gmra.mrb[0].mxu0 %v390
    %v432 = vpop.f32.mrb[0].mxu0
    %v433 = vadd.f32 %v370, %v432
    %v434 = vpop.f32.mrb[0].mxu0
    %v435 = vpop.f32.mrb[0].mxu0
    %v436 = vadd.f32 %v373, %v435
    %v437 = vpop.f32.mrb[0].mxu0
    %438 = vmatprep.mubr.bf16.mxu0 0
    %439 = vmatmul.mubr.bf16.gmra.mrb[0].mxu0 %v393
    %v440 = vpop.f32.mrb[0].mxu0
    %v441 = vadd.f32 %v378, %v440
    %v442 = vpop.f32.mrb[0].mxu0
    %v443 = vpop.f32.mrb[0].mxu0
    %v444 = vadd.f32 %v381, %v443
    %v445 = vpop.f32.mrb[0].mxu0
    %446 = vdwg.mxu0
    %v447 = vadd.f32 %v433, %v137
    %v448 = vadd.f32 %v436, %v137
    %v449 = vadd.f32 %v441, %v137
    %v450 = vadd.f32 %v444, %v137
    %v451 = vmax.f32 %v447, 0.0
    %v452 = vmax.f32 %v448, 0.0
    %v453 = vmax.f32 %v449, 0.0
    %v454 = vmax.f32 %v450, 0.0
    %v455 = vpack.c.bf16 %v452, %v451
    %v456 = vpack.c.bf16 %v454, %v453
    %v457 = vld [vmem:[%s6] sm:$0xf]
    %v458 = vld [vmem:[%s6 + $0x4] sm:$0xf]
    %v459 = vld [vmem:[%s6 + $0x8] sm:$0xf]
    %v460 = vld [vmem:[%s6 + $0xc] sm:$0xf]
    %v461 = vld [vmem:[%s6 + $0x10] sm:$0xf]
    %v462 = vld [vmem:[%s6 + $0x14] sm:$0xf]
    %v463 = vld [vmem:[%s6 + $0x18] sm:$0xf]
    %v464 = vld [vmem:[%s6 + $0x1c] sm:$0xf]
    %v465 = vld [vmem:[%s6 + $0x20] sm:$0xf]
    %v466 = vld [vmem:[%s6 + $0x24] sm:$0xf]
    %v467 = vld [vmem:[%s6 + $0x28] sm:$0xf]
    %v468 = vld [vmem:[%s6 + $0x2c] sm:$0xf]
    %v481 = vunpack.c.l.b16 %v457
    %v482 = vunpack.c.l.b16 %v458
    %v483 = vunpack.c.l.b16 %v459
    %v484 = vunpack.c.l.b16 %v460
    %v485 = vunpack.c.l.b16 %v461
    %v486 = vunpack.c.l.b16 %v462
    %v487 = vunpack.c.l.b16 %v463
    %v488 = vunpack.c.l.b16 %v464
    %v489 = vunpack.c.l.b16 %v465
    %v490 = vunpack.c.l.b16 %v466
    %v491 = vunpack.c.l.b16 %v467
    %v492 = vunpack.c.l.b16 %v468
    %v493 = vpack.c.b16 %v482, %v481
    %v494 = vpack.c.b16 %v484, %v483
    %v495 = vpack.c.b16 %v486, %v485
    %v496 = vpack.c.b16 %v488, %v487
    %v497 = vpack.c.b16 %v490, %v489
    %v498 = vpack.c.b16 %v492, %v491
    %vm505 = vcmask 785408
    %v507 = vsel %vm505, %v455, 0
    %v510 = vsel %vm505, %v456, 0
    %512 = vmatprep.subr.bf16.mxu0 0
    %513 = vmatpush1.bf16.msra.mxu0 %v493
    %514 = vmatprep.subr.bf16.mxu0 0
    %515 = vmatpush1.bf16.msra.mxu0 %v494
    %516 = vmatprep.subr.bf16.mxu0 0
    %517 = vmatpush1.bf16.msra.mxu0 %v495
    %518 = vmatprep.subr.bf16.mxu0 0
    %519 = vmatpush1.bf16.msra.mxu0 %v496
    %520 = vmatprep.subr.bf16.mxu0 0
    %521 = vmatpush1.bf16.msra.mxu0 %v497
    %522 = vmatprep.subr.bf16.mxu0 0
    %523 = vmatpush1.bf16.msra.mxu0 %v498
    %524 = vmatprep.subr.bf16.mxu0 0
    %525 = vmatpush1.bf16.msra.mxu0 0
    %526 = vmatprep.subr.bf16.mxu0 0
    %527 = vmatpush1.bf16.msra.mxu0 0
    %528 = vmatprep.subr.bf16.mxu0 0
    %529 = vmatpush1.bf16.msra.mxu0 0
    %530 = vmatprep.subr.bf16.mxu0 0
    %531 = vmatpush1.bf16.msra.mxu0 0
    %532 = vmatprep.subr.bf16.mxu0 0
    %533 = vmatpush1.bf16.msra.mxu0 0
    %534 = vmatprep.subr.bf16.mxu0 0
    %535 = vmatpush1.bf16.msra.mxu0 0
    %536 = vmatprep.subr.bf16.mxu0 0
    %537 = vmatpush1.bf16.msra.mxu0 0
    %538 = vmatprep.subr.bf16.mxu0 0
    %539 = vmatpush1.bf16.msra.mxu0 0
    %540 = vmatprep.subr.bf16.mxu0 0
    %541 = vmatpush1.bf16.msra.mxu0 0
    %542 = vmatprep.subr.bf16.mxu0 0
    %543 = vmatpush1.bf16.msra.mxu0 0
    %544 = vmatprep.mubr.bf16.mxu0 0
    %545 = vmatmul.mubr.bf16.gmra.mrb[0].mxu0 %v507
    %v546 = vpop.f32.mrb[0].mxu0
    %v547 = vadd.f32 %v144, %v546
    %v548 = vpop.f32.mrb[0].mxu0
    %v549 = vpop.f32.mrb[0].mxu0
    %v550 = vadd.f32 %v144, %v549
    %v551 = vpop.f32.mrb[0].mxu0
    %552 = vmatprep.mubr.bf16.mxu0 0
    %553 = vmatmul.mubr.bf16.gmra.mrb[0].mxu0 %v510
    %v554 = vpop.f32.mrb[0].mxu0
    %v555 = vadd.f32 %v144, %v554
    %v556 = vpop.f32.mrb[0].mxu0
    %v557 = vpop.f32.mrb[0].mxu0
    %v558 = vadd.f32 %v144, %v557
    %v559 = vpop.f32.mrb[0].mxu0
    %560 = vdwg.mxu0
    %v561 = vmax.f32 %v547, 0.0
    %v562 = vmax.f32 %v550, 0.0
    %v563 = vmax.f32 %v555, 0.0
    %v564 = vmax.f32 %v558, 0.0
    %v565 = vpack.c.bf16 %v562, %v561
    %v566 = vpack.c.bf16 %v564, %v563
    %v567 = vld [vmem:[%s8] sm:$0xf]
    %v568 = vld [vmem:[%s8 + $0x4] sm:$0xf]
    %v569 = vld [vmem:[%s8 + $0x8] sm:$0xf]
    %v570 = vld [vmem:[%s8 + $0xc] sm:$0xf]
    %v571 = vld [vmem:[%s8 + $0x10] sm:$0xf]
    %v572 = vld [vmem:[%s8 + $0x14] sm:$0xf]
    %v573 = vld [vmem:[%s8 + $0x18] sm:$0xf]
    %v574 = vld [vmem:[%s8 + $0x1c] sm:$0xf]
    %v575 = vld [vmem:[%s8 + $0x20] sm:$0xf]
    %v576 = vld [vmem:[%s8 + $0x24] sm:$0xf]
    %v577 = vld [vmem:[%s8 + $0x28] sm:$0xf]
    %v578 = vld [vmem:[%s8 + $0x2c] sm:$0xf]
    %v591 = vunpack.c.l.b16 %v567
    %v592 = vunpack.c.l.b16 %v568
    %v593 = vunpack.c.l.b16 %v569
    %v594 = vunpack.c.l.b16 %v570
    %v595 = vunpack.c.l.b16 %v571
    %v596 = vunpack.c.l.b16 %v572
    %v597 = vunpack.c.l.b16 %v573
    %v598 = vunpack.c.l.b16 %v574
    %v599 = vunpack.c.l.b16 %v575
    %v600 = vunpack.c.l.b16 %v576
    %v601 = vunpack.c.l.b16 %v577
    %v602 = vunpack.c.l.b16 %v578
    %v603 = vpack.c.b16 %v592, %v591
    %v604 = vpack.c.b16 %v594, %v593
    %v605 = vpack.c.b16 %v596, %v595
    %v606 = vpack.c.b16 %v598, %v597
    %v607 = vpack.c.b16 %v600, %v599
    %v608 = vpack.c.b16 %v602, %v601
    %v616 = vsel %vm505, %v565, 0
    %v619 = vsel %vm505, %v566, 0
    %621 = vmatprep.subr.bf16.mxu0 0
    %622 = vmatpush1.bf16.msra.mxu0 %v603
    %623 = vmatprep.subr.bf16.mxu0 0
    %624 = vmatpush1.bf16.msra.mxu0 %v604
    %625 = vmatprep.subr.bf16.mxu0 0
    %626 = vmatpush1.bf16.msra.mxu0 %v605
    %627 = vmatprep.subr.bf16.mxu0 0
    %628 = vmatpush1.bf16.msra.mxu0 %v606
    %629 = vmatprep.subr.bf16.mxu0 0
    %630 = vmatpush1.bf16.msra.mxu0 %v607
    %631 = vmatprep.subr.bf16.mxu0 0
    %632 = vmatpush1.bf16.msra.mxu0 %v608
    %633 = vmatprep.subr.bf16.mxu0 0
    %634 = vmatpush1.bf16.msra.mxu0 0
    %635 = vmatprep.subr.bf16.mxu0 0
    %636 = vmatpush1.bf16.msra.mxu0 0
    %637 = vmatprep.subr.bf16.mxu0 0
    %638 = vmatpush1.bf16.msra.mxu0 0
    %639 = vmatprep.subr.bf16.mxu0 0
    %640 = vmatpush1.bf16.msra.mxu0 0
    %641 = vmatprep.subr.bf16.mxu0 0
    %642 = vmatpush1.bf16.msra.mxu0 0
    %643 = vmatprep.subr.bf16.mxu0 0
    %644 = vmatpush1.bf16.msra.mxu0 0
    %645 = vmatprep.subr.bf16.mxu0 0
    %646 = vmatpush1.bf16.msra.mxu0 0
    %647 = vmatprep.subr.bf16.mxu0 0
    %648 = vmatpush1.bf16.msra.mxu0 0
    %649 = vmatprep.subr.bf16.mxu0 0
    %650 = vmatpush1.bf16.msra.mxu0 0
    %651 = vmatprep.subr.bf16.mxu0 0
    %652 = vmatpush1.bf16.msra.mxu0 0
    %653 = vmatprep.mubr.bf16.mxu0 0
    %654 = vmatmul.mubr.bf16.gmra.mrb[0].mxu0 %v616
    %v655 = vpop.f32.mrb[0].mxu0
    %v656 = vadd.f32 %v151, %v655
    %v657 = vpop.f32.mrb[0].mxu0
    %v658 = vpop.f32.mrb[0].mxu0
    %v659 = vadd.f32 %v151, %v658
    %v660 = vpop.f32.mrb[0].mxu0
    %661 = vmatprep.mubr.bf16.mxu0 0
    %662 = vmatmul.mubr.bf16.gmra.mrb[0].mxu0 %v619
    %v663 = vpop.f32.mrb[0].mxu0
    %v664 = vadd.f32 %v151, %v663
    %v665 = vpop.f32.mrb[0].mxu0
    %v666 = vpop.f32.mrb[0].mxu0
    %v667 = vadd.f32 %v151, %v666
    %v668 = vpop.f32.mrb[0].mxu0
    %669 = vdwg.mxu0
    %v670 = vpack.c.bf16 %v659, %v656
    %v671 = vpack.c.bf16 %v667, %v664
    %vm672 = vcmask 261120
    %v674 = vsel %vm672, %v131, 0
    %676 = vmatprep.subr.bf16.mxu0 0
    %677 = vmatpush1.bf16.msra.mxu0 %v670
    %678 = vmatprep.subr.bf16.mxu0 0
    %679 = vmatpush1.bf16.msra.mxu0 %v671
    %680 = vmatprep.subr.bf16.mxu0 0
    %681 = vmatpush1.bf16.msra.mxu0 0
    %682 = vmatprep.subr.bf16.mxu0 0
    %683 = vmatpush1.bf16.msra.mxu0 0
    %684 = vmatprep.subr.bf16.mxu0 0
    %685 = vmatpush1.bf16.msra.mxu0 0
    %686 = vmatprep.subr.bf16.mxu0 0
    %687 = vmatpush1.bf16.msra.mxu0 0
    %688 = vmatprep.subr.bf16.mxu0 0
    %689 = vmatpush1.bf16.msra.mxu0 0
    %690 = vmatprep.subr.bf16.mxu0 0
    %691 = vmatpush1.bf16.msra.mxu0 0
    %692 = vmatprep.subr.bf16.mxu0 0
    %693 = vmatpush1.bf16.msra.mxu0 0
    %694 = vmatprep.subr.bf16.mxu0 0
    %695 = vmatpush1.bf16.msra.mxu0 0
    %696 = vmatprep.subr.bf16.mxu0 0
    %697 = vmatpush1.bf16.msra.mxu0 0
    %698 = vmatprep.subr.bf16.mxu0 0
    %699 = vmatpush1.bf16.msra.mxu0 0
    %700 = vmatprep.subr.bf16.mxu0 0
    %701 = vmatpush1.bf16.msra.mxu0 0
    %702 = vmatprep.subr.bf16.mxu0 0
    %703 = vmatpush1.bf16.msra.mxu0 0
    %704 = vmatprep.subr.bf16.mxu0 0
    %705 = vmatpush1.bf16.msra.mxu0 0
    %706 = vmatprep.subr.bf16.mxu0 0
    %707 = vmatpush1.bf16.msra.mxu0 0
    %708 = vmatprep.mubr.bf16.mxu0 0
    %709 = vmatmul.mubr.bf16.gmra.mrb[0].mxu0 %v674
    %v710 = vpop.f32.mrb[0].mxu0
    %v711 = vadd.f32 0.0, %v710
    %v712 = vpop.f32.mrb[0].mxu0
    %v713 = vpop.f32.mrb[0].mxu0
    %v714 = vadd.f32 0.0, %v713
    %v715 = vpop.f32.mrb[0].mxu0
    %716 = vdwg.mxu0
    %v717 = vpack.c.bf16 %v714, %v711
    %vm718 = vcmask 89088
    %v721 = vsel %vm718, %v717, 0
    %v722 = vld [vmem:[%s12] sm:$0xf]
    %v723 = vld [vmem:[%s12 + $0x4] sm:$0xf]
    %v724 = vld [vmem:[%s12 + $0x8] sm:$0x7]
    %v728 = vunpack.c.l.b16 %v722
    %v729 = vunpack.c.l.b16 %v723
    %v730 = vunpack.c.l.b16 %v724
    %v731 = vpack.c.b16 %v729, %v728
    %v732 = vpack.c.b16 %v730, %v730
    %vm734 = vcmask 171008
    %v735 = vsel %vm734, %v721, 0
    %vm737 = vcmask 1041408
    %vm738 = vcmask 1042432
    %v739 = vsel %vm737, 4294967295, 65535
    %v740 = vsel %vm738, %v739, 0
    %v742 = vand.u32 %v732, %v740
    %744 = vmatprep.subr.bf16.mxu0 0
    %745 = vmatpush1.bf16.msra.mxu0 %v731
    %746 = vmatprep.subr.bf16.mxu0 0
    %747 = vmatpush1.bf16.msra.mxu0 %v742
    %748 = vmatprep.subr.bf16.mxu0 0
    %749 = vmatpush1.bf16.msra.mxu0 0
    %750 = vmatprep.subr.bf16.mxu0 0
    %751 = vmatpush1.bf16.msra.mxu0 0
    %752 = vmatprep.subr.bf16.mxu0 0
    %753 = vmatpush1.bf16.msra.mxu0 0
    %754 = vmatprep.subr.bf16.mxu0 0
    %755 = vmatpush1.bf16.msra.mxu0 0
    %756 = vmatprep.subr.bf16.mxu0 0
    %757 = vmatpush1.bf16.msra.mxu0 0
    %758 = vmatprep.subr.bf16.mxu0 0
    %759 = vmatpush1.bf16.msra.mxu0 0
    %760 = vmatprep.subr.bf16.mxu0 0
    %761 = vmatpush1.bf16.msra.mxu0 0
    %762 = vmatprep.subr.bf16.mxu0 0
    %763 = vmatpush1.bf16.msra.mxu0 0
    %764 = vmatprep.subr.bf16.mxu0 0
    %765 = vmatpush1.bf16.msra.mxu0 0
    %766 = vmatprep.subr.bf16.mxu0 0
    %767 = vmatpush1.bf16.msra.mxu0 0
    %768 = vmatprep.subr.bf16.mxu0 0
    %769 = vmatpush1.bf16.msra.mxu0 0
    %770 = vmatprep.subr.bf16.mxu0 0
    %771 = vmatpush1.bf16.msra.mxu0 0
    %772 = vmatprep.subr.bf16.mxu0 0
    %773 = vmatpush1.bf16.msra.mxu0 0
    %774 = vmatprep.subr.bf16.mxu0 0
    %775 = vmatpush1.bf16.msra.mxu0 0
    %776 = vmatprep.mubr.bf16.mxu0 0
    %777 = vmatmul.mubr.bf16.gmra.mrb[0].mxu0 %v735
    %v778 = vpop.f32.mrb[0].mxu0
    %v779 = vadd.f32 %v232, %v778
    %v780 = vpop.f32.mrb[0].mxu0
    %v781 = vpop.f32.mrb[0].mxu0
    %v782 = vadd.f32 %v233, %v781
    %v783 = vpop.f32.mrb[0].mxu0
    %784 = vdwg.mxu0
    %v785 = vxor.u32 %v779, 2147483648
    %v786 = vxor.u32 %v782, 2147483648
    %v787 = vmul.f32 %v785, 1.442695
    %v788 = vpow.pop %v787
    %v789 = vmul.f32 %v786, 1.442695
    %v790 = vpow.pop %v789
    %v791 = vadd.f32 %v788, 1.0
    %v792 = vadd.f32 %v790, 1.0
    %v793 = vrcp.pop %v791
    %v794 = vmul.f32 1.0, %v793
    %v795 = vrcp.pop %v792
    %v796 = vmul.f32 1.0, %v795
    %799 = vrot.lane.b32.xlu0 %v779, 98
    %v800 = vpop.permute.xlu0 %799
    %801 = vrot.lane.b32.xlu0 %v782, 98
    %v802 = vpop.permute.xlu0 %801
    %v805 = vmul.f32 %v794, %v800
    %v806 = vmul.f32 %v796, %v802
    %809 = vrot.lane.b32.xlu0 %v805, 20
    %v810 = vpop.permute.xlu0 %809
    %811 = vrot.lane.b32.xlu0 %v806, 20
    %v812 = vpop.permute.xlu0 %811
    %v815 = vadd.f32 %v779, %v810
    %v816 = vadd.f32 %v782, %v812
    %v817 = vtanh.pop %v815
    %v818 = vtanh.pop %v816
    %v819 = vsub.f32 1.0, %v794
    %v820 = vsub.f32 1.0, %v796
    %823 = vrot.lane.b32.xlu0 %v817, 118
    %v824 = vpop.permute.xlu0 %823
    %825 = vrot.lane.b32.xlu0 %v818, 118
    %v826 = vpop.permute.xlu0 %825
    %v829 = vmul.f32 %v819, %v824
    %v830 = vmul.f32 %v820, %v826
    %v831 = vmul.f32 %v794, 0.0
    %v832 = vmul.f32 %v796, 0.0
    %v833 = vadd.f32 %v829, %v831
    %v834 = vadd.f32 %v830, %v832
    %837 = vrot.lane.b32.xlu0 %v833, 118
    %v838 = vpop.permute.xlu0 %837
    %839 = vrot.lane.b32.xlu0 %v834, 118
    %v840 = vpop.permute.xlu0 %839
    %843 = vst.msk [vmem:[#allocation2] sm:$0xff] %vm325, %v838
    %844 = vst.msk [vmem:[#allocation2 + $0x8] sm:$0xff] %vm325, %v840
    %v845 = vpack.c.bf16 %v834, %v833
    %847 = vrot.lane.b32.xlu0 %v845, 118
    %v848 = vpop.permute.xlu0 %847
    %850 = vmatprep.subr.bf16.mxu0 0
    %851 = vmatpush1.bf16.msra.mxu0 %v848
    %852 = vmatprep.subr.bf16.mxu0 0
    %853 = vmatpush1.bf16.msra.mxu0 0
    %854 = vmatprep.subr.bf16.mxu0 0
    %855 = vmatpush1.bf16.msra.mxu0 0
    %856 = vmatprep.subr.bf16.mxu0 0
    %857 = vmatpush1.bf16.msra.mxu0 0
    %858 = vmatprep.subr.bf16.mxu0 0
    %859 = vmatpush1.bf16.msra.mxu0 0
    %860 = vmatprep.subr.bf16.mxu0 0
    %861 = vmatpush1.bf16.msra.mxu0 0
    %862 = vmatprep.subr.bf16.mxu0 0
    %863 = vmatpush1.bf16.msra.mxu0 0
    %864 = vmatprep.subr.bf16.mxu0 0
    %865 = vmatpush1.bf16.msra.mxu0 0
    %866 = vmatprep.subr.bf16.mxu0 0
    %867 = vmatpush1.bf16.msra.mxu0 0
    %868 = vmatprep.subr.bf16.mxu0 0
    %869 = vmatpush1.bf16.msra.mxu0 0
    %870 = vmatprep.subr.bf16.mxu0 0
    %871 = vmatpush1.bf16.msra.mxu0 0
    %872 = vmatprep.subr.bf16.mxu0 0
    %873 = vmatpush1.bf16.msra.mxu0 0
    %874 = vmatprep.subr.bf16.mxu0 0
    %875 = vmatpush1.bf16.msra.mxu0 0
    %876 = vmatprep.subr.bf16.mxu0 0
    %877 = vmatpush1.bf16.msra.mxu0 0
    %878 = vmatprep.subr.bf16.mxu0 0
    %879 = vmatpush1.bf16.msra.mxu0 0
    %880 = vmatprep.subr.bf16.mxu0 0
    %881 = vmatpush1.bf16.msra.mxu0 0
    %882 = vmatprep.mubr.bf16.mxu0 0
    %883 = vmatmul.mubr.bf16.gmra.mrb[0].mxu0 %v236
    %v884 = vpop.f32.mrb[0].mxu0
    %v885 = vadd.f32 0.0, %v884
    %v886 = vpop.f32.mrb[0].mxu0
    %v887 = vpop.f32.mrb[0].mxu0
    %v888 = vadd.f32 0.0, %v887
    %v889 = vpop.f32.mrb[0].mxu0
    %890 = vmatprep.mubr.bf16.mxu0 0
    %891 = vmatmul.mubr.bf16.gmra.mrb[0].mxu0 %v239
    %v892 = vpop.f32.mrb[0].mxu0
    %v893 = vadd.f32 0.0, %v892
    %v894 = vpop.f32.mrb[0].mxu0
    %v895 = vpop.f32.mrb[0].mxu0
    %v896 = vadd.f32 0.0, %v895
    %v897 = vpop.f32.mrb[0].mxu0
    %898 = vmatprep.mubr.bf16.mxu0 0
    %899 = vmatmul.mubr.bf16.gmra.mrb[0].mxu0 %v242
    %v900 = vpop.f32.mrb[0].mxu0
    %v901 = vadd.f32 0.0, %v900
    %v902 = vpop.f32.mrb[0].mxu0
    %v903 = vpop.f32.mrb[0].mxu0
    %v904 = vadd.f32 0.0, %v903
    %v905 = vpop.f32.mrb[0].mxu0
    %906 = vmatprep.mubr.bf16.mxu0 0
    %907 = vmatmul.mubr.bf16.gmra.mrb[0].mxu0 %v245
    %v908 = vpop.f32.mrb[0].mxu0
    %v909 = vadd.f32 0.0, %v908
    %v910 = vpop.f32.mrb[0].mxu0
    %v911 = vpop.f32.mrb[0].mxu0
    %v912 = vadd.f32 0.0, %v911
    %v913 = vpop.f32.mrb[0].mxu0
    %914 = vdwg.mxu0
    %v915 = vpack.c.bf16 %v888, %v885
    %v916 = vpack.c.bf16 %v896, %v893
    %v917 = vpack.c.bf16 %v904, %v901
    %v918 = vpack.c.bf16 %v912, %v909
    %v919 = vld [vmem:[%s3] sm:$0xf]
    %v920 = vld [vmem:[%s3 + $0x4] sm:$0x1]
    %v921 = vld [vmem:[%s4] sm:$0xf]
    %v922 = vld [vmem:[%s4 + $0x4] sm:$0x1]
    %v925 = vunpack.c.l.b16 %v921
    %v926 = vunpack.c.l.b16 %v922
    %v927 = vpack.c.b16 %v926, %v925
    %v929 = vsel %vm325, %v917, 0
    %v932 = vsel %vm325, %v918, 0
    %v935 = vsel %vm175, %v927, 0
    %937 = vmatprep.subr.bf16.mxu0 0
    %938 = vmatpush1.bf16.msra.mxu0 %v935
    %939 = vmatprep.subr.bf16.mxu0 0
    %940 = vmatpush1.bf16.msra.mxu0 0
    %941 = vmatprep.subr.bf16.mxu0 0
    %942 = vmatpush1.bf16.msra.mxu0 0
    %943 = vmatprep.subr.bf16.mxu0 0
    %944 = vmatpush1.bf16.msra.mxu0 0
    %945 = vmatprep.subr.bf16.mxu0 0
    %946 = vmatpush1.bf16.msra.mxu0 0
    %947 = vmatprep.subr.bf16.mxu0 0
    %948 = vmatpush1.bf16.msra.mxu0 0
    %949 = vmatprep.subr.bf16.mxu0 0
    %950 = vmatpush1.bf16.msra.mxu0 0
    %951 = vmatprep.subr.bf16.mxu0 0
    %952 = vmatpush1.bf16.msra.mxu0 0
    %953 = vmatprep.subr.bf16.mxu0 0
    %954 = vmatpush1.bf16.msra.mxu0 0
    %955 = vmatprep.subr.bf16.mxu0 0
    %956 = vmatpush1.bf16.msra.mxu0 0
    %957 = vmatprep.subr.bf16.mxu0 0
    %958 = vmatpush1.bf16.msra.mxu0 0
    %959 = vmatprep.subr.bf16.mxu0 0
    %960 = vmatpush1.bf16.msra.mxu0 0
    %961 = vmatprep.subr.bf16.mxu0 0
    %962 = vmatpush1.bf16.msra.mxu0 0
    %963 = vmatprep.subr.bf16.mxu0 0
    %964 = vmatpush1.bf16.msra.mxu0 0
    %965 = vmatprep.subr.bf16.mxu0 0
    %966 = vmatpush1.bf16.msra.mxu0 0
    %967 = vmatprep.subr.bf16.mxu0 0
    %968 = vmatpush1.bf16.msra.mxu0 0
    %969 = vmatprep.mubr.bf16.mxu0 0
    %970 = vmatmul.mubr.bf16.gmra.mrb[0].mxu0 %v929
    %v971 = vpop.f32.mrb[0].mxu0
    %v972 = vadd.f32 0.0, %v971
    %v973 = vpop.f32.mrb[0].mxu0
    %v974 = vpop.f32.mrb[0].mxu0
    %v975 = vadd.f32 0.0, %v974
    %v976 = vpop.f32.mrb[0].mxu0
    %977 = vmatprep.mubr.bf16.mxu0 0
    %978 = vmatmul.mubr.bf16.gmra.mrb[0].mxu0 %v932
    %v979 = vpop.f32.mrb[0].mxu0
    %v980 = vadd.f32 0.0, %v979
    %v981 = vpop.f32.mrb[0].mxu0
    %v982 = vpop.f32.mrb[0].mxu0
    %v983 = vadd.f32 0.0, %v982
    %v984 = vpop.f32.mrb[0].mxu0
    %985 = vdwg.mxu0
    %v988 = vunpack.c.l.b16 %v919
    %v989 = vunpack.c.l.b16 %v920
    %v990 = vpack.c.b16 %v989, %v988
    %v992 = vsel %vm325, %v915, 0
    %v995 = vsel %vm325, %v916, 0
    %v998 = vsel %vm175, %v990, 0
    %1000 = vmatprep.subr.bf16.mxu0 0
    %1001 = vmatpush1.bf16.msra.mxu0 %v998
    %1002 = vmatprep.subr.bf16.mxu0 0
    %1003 = vmatpush1.bf16.msra.mxu0 0
    %1004 = vmatprep.subr.bf16.mxu0 0
    %1005 = vmatpush1.bf16.msra.mxu0 0
    %1006 = vmatprep.subr.bf16.mxu0 0
    %1007 = vmatpush1.bf16.msra.mxu0 0
    %1008 = vmatprep.subr.bf16.mxu0 0
    %1009 = vmatpush1.bf16.msra.mxu0 0
    %1010 = vmatprep.subr.bf16.mxu0 0
    %1011 = vmatpush1.bf16.msra.mxu0 0
    %1012 = vmatprep.subr.bf16.mxu0 0
    %1013 = vmatpush1.bf16.msra.mxu0 0
    %1014 = vmatprep.subr.bf16.mxu0 0
    %1015 = vmatpush1.bf16.msra.mxu0 0
    %1016 = vmatprep.subr.bf16.mxu0 0
    %1017 = vmatpush1.bf16.msra.mxu0 0
    %1018 = vmatprep.subr.bf16.mxu0 0
    %1019 = vmatpush1.bf16.msra.mxu0 0
    %1020 = vmatprep.subr.bf16.mxu0 0
    %1021 = vmatpush1.bf16.msra.mxu0 0
    %1022 = vmatprep.subr.bf16.mxu0 0
    %1023 = vmatpush1.bf16.msra.mxu0 0
    %1024 = vmatprep.subr.bf16.mxu0 0
    %1025 = vmatpush1.bf16.msra.mxu0 0
    %1026 = vmatprep.subr.bf16.mxu0 0
    %1027 = vmatpush1.bf16.msra.mxu0 0
    %1028 = vmatprep.subr.bf16.mxu0 0
    %1029 = vmatpush1.bf16.msra.mxu0 0
    %1030 = vmatprep.subr.bf16.mxu0 0
    %1031 = vmatpush1.bf16.msra.mxu0 0
    %1032 = vmatprep.mubr.bf16.mxu0 0
    %1033 = vmatmul.mubr.bf16.gmra.mrb[0].mxu0 %v992
    %v1034 = vpop.f32.mrb[0].mxu0
    %v1035 = vadd.f32 %v972, %v1034
    %v1036 = vpop.f32.mrb[0].mxu0
    %v1037 = vpop.f32.mrb[0].mxu0
    %v1038 = vadd.f32 %v975, %v1037
    %v1039 = vpop.f32.mrb[0].mxu0
    %1040 = vmatprep.mubr.bf16.mxu0 0
    %1041 = vmatmul.mubr.bf16.gmra.mrb[0].mxu0 %v995
    %v1042 = vpop.f32.mrb[0].mxu0
    %v1043 = vadd.f32 %v980, %v1042
    %v1044 = vpop.f32.mrb[0].mxu0
    %v1045 = vpop.f32.mrb[0].mxu0
    %v1046 = vadd.f32 %v983, %v1045
    %v1047 = vpop.f32.mrb[0].mxu0
    %1048 = vdwg.mxu0
    %v1049 = vadd.f32 %v1035, %v137
    %v1050 = vadd.f32 %v1038, %v137
    %v1051 = vadd.f32 %v1043, %v137
    %v1052 = vadd.f32 %v1046, %v137
    %v1053 = vmax.f32 %v1049, 0.0
    %v1054 = vmax.f32 %v1050, 0.0
    %v1055 = vmax.f32 %v1051, 0.0
    %v1056 = vmax.f32 %v1052, 0.0
    %v1057 = vpack.c.bf16 %v1054, %v1053
    %v1058 = vpack.c.bf16 %v1056, %v1055
    %v1059 = vld [vmem:[%s6] sm:$0xf]
    %v1060 = vld [vmem:[%s6 + $0x4] sm:$0xf]
    %v1061 = vld [vmem:[%s6 + $0x8] sm:$0xf]
    %v1062 = vld [vmem:[%s6 + $0xc] sm:$0xf]
    %v1063 = vld [vmem:[%s6 + $0x10] sm:$0xf]
    %v1064 = vld [vmem:[%s6 + $0x14] sm:$0xf]
    %v1065 = vld [vmem:[%s6 + $0x18] sm:$0xf]
    %v1066 = vld [vmem:[%s6 + $0x1c] sm:$0xf]
    %v1067 = vld [vmem:[%s6 + $0x20] sm:$0xf]
    %v1068 = vld [vmem:[%s6 + $0x24] sm:$0xf]
    %v1069 = vld [vmem:[%s6 + $0x28] sm:$0xf]
    %v1070 = vld [vmem:[%s6 + $0x2c] sm:$0xf]
    %v1083 = vunpack.c.l.b16 %v1059
    %v1084 = vunpack.c.l.b16 %v1060
    %v1085 = vunpack.c.l.b16 %v1061
    %v1086 = vunpack.c.l.b16 %v1062
    %v1087 = vunpack.c.l.b16 %v1063
    %v1088 = vunpack.c.l.b16 %v1064
    %v1089 = vunpack.c.l.b16 %v1065
    %v1090 = vunpack.c.l.b16 %v1066
    %v1091 = vunpack.c.l.b16 %v1067
    %v1092 = vunpack.c.l.b16 %v1068
    %v1093 = vunpack.c.l.b16 %v1069
    %v1094 = vunpack.c.l.b16 %v1070
    %v1095 = vpack.c.b16 %v1084, %v1083
    %v1096 = vpack.c.b16 %v1086, %v1085
    %v1097 = vpack.c.b16 %v1088, %v1087
    %v1098 = vpack.c.b16 %v1090, %v1089
    %v1099 = vpack.c.b16 %v1092, %v1091
    %v1100 = vpack.c.b16 %v1094, %v1093
    %v1108 = vsel %vm505, %v1057, 0
    %v1111 = vsel %vm505, %v1058, 0
    %1113 = vmatprep.subr.bf16.mxu0 0
    %1114 = vmatpush1.bf16.msra.mxu0 %v1095
    %1115 = vmatprep.subr.bf16.mxu0 0
    %1116 = vmatpush1.bf16.msra.mxu0 %v1096
    %1117 = vmatprep.subr.bf16.mxu0 0
    %1118 = vmatpush1.bf16.msra.mxu0 %v1097
    %1119 = vmatprep.subr.bf16.mxu0 0
    %1120 = vmatpush1.bf16.msra.mxu0 %v1098
    %1121 = vmatprep.subr.bf16.mxu0 0
    %1122 = vmatpush1.bf16.msra.mxu0 %v1099
    %1123 = vmatprep.subr.bf16.mxu0 0
    %1124 = vmatpush1.bf16.msra.mxu0 %v1100
    %1125 = vmatprep.subr.bf16.mxu0 0
    %1126 = vmatpush1.bf16.msra.mxu0 0
    %1127 = vmatprep.subr.bf16.mxu0 0
    %1128 = vmatpush1.bf16.msra.mxu0 0
    %1129 = vmatprep.subr.bf16.mxu0 0
    %1130 = vmatpush1.bf16.msra.mxu0 0
    %1131 = vmatprep.subr.bf16.mxu0 0
    %1132 = vmatpush1.bf16.msra.mxu0 0
    %1133 = vmatprep.subr.bf16.mxu0 0
    %1134 = vmatpush1.bf16.msra.mxu0 0
    %1135 = vmatprep.subr.bf16.mxu0 0
    %1136 = vmatpush1.bf16.msra.mxu0 0
    %1137 = vmatprep.subr.bf16.mxu0 0
    %1138 = vmatpush1.bf16.msra.mxu0 0
    %1139 = vmatprep.subr.bf16.mxu0 0
    %1140 = vmatpush1.bf16.msra.mxu0 0
    %1141 = vmatprep.subr.bf16.mxu0 0
    %1142 = vmatpush1.bf16.msra.mxu0 0
    %1143 = vmatprep.subr.bf16.mxu0 0
    %1144 = vmatpush1.bf16.msra.mxu0 0
    %1145 = vmatprep.mubr.bf16.mxu0 0
    %1146 = vmatmul.mubr.bf16.gmra.mrb[0].mxu0 %v1108
    %v1147 = vpop.f32.mrb[0].mxu0
    %v1148 = vadd.f32 %v144, %v1147
    %v1149 = vpop.f32.mrb[0].mxu0
    %v1150 = vpop.f32.mrb[0].mxu0
    %v1151 = vadd.f32 %v144, %v1150
    %v1152 = vpop.f32.mrb[0].mxu0
    %1153 = vmatprep.mubr.bf16.mxu0 0
    %1154 = vmatmul.mubr.bf16.gmra.mrb[0].mxu0 %v1111
    %v1155 = vpop.f32.mrb[0].mxu0
    %v1156 = vadd.f32 %v144, %v1155
    %v1157 = vpop.f32.mrb[0].mxu0
    %v1158 = vpop.f32.mrb[0].mxu0
    %v1159 = vadd.f32 %v144, %v1158
    %v1160 = vpop.f32.mrb[0].mxu0
    %1161 = vdwg.mxu0
    %v1162 = vmax.f32 %v1148, 0.0
    %v1163 = vmax.f32 %v1151, 0.0
    %v1164 = vmax.f32 %v1156, 0.0
    %v1165 = vmax.f32 %v1159, 0.0
    %v1166 = vpack.c.bf16 %v1163, %v1162
    %v1167 = vpack.c.bf16 %v1165, %v1164
    %v1168 = vld [vmem:[%s8] sm:$0xf]
    %v1169 = vld [vmem:[%s8 + $0x4] sm:$0xf]
    %v1170 = vld [vmem:[%s8 + $0x8] sm:$0xf]
    %v1171 = vld [vmem:[%s8 + $0xc] sm:$0xf]
    %v1172 = vld [vmem:[%s8 + $0x10] sm:$0xf]
    %v1173 = vld [vmem:[%s8 + $0x14] sm:$0xf]
    %v1174 = vld [vmem:[%s8 + $0x18] sm:$0xf]
    %v1175 = vld [vmem:[%s8 + $0x1c] sm:$0xf]
    %v1176 = vld [vmem:[%s8 + $0x20] sm:$0xf]
    %v1177 = vld [vmem:[%s8 + $0x24] sm:$0xf]
    %v1178 = vld [vmem:[%s8 + $0x28] sm:$0xf]
    %v1179 = vld [vmem:[%s8 + $0x2c] sm:$0xf]
    %v1192 = vunpack.c.l.b16 %v1168
    %v1193 = vunpack.c.l.b16 %v1169
    %v1194 = vunpack.c.l.b16 %v1170
    %v1195 = vunpack.c.l.b16 %v1171
    %v1196 = vunpack.c.l.b16 %v1172
    %v1197 = vunpack.c.l.b16 %v1173
    %v1198 = vunpack.c.l.b16 %v1174
    %v1199 = vunpack.c.l.b16 %v1175
    %v1200 = vunpack.c.l.b16 %v1176
    %v1201 = vunpack.c.l.b16 %v1177
    %v1202 = vunpack.c.l.b16 %v1178
    %v1203 = vunpack.c.l.b16 %v1179
    %v1204 = vpack.c.b16 %v1193, %v1192
    %v1205 = vpack.c.b16 %v1195, %v1194
    %v1206 = vpack.c.b16 %v1197, %v1196
    %v1207 = vpack.c.b16 %v1199, %v1198
    %v1208 = vpack.c.b16 %v1201, %v1200
    %v1209 = vpack.c.b16 %v1203, %v1202
    %v1217 = vsel %vm505, %v1166, 0
    %v1220 = vsel %vm505, %v1167, 0
    %1222 = vmatprep.subr.bf16.mxu0 0
    %1223 = vmatpush1.bf16.msra.mxu0 %v1204
    %1224 = vmatprep.subr.bf16.mxu0 0
    %1225 = vmatpush1.bf16.msra.mxu0 %v1205
    %1226 = vmatprep.subr.bf16.mxu0 0
    %1227 = vmatpush1.bf16.msra.mxu0 %v1206
    %1228 = vmatprep.subr.bf16.mxu0 0
    %1229 = vmatpush1.bf16.msra.mxu0 %v1207
    %1230 = vmatprep.subr.bf16.mxu0 0
    %1231 = vmatpush1.bf16.msra.mxu0 %v1208
    %1232 = vmatprep.subr.bf16.mxu0 0
    %1233 = vmatpush1.bf16.msra.mxu0 %v1209
    %1234 = vmatprep.subr.bf16.mxu0 0
    %1235 = vmatpush1.bf16.msra.mxu0 0
    %1236 = vmatprep.subr.bf16.mxu0 0
    %1237 = vmatpush1.bf16.msra.mxu0 0
    %1238 = vmatprep.subr.bf16.mxu0 0
    %1239 = vmatpush1.bf16.msra.mxu0 0
    %1240 = vmatprep.subr.bf16.mxu0 0
    %1241 = vmatpush1.bf16.msra.mxu0 0
    %1242 = vmatprep.subr.bf16.mxu0 0
    %1243 = vmatpush1.bf16.msra.mxu0 0
    %1244 = vmatprep.subr.bf16.mxu0 0
    %1245 = vmatpush1.bf16.msra.mxu0 0
    %1246 = vmatprep.subr.bf16.mxu0 0
    %1247 = vmatpush1.bf16.msra.mxu0 0
    %1248 = vmatprep.subr.bf16.mxu0 0
    %1249 = vmatpush1.bf16.msra.mxu0 0
    %1250 = vmatprep.subr.bf16.mxu0 0
    %1251 = vmatpush1.bf16.msra.mxu0 0
    %1252 = vmatprep.subr.bf16.mxu0 0
    %1253 = vmatpush1.bf16.msra.mxu0 0
    %1254 = vmatprep.mubr.bf16.mxu0 0
    %1255 = vmatmul.mubr.bf16.gmra.mrb[0].mxu0 %v1217
    %v1256 = vpop.f32.mrb[0].mxu0
    %v1257 = vadd.f32 %v151, %v1256
    %v1258 = vpop.f32.mrb[0].mxu0
    %v1259 = vpop.f32.mrb[0].mxu0
    %v1260 = vadd.f32 %v151, %v1259
    %v1261 = vpop.f32.mrb[0].mxu0
    %1262 = vmatprep.mubr.bf16.mxu0 0
    %1263 = vmatmul.mubr.bf16.gmra.mrb[0].mxu0 %v1220
    %v1264 = vpop.f32.mrb[0].mxu0
    %v1265 = vadd.f32 %v151, %v1264
    %v1266 = vpop.f32.mrb[0].mxu0
    %v1267 = vpop.f32.mrb[0].mxu0
    %v1268 = vadd.f32 %v151, %v1267
    %v1269 = vpop.f32.mrb[0].mxu0
    %1270 = vdwg.mxu0
    %v1271 = vpack.c.bf16 %v1260, %v1257
    %v1272 = vpack.c.bf16 %v1268, %v1265
    %1273 = vmatprep.subr.bf16.mxu0 0
    %1274 = vmatpush1.bf16.msra.mxu0 %v1271
    %1275 = vmatprep.subr.bf16.mxu0 0
    %1276 = vmatpush1.bf16.msra.mxu0 %v1272
    %1277 = vmatprep.subr.bf16.mxu0 0
    %1278 = vmatpush1.bf16.msra.mxu0 0
    %1279 = vmatprep.subr.bf16.mxu0 0
    %1280 = vmatpush1.bf16.msra.mxu0 0
    %1281 = vmatprep.subr.bf16.mxu0 0
    %1282 = vmatpush1.bf16.msra.mxu0 0
    %1283 = vmatprep.subr.bf16.mxu0 0
    %1284 = vmatpush1.bf16.msra.mxu0 0
    %1285 = vmatprep.subr.bf16.mxu0 0
    %1286 = vmatpush1.bf16.msra.mxu0 0
    %1287 = vmatprep.subr.bf16.mxu0 0
    %1288 = vmatpush1.bf16.msra.mxu0 0
    %1289 = vmatprep.subr.bf16.mxu0 0
    %1290 = vmatpush1.bf16.msra.mxu0 0
    %1291 = vmatprep.subr.bf16.mxu0 0
    %1292 = vmatpush1.bf16.msra.mxu0 0
    %1293 = vmatprep.subr.bf16.mxu0 0
    %1294 = vmatpush1.bf16.msra.mxu0 0
    %1295 = vmatprep.subr.bf16.mxu0 0
    %1296 = vmatpush1.bf16.msra.mxu0 0
    %1297 = vmatprep.subr.bf16.mxu0 0
    %1298 = vmatpush1.bf16.msra.mxu0 0
    %1299 = vmatprep.subr.bf16.mxu0 0
    %1300 = vmatpush1.bf16.msra.mxu0 0
    %1301 = vmatprep.subr.bf16.mxu0 0
    %1302 = vmatpush1.bf16.msra.mxu0 0
    %1303 = vmatprep.subr.bf16.mxu0 0
    %1304 = vmatpush1.bf16.msra.mxu0 0
    %1305 = vmatprep.mubr.bf16.mxu0 0
    %1306 = vmatmul.mubr.bf16.gmra.mrb[0].mxu0 %v674
    %v1307 = vpop.f32.mrb[0].mxu0
    %v1308 = vadd.f32 0.0, %v1307
    %v1309 = vpop.f32.mrb[0].mxu0
    %v1310 = vpop.f32.mrb[0].mxu0
    %v1311 = vadd.f32 0.0, %v1310
    %v1312 = vpop.f32.mrb[0].mxu0
    %1313 = vdwg.mxu0
    %v1314 = vpack.c.bf16 %v1311, %v1308
    %1315 = vrot.lane.b32.xlu0 %v845, 1
    %v1316 = vpop.permute.xlu0 %1315
    %v1319 = vsel %vm718, %v1314, %v1316
    %v1320 = vld [vmem:[%s12] sm:$0xf]
    %v1321 = vld [vmem:[%s12 + $0x4] sm:$0xf]
    %v1322 = vld [vmem:[%s12 + $0x8] sm:$0x7]
    %v1326 = vunpack.c.l.b16 %v1320
    %v1327 = vunpack.c.l.b16 %v1321
    %v1328 = vunpack.c.l.b16 %v1322
    %v1329 = vpack.c.b16 %v1327, %v1326
    %v1330 = vpack.c.b16 %v1328, %v1328
    %v1332 = vsel %vm734, %v1319, 0
    %v1335 = vand.u32 %v1330, %v740
    %1337 = vmatprep.subr.bf16.mxu0 0
    %1338 = vmatpush1.bf16.msra.mxu0 %v1329
    %1339 = vmatprep.subr.bf16.mxu0 0
    %1340 = vmatpush1.bf16.msra.mxu0 %v1335
    %1341 = vmatprep.subr.bf16.mxu0 0
    %1342 = vmatpush1.bf16.msra.mxu0 0
    %1343 = vmatprep.subr.bf16.mxu0 0
    %1344 = vmatpush1.bf16.msra.mxu0 0
    %1345 = vmatprep.subr.bf16.mxu0 0
    %1346 = vmatpush1.bf16.msra.mxu0 0
    %1347 = vmatprep.subr.bf16.mxu0 0
    %1348 = vmatpush1.bf16.msra.mxu0 0
    %1349 = vmatprep.subr.bf16.mxu0 0
    %1350 = vmatpush1.bf16.msra.mxu0 0
    %1351 = vmatprep.subr.bf16.mxu0 0
    %1352 = vmatpush1.bf16.msra.mxu0 0
    %1353 = vmatprep.subr.bf16.mxu0 0
    %1354 = vmatpush1.bf16.msra.mxu0 0
    %1355 = vmatprep.subr.bf16.mxu0 0
    %1356 = vmatpush1.bf16.msra.mxu0 0
    %1357 = vmatprep.subr.bf16.mxu0 0
    %1358 = vmatpush1.bf16.msra.mxu0 0
    %1359 = vmatprep.subr.bf16.mxu0 0
    %1360 = vmatpush1.bf16.msra.mxu0 0
    %1361 = vmatprep.subr.bf16.mxu0 0
    %1362 = vmatpush1.bf16.msra.mxu0 0
    %1363 = vmatprep.subr.bf16.mxu0 0
    %1364 = vmatpush1.bf16.msra.mxu0 0
    %1365 = vmatprep.subr.bf16.mxu0 0
    %1366 = vmatpush1.bf16.msra.mxu0 0
    %1367 = vmatprep.subr.bf16.mxu0 0
    %1368 = vmatpush1.bf16.msra.mxu0 0
    %1369 = vmatprep.mubr.bf16.mxu0 0
    %1370 = vmatmul.mubr.bf16.gmra.mrb[0].mxu0 %v1332
    %v1371 = vpop.f32.mrb[0].mxu0
    %v1372 = vadd.f32 %v232, %v1371
    %v1373 = vpop.f32.mrb[0].mxu0
    %v1374 = vpop.f32.mrb[0].mxu0
    %v1375 = vadd.f32 %v233, %v1374
    %v1376 = vpop.f32.mrb[0].mxu0
    %1377 = vdwg.mxu0
    %v1378 = vxor.u32 %v1372, 2147483648
    %v1379 = vxor.u32 %v1375, 2147483648
    %v1380 = vmul.f32 %v1378, 1.442695
    %v1381 = vpow.pop %v1380
    %v1382 = vmul.f32 %v1379, 1.442695
    %v1383 = vpow.pop %v1382
    %v1384 = vadd.f32 %v1381, 1.0
    %v1385 = vadd.f32 %v1383, 1.0
    %v1386 = vrcp.pop %v1384
    %v1387 = vmul.f32 1.0, %v1386
    %v1388 = vrcp.pop %v1385
    %v1389 = vmul.f32 1.0, %v1388
    %1392 = vrot.lane.b32.xlu0 %v1372, 98
    %v1393 = vpop.permute.xlu0 %1392
    %1394 = vrot.lane.b32.xlu0 %v1375, 98
    %v1395 = vpop.permute.xlu0 %1394
    %v1398 = vmul.f32 %v1387, %v1393
    %v1399 = vmul.f32 %v1389, %v1395
    %1402 = vrot.lane.b32.xlu0 %v1398, 20
    %v1403 = vpop.permute.xlu0 %1402
    %1404 = vrot.lane.b32.xlu0 %v1399, 20
    %v1405 = vpop.permute.xlu0 %1404
    %v1408 = vadd.f32 %v1372, %v1403
    %v1409 = vadd.f32 %v1375, %v1405
    %v1410 = vtanh.pop %v1408
    %v1411 = vtanh.pop %v1409
    %v1412 = vsub.f32 1.0, %v1387
    %v1413 = vsub.f32 1.0, %v1389
    %1416 = vrot.lane.b32.xlu0 %v1410, 118
    %v1417 = vpop.permute.xlu0 %1416
    %1418 = vrot.lane.b32.xlu0 %v1411, 118
    %v1419 = vpop.permute.xlu0 %1418
    %v1422 = vmul.f32 %v1412, %v1417
    %v1423 = vmul.f32 %v1413, %v1419
    %v1424 = vmul.f32 %v1387, %v833
    %v1425 = vmul.f32 %v1389, %v834
    %v1426 = vadd.f32 %v1422, %v1424
    %v1427 = vadd.f32 %v1423, %v1425
    %1430 = vrot.lane.b32.xlu0 %v1426, 118
    %v1431 = vpop.permute.xlu0 %1430
    %1432 = vrot.lane.b32.xlu0 %v1427, 118
    %v1433 = vpop.permute.xlu0 %1432
    %1436 = vst.msk [vmem:[#allocation2 + $0x10] sm:$0xff] %vm325, %v1431
    %1437 = vst.msk [vmem:[#allocation2 + $0x18] sm:$0xff] %vm325, %v1433
    %v1438 = vpack.c.bf16 %v1427, %v1426
    %1440 = vrot.lane.b32.xlu0 %v1438, 118
    %v1441 = vpop.permute.xlu0 %1440
    %1443 = vmatprep.subr.bf16.mxu0 0
    %1444 = vmatpush1.bf16.msra.mxu0 %v1441
    %1445 = vmatprep.subr.bf16.mxu0 0
    %1446 = vmatpush1.bf16.msra.mxu0 0
    %1447 = vmatprep.subr.bf16.mxu0 0
    %1448 = vmatpush1.bf16.msra.mxu0 0
    %1449 = vmatprep.subr.bf16.mxu0 0
    %1450 = vmatpush1.bf16.msra.mxu0 0
    %1451 = vmatprep.subr.bf16.mxu0 0
    %1452 = vmatpush1.bf16.msra.mxu0 0
    %1453 = vmatprep.subr.bf16.mxu0 0
    %1454 = vmatpush1.bf16.msra.mxu0 0
    %1455 = vmatprep.subr.bf16.mxu0 0
    %1456 = vmatpush1.bf16.msra.mxu0 0
    %1457 = vmatprep.subr.bf16.mxu0 0
    %1458 = vmatpush1.bf16.msra.mxu0 0
    %1459 = vmatprep.subr.bf16.mxu0 0
    %1460 = vmatpush1.bf16.msra.mxu0 0
    %1461 = vmatprep.subr.bf16.mxu0 0
    %1462 = vmatpush1.bf16.msra.mxu0 0
    %1463 = vmatprep.subr.bf16.mxu0 0
    %1464 = vmatpush1.bf16.msra.mxu0 0
    %1465 = vmatprep.subr.bf16.mxu0 0
    %1466 = vmatpush1.bf16.msra.mxu0 0
    %1467 = vmatprep.subr.bf16.mxu0 0
    %1468 = vmatpush1.bf16.msra.mxu0 0
    %1469 = vmatprep.subr.bf16.mxu0 0
    %1470 = vmatpush1.bf16.msra.mxu0 0
    %1471 = vmatprep.subr.bf16.mxu0 0
    %1472 = vmatpush1.bf16.msra.mxu0 0
    %1473 = vmatprep.subr.bf16.mxu0 0
    %1474 = vmatpush1.bf16.msra.mxu0 0
    %1475 = vmatprep.mubr.bf16.mxu0 0
    %1476 = vmatmul.mubr.bf16.gmra.mrb[0].mxu0 %v236
    %v1477 = vpop.f32.mrb[0].mxu0
    %v1478 = vadd.f32 0.0, %v1477
    %v1479 = vpop.f32.mrb[0].mxu0
    %v1480 = vpop.f32.mrb[0].mxu0
    %v1481 = vadd.f32 0.0, %v1480
    %v1482 = vpop.f32.mrb[0].mxu0
    %1483 = vmatprep.mubr.bf16.mxu0 0
    %1484 = vmatmul.mubr.bf16.gmra.mrb[0].mxu0 %v239
    %v1485 = vpop.f32.mrb[0].mxu0
    %v1486 = vadd.f32 0.0, %v1485
    %v1487 = vpop.f32.mrb[0].mxu0
    %v1488 = vpop.f32.mrb[0].mxu0
    %v1489 = vadd.f32 0.0, %v1488
    %v1490 = vpop.f32.mrb[0].mxu0
    %1491 = vmatprep.mubr.bf16.mxu0 0
    %1492 = vmatmul.mubr.bf16.gmra.mrb[0].mxu0 %v242
    %v1493 = vpop.f32.mrb[0].mxu0
    %v1494 = vadd.f32 0.0, %v1493
    %v1495 = vpop.f32.mrb[0].mxu0
    %v1496 = vpop.f32.mrb[0].mxu0
    %v1497 = vadd.f32 0.0, %v1496
    %v1498 = vpop.f32.mrb[0].mxu0
    %1499 = vmatprep.mubr.bf16.mxu0 0
    %1500 = vmatmul.mubr.bf16.gmra.mrb[0].mxu0 %v245
    %v1501 = vpop.f32.mrb[0].mxu0
    %v1502 = vadd.f32 0.0, %v1501
    %v1503 = vpop.f32.mrb[0].mxu0
    %v1504 = vpop.f32.mrb[0].mxu0
    %v1505 = vadd.f32 0.0, %v1504
    %v1506 = vpop.f32.mrb[0].mxu0
    %1507 = vdwg.mxu0
    %v1508 = vpack.c.bf16 %v1481, %v1478
    %v1509 = vpack.c.bf16 %v1489, %v1486
    %v1510 = vpack.c.bf16 %v1497, %v1494
    %v1511 = vpack.c.bf16 %v1505, %v1502
    %v1512 = vld [vmem:[%s3] sm:$0xf]
    %v1513 = vld [vmem:[%s3 + $0x4] sm:$0x1]
    %v1514 = vld [vmem:[%s4] sm:$0xf]
    %v1515 = vld [vmem:[%s4 + $0x4] sm:$0x1]
    %v1518 = vunpack.c.l.b16 %v1514
    %v1519 = vunpack.c.l.b16 %v1515
    %v1520 = vpack.c.b16 %v1519, %v1518
    %v1522 = vsel %vm325, %v1510, 0
    %v1525 = vsel %vm325, %v1511, 0
    %v1528 = vsel %vm175, %v1520, 0
    %1530 = vmatprep.subr.bf16.mxu0 0
    %1531 = vmatpush1.bf16.msra.mxu0 %v1528
    %1532 = vmatprep.subr.bf16.mxu0 0
    %1533 = vmatpush1.bf16.msra.mxu0 0
    %1534 = vmatprep.subr.bf16.mxu0 0
    %1535 = vmatpush1.bf16.msra.mxu0 0
    %1536 = vmatprep.subr.bf16.mxu0 0
    %1537 = vmatpush1.bf16.msra.mxu0 0
    %1538 = vmatprep.subr.bf16.mxu0 0
    %1539 = vmatpush1.bf16.msra.mxu0 0
    %1540 = vmatprep.subr.bf16.mxu0 0
    %1541 = vmatpush1.bf16.msra.mxu0 0
    %1542 = vmatprep.subr.bf16.mxu0 0
    %1543 = vmatpush1.bf16.msra.mxu0 0
    %1544 = vmatprep.subr.bf16.mxu0 0
    %1545 = vmatpush1.bf16.msra.mxu0 0
    %1546 = vmatprep.subr.bf16.mxu0 0
    %1547 = vmatpush1.bf16.msra.mxu0 0
    %1548 = vmatprep.subr.bf16.mxu0 0
    %1549 = vmatpush1.bf16.msra.mxu0 0
    %1550 = vmatprep.subr.bf16.mxu0 0
    %1551 = vmatpush1.bf16.msra.mxu0 0
    %1552 = vmatprep.subr.bf16.mxu0 0
    %1553 = vmatpush1.bf16.msra.mxu0 0
    %1554 = vmatprep.subr.bf16.mxu0 0
    %1555 = vmatpush1.bf16.msra.mxu0 0
    %1556 = vmatprep.subr.bf16.mxu0 0
    %1557 = vmatpush1.bf16.msra.mxu0 0
    %1558 = vmatprep.subr.bf16.mxu0 0
    %1559 = vmatpush1.bf16.msra.mxu0 0
    %1560 = vmatprep.subr.bf16.mxu0 0
    %1561 = vmatpush1.bf16.msra.mxu0 0
    %1562 = vmatprep.mubr.bf16.mxu0 0
    %1563 = vmatmul.mubr.bf16.gmra.mrb[0].mxu0 %v1522
    %v1564 = vpop.f32.mrb[0].mxu0
    %v1565 = vadd.f32 0.0, %v1564
    %v1566 = vpop.f32.mrb[0].mxu0
    %v1567 = vpop.f32.mrb[0].mxu0
    %v1568 = vadd.f32 0.0, %v1567
    %v1569 = vpop.f32.mrb[0].mxu0
    %1570 = vmatprep.mubr.bf16.mxu0 0
    %1571 = vmatmul.mubr.bf16.gmra.mrb[0].mxu0 %v1525
    %v1572 = vpop.f32.mrb[0].mxu0
    %v1573 = vadd.f32 0.0, %v1572
    %v1574 = vpop.f32.mrb[0].mxu0
    %v1575 = vpop.f32.mrb[0].mxu0
    %v1576 = vadd.f32 0.0, %v1575
    %v1577 = vpop.f32.mrb[0].mxu0
    %1578 = vdwg.mxu0
    %v1581 = vunpack.c.l.b16 %v1512
    %v1582 = vunpack.c.l.b16 %v1513
    %v1583 = vpack.c.b16 %v1582, %v1581
    %v1585 = vsel %vm325, %v1508, 0
    %v1588 = vsel %vm325, %v1509, 0
    %v1591 = vsel %vm175, %v1583, 0
    %1593 = vmatprep.subr.bf16.mxu0 0
    %1594 = vmatpush1.bf16.msra.mxu0 %v1591
    %1595 = vmatprep.subr.bf16.mxu0 0
    %1596 = vmatpush1.bf16.msra.mxu0 0
    %1597 = vmatprep.subr.bf16.mxu0 0
    %1598 = vmatpush1.bf16.msra.mxu0 0
    %1599 = vmatprep.subr.bf16.mxu0 0
    %1600 = vmatpush1.bf16.msra.mxu0 0
    %1601 = vmatprep.subr.bf16.mxu0 0
    %1602 = vmatpush1.bf16.msra.mxu0 0
    %1603 = vmatprep.subr.bf16.mxu0 0
    %1604 = vmatpush1.bf16.msra.mxu0 0
    %1605 = vmatprep.subr.bf16.mxu0 0
    %1606 = vmatpush1.bf16.msra.mxu0 0
    %1607 = vmatprep.subr.bf16.mxu0 0
    %1608 = vmatpush1.bf16.msra.mxu0 0
    %1609 = vmatprep.subr.bf16.mxu0 0
    %1610 = vmatpush1.bf16.msra.mxu0 0
    %1611 = vmatprep.subr.bf16.mxu0 0
    %1612 = vmatpush1.bf16.msra.mxu0 0
    %1613 = vmatprep.subr.bf16.mxu0 0
    %1614 = vmatpush1.bf16.msra.mxu0 0
    %1615 = vmatprep.subr.bf16.mxu0 0
    %1616 = vmatpush1.bf16.msra.mxu0 0
    %1617 = vmatprep.subr.bf16.mxu0 0
    %1618 = vmatpush1.bf16.msra.mxu0 0
    %1619 = vmatprep.subr.bf16.mxu0 0
    %1620 = vmatpush1.bf16.msra.mxu0 0
    %1621 = vmatprep.subr.bf16.mxu0 0
    %1622 = vmatpush1.bf16.msra.mxu0 0
    %1623 = vmatprep.subr.bf16.mxu0 0
    %1624 = vmatpush1.bf16.msra.mxu0 0
    %1625 = vmatprep.mubr.bf16.mxu0 0
    %1626 = vmatmul.mubr.bf16.gmra.mrb[0].mxu0 %v1585
    %v1627 = vpop.f32.mrb[0].mxu0
    %v1628 = vadd.f32 %v1565, %v1627
    %v1629 = vpop.f32.mrb[0].mxu0
    %v1630 = vpop.f32.mrb[0].mxu0
    %v1631 = vadd.f32 %v1568, %v1630
    %v1632 = vpop.f32.mrb[0].mxu0
    %1633 = vmatprep.mubr.bf16.mxu0 0
    %1634 = vmatmul.mubr.bf16.gmra.mrb[0].mxu0 %v1588
    %v1635 = vpop.f32.mrb[0].mxu0
    %v1636 = vadd.f32 %v1573, %v1635
    %v1637 = vpop.f32.mrb[0].mxu0
    %v1638 = vpop.f32.mrb[0].mxu0
    %v1639 = vadd.f32 %v1576, %v1638
    %v1640 = vpop.f32.mrb[0].mxu0
    %1641 = vdwg.mxu0
    %v1642 = vadd.f32 %v1628, %v137
    %v1643 = vadd.f32 %v1631, %v137
    %v1644 = vadd.f32 %v1636, %v137
    %v1645 = vadd.f32 %v1639, %v137
    %v1646 = vmax.f32 %v1642, 0.0
    %v1647 = vmax.f32 %v1643, 0.0
    %v1648 = vmax.f32 %v1644, 0.0
    %v1649 = vmax.f32 %v1645, 0.0
    %v1650 = vpack.c.bf16 %v1647, %v1646
    %v1651 = vpack.c.bf16 %v1649, %v1648
    %v1652 = vld [vmem:[%s6] sm:$0xf]
    %v1653 = vld [vmem:[%s6 + $0x4] sm:$0xf]
    %v1654 = vld [vmem:[%s6 + $0x8] sm:$0xf]
    %v1655 = vld [vmem:[%s6 + $0xc] sm:$0xf]
    %v1656 = vld [vmem:[%s6 + $0x10] sm:$0xf]
    %v1657 = vld [vmem:[%s6 + $0x14] sm:$0xf]
    %v1658 = vld [vmem:[%s6 + $0x18] sm:$0xf]
    %v1659 = vld [vmem:[%s6 + $0x1c] sm:$0xf]
    %v1660 = vld [vmem:[%s6 + $0x20] sm:$0xf]
    %v1661 = vld [vmem:[%s6 + $0x24] sm:$0xf]
    %v1662 = vld [vmem:[%s6 + $0x28] sm:$0xf]
    %v1663 = vld [vmem:[%s6 + $0x2c] sm:$0xf]
    %v1676 = vunpack.c.l.b16 %v1652
    %v1677 = vunpack.c.l.b16 %v1653
    %v1678 = vunpack.c.l.b16 %v1654
    %v1679 = vunpack.c.l.b16 %v1655
    %v1680 = vunpack.c.l.b16 %v1656
    %v1681 = vunpack.c.l.b16 %v1657
    %v1682 = vunpack.c.l.b16 %v1658
    %v1683 = vunpack.c.l.b16 %v1659
    %v1684 = vunpack.c.l.b16 %v1660
    %v1685 = vunpack.c.l.b16 %v1661
    %v1686 = vunpack.c.l.b16 %v1662
    %v1687 = vunpack.c.l.b16 %v1663
    %v1688 = vpack.c.b16 %v1677, %v1676
    %v1689 = vpack.c.b16 %v1679, %v1678
    %v1690 = vpack.c.b16 %v1681, %v1680
    %v1691 = vpack.c.b16 %v1683, %v1682
    %v1692 = vpack.c.b16 %v1685, %v1684
    %v1693 = vpack.c.b16 %v1687, %v1686
    %v1701 = vsel %vm505, %v1650, 0
    %v1704 = vsel %vm505, %v1651, 0
    %1706 = vmatprep.subr.bf16.mxu0 0
    %1707 = vmatpush1.bf16.msra.mxu0 %v1688
    %1708 = vmatprep.subr.bf16.mxu0 0
    %1709 = vmatpush1.bf16.msra.mxu0 %v1689
    %1710 = vmatprep.subr.bf16.mxu0 0
    %1711 = vmatpush1.bf16.msra.mxu0 %v1690
    %1712 = vmatprep.subr.bf16.mxu0 0
    %1713 = vmatpush1.bf16.msra.mxu0 %v1691
    %1714 = vmatprep.subr.bf16.mxu0 0
    %1715 = vmatpush1.bf16.msra.mxu0 %v1692
    %1716 = vmatprep.subr.bf16.mxu0 0
    %1717 = vmatpush1.bf16.msra.mxu0 %v1693
    %1718 = vmatprep.subr.bf16.mxu0 0
    %1719 = vmatpush1.bf16.msra.mxu0 0
    %1720 = vmatprep.subr.bf16.mxu0 0
    %1721 = vmatpush1.bf16.msra.mxu0 0
    %1722 = vmatprep.subr.bf16.mxu0 0
    %1723 = vmatpush1.bf16.msra.mxu0 0
    %1724 = vmatprep.subr.bf16.mxu0 0
    %1725 = vmatpush1.bf16.msra.mxu0 0
    %1726 = vmatprep.subr.bf16.mxu0 0
    %1727 = vmatpush1.bf16.msra.mxu0 0
    %1728 = vmatprep.subr.bf16.mxu0 0
    %1729 = vmatpush1.bf16.msra.mxu0 0
    %1730 = vmatprep.subr.bf16.mxu0 0
    %1731 = vmatpush1.bf16.msra.mxu0 0
    %1732 = vmatprep.subr.bf16.mxu0 0
    %1733 = vmatpush1.bf16.msra.mxu0 0
    %1734 = vmatprep.subr.bf16.mxu0 0
    %1735 = vmatpush1.bf16.msra.mxu0 0
    %1736 = vmatprep.subr.bf16.mxu0 0
    %1737 = vmatpush1.bf16.msra.mxu0 0
    %1738 = vmatprep.mubr.bf16.mxu0 0
    %1739 = vmatmul.mubr.bf16.gmra.mrb[0].mxu0 %v1701
    %v1740 = vpop.f32.mrb[0].mxu0
    %v1741 = vadd.f32 %v144, %v1740
    %v1742 = vpop.f32.mrb[0].mxu0
    %v1743 = vpop.f32.mrb[0].mxu0
    %v1744 = vadd.f32 %v144, %v1743
    %v1745 = vpop.f32.mrb[0].mxu0
    %1746 = vmatprep.mubr.bf16.mxu0 0
    %1747 = vmatmul.mubr.bf16.gmra.mrb[0].mxu0 %v1704
    %v1748 = vpop.f32.mrb[0].mxu0
    %v1749 = vadd.f32 %v144, %v1748
    %v1750 = vpop.f32.mrb[0].mxu0
    %v1751 = vpop.f32.mrb[0].mxu0
    %v1752 = vadd.f32 %v144, %v1751
    %v1753 = vpop.f32.mrb[0].mxu0
    %1754 = vdwg.mxu0
    %v1755 = vmax.f32 %v1741, 0.0
    %v1756 = vmax.f32 %v1744, 0.0
    %v1757 = vmax.f32 %v1749, 0.0
    %v1758 = vmax.f32 %v1752, 0.0
    %v1759 = vpack.c.bf16 %v1756, %v1755
    %v1760 = vpack.c.bf16 %v1758, %v1757
    %v1761 = vld [vmem:[%s8] sm:$0xf]
    %v1762 = vld [vmem:[%s8 + $0x4] sm:$0xf]
    %v1763 = vld [vmem:[%s8 + $0x8] sm:$0xf]
    %v1764 = vld [vmem:[%s8 + $0xc] sm:$0xf]
    %v1765 = vld [vmem:[%s8 + $0x10] sm:$0xf]
    %v1766 = vld [vmem:[%s8 + $0x14] sm:$0xf]
    %v1767 = vld [vmem:[%s8 + $0x18] sm:$0xf]
    %v1768 = vld [vmem:[%s8 + $0x1c] sm:$0xf]
    %v1769 = vld [vmem:[%s8 + $0x20] sm:$0xf]
    %v1770 = vld [vmem:[%s8 + $0x24] sm:$0xf]
    %v1771 = vld [vmem:[%s8 + $0x28] sm:$0xf]
    %v1772 = vld [vmem:[%s8 + $0x2c] sm:$0xf]
    %v1785 = vunpack.c.l.b16 %v1761
    %v1786 = vunpack.c.l.b16 %v1762
    %v1787 = vunpack.c.l.b16 %v1763
    %v1788 = vunpack.c.l.b16 %v1764
    %v1789 = vunpack.c.l.b16 %v1765
    %v1790 = vunpack.c.l.b16 %v1766
    %v1791 = vunpack.c.l.b16 %v1767
    %v1792 = vunpack.c.l.b16 %v1768
    %v1793 = vunpack.c.l.b16 %v1769
    %v1794 = vunpack.c.l.b16 %v1770
    %v1795 = vunpack.c.l.b16 %v1771
    %v1796 = vunpack.c.l.b16 %v1772
    %v1797 = vpack.c.b16 %v1786, %v1785
    %v1798 = vpack.c.b16 %v1788, %v1787
    %v1799 = vpack.c.b16 %v1790, %v1789
    %v1800 = vpack.c.b16 %v1792, %v1791
    %v1801 = vpack.c.b16 %v1794, %v1793
    %v1802 = vpack.c.b16 %v1796, %v1795
    %v1810 = vsel %vm505, %v1759, 0
    %v1813 = vsel %vm505, %v1760, 0
    %1815 = vmatprep.subr.bf16.mxu0 0
    %1816 = vmatpush1.bf16.msra.mxu0 %v1797
    %1817 = vmatprep.subr.bf16.mxu0 0
    %1818 = vmatpush1.bf16.msra.mxu0 %v1798
    %1819 = vmatprep.subr.bf16.mxu0 0
    %1820 = vmatpush1.bf16.msra.mxu0 %v1799
    %1821 = vmatprep.subr.bf16.mxu0 0
    %1822 = vmatpush1.bf16.msra.mxu0 %v1800
    %1823 = vmatprep.subr.bf16.mxu0 0
    %1824 = vmatpush1.bf16.msra.mxu0 %v1801
    %1825 = vmatprep.subr.bf16.mxu0 0
    %1826 = vmatpush1.bf16.msra.mxu0 %v1802
    %1827 = vmatprep.subr.bf16.mxu0 0
    %1828 = vmatpush1.bf16.msra.mxu0 0
    %1829 = vmatprep.subr.bf16.mxu0 0
    %1830 = vmatpush1.bf16.msra.mxu0 0
    %1831 = vmatprep.subr.bf16.mxu0 0
    %1832 = vmatpush1.bf16.msra.mxu0 0
    %1833 = vmatprep.subr.bf16.mxu0 0
    %1834 = vmatpush1.bf16.msra.mxu0 0
    %1835 = vmatprep.subr.bf16.mxu0 0
    %1836 = vmatpush1.bf16.msra.mxu0 0
    %1837 = vmatprep.subr.bf16.mxu0 0
    %1838 = vmatpush1.bf16.msra.mxu0 0
    %1839 = vmatprep.subr.bf16.mxu0 0
    %1840 = vmatpush1.bf16.msra.mxu0 0
    %1841 = vmatprep.subr.bf16.mxu0 0
    %1842 = vmatpush1.bf16.msra.mxu0 0
    %1843 = vmatprep.subr.bf16.mxu0 0
    %1844 = vmatpush1.bf16.msra.mxu0 0
    %1845 = vmatprep.subr.bf16.mxu0 0
    %1846 = vmatpush1.bf16.msra.mxu0 0
    %1847 = vmatprep.mubr.bf16.mxu0 0
    %1848 = vmatmul.mubr.bf16.gmra.mrb[0].mxu0 %v1810
    %v1849 = vpop.f32.mrb[0].mxu0
    %v1850 = vadd.f32 %v151, %v1849
    %v1851 = vpop.f32.mrb[0].mxu0
    %v1852 = vpop.f32.mrb[0].mxu0
    %v1853 = vadd.f32 %v151, %v1852
    %v1854 = vpop.f32.mrb[0].mxu0
    %1855 = vmatprep.mubr.bf16.mxu0 0
    %1856 = vmatmul.mubr.bf16.gmra.mrb[0].mxu0 %v1813
    %v1857 = vpop.f32.mrb[0].mxu0
    %v1858 = vadd.f32 %v151, %v1857
    %v1859 = vpop.f32.mrb[0].mxu0
    %v1860 = vpop.f32.mrb[0].mxu0
    %v1861 = vadd.f32 %v151, %v1860
    %v1862 = vpop.f32.mrb[0].mxu0
    %1863 = vdwg.mxu0
    %v1864 = vpack.c.bf16 %v1853, %v1850
    %v1865 = vpack.c.bf16 %v1861, %v1858
    %1866 = vmatprep.subr.bf16.mxu0 0
    %1867 = vmatpush1.bf16.msra.mxu0 %v1864
    %1868 = vmatprep.subr.bf16.mxu0 0
    %1869 = vmatpush1.bf16.msra.mxu0 %v1865
    %1870 = vmatprep.subr.bf16.mxu0 0
    %1871 = vmatpush1.bf16.msra.mxu0 0
    %1872 = vmatprep.subr.bf16.mxu0 0
    %1873 = vmatpush1.bf16.msra.mxu0 0
    %1874 = vmatprep.subr.bf16.mxu0 0
    %1875 = vmatpush1.bf16.msra.mxu0 0
    %1876 = vmatprep.subr.bf16.mxu0 0
    %1877 = vmatpush1.bf16.msra.mxu0 0
    %1878 = vmatprep.subr.bf16.mxu0 0
    %1879 = vmatpush1.bf16.msra.mxu0 0
    %1880 = vmatprep.subr.bf16.mxu0 0
    %1881 = vmatpush1.bf16.msra.mxu0 0
    %1882 = vmatprep.subr.bf16.mxu0 0
    %1883 = vmatpush1.bf16.msra.mxu0 0
    %1884 = vmatprep.subr.bf16.mxu0 0
    %1885 = vmatpush1.bf16.msra.mxu0 0
    %1886 = vmatprep.subr.bf16.mxu0 0
    %1887 = vmatpush1.bf16.msra.mxu0 0
    %1888 = vmatprep.subr.bf16.mxu0 0
    %1889 = vmatpush1.bf16.msra.mxu0 0
    %1890 = vmatprep.subr.bf16.mxu0 0
    %1891 = vmatpush1.bf16.msra.mxu0 0
    %1892 = vmatprep.subr.bf16.mxu0 0
    %1893 = vmatpush1.bf16.msra.mxu0 0
    %1894 = vmatprep.subr.bf16.mxu0 0
    %1895 = vmatpush1.bf16.msra.mxu0 0
    %1896 = vmatprep.subr.bf16.mxu0 0
    %1897 = vmatpush1.bf16.msra.mxu0 0
    %1898 = vmatprep.mubr.bf16.mxu0 0
    %1899 = vmatmul.mubr.bf16.gmra.mrb[0].mxu0 %v674
    %v1900 = vpop.f32.mrb[0].mxu0
    %v1901 = vadd.f32 0.0, %v1900
    %v1902 = vpop.f32.mrb[0].mxu0
    %v1903 = vpop.f32.mrb[0].mxu0
    %v1904 = vadd.f32 0.0, %v1903
    %v1905 = vpop.f32.mrb[0].mxu0
    %1906 = vdwg.mxu0
    %v1907 = vpack.c.bf16 %v1904, %v1901
    %1908 = vrot.lane.b32.xlu0 %v1438, 1
    %v1909 = vpop.permute.xlu0 %1908
    %v1912 = vsel %vm718, %v1907, %v1909
    %v1913 = vld [vmem:[%s12] sm:$0xf]
    %v1914 = vld [vmem:[%s12 + $0x4] sm:$0xf]
    %v1915 = vld [vmem:[%s12 + $0x8] sm:$0x7]
    %v1919 = vunpack.c.l.b16 %v1913
    %v1920 = vunpack.c.l.b16 %v1914
    %v1921 = vunpack.c.l.b16 %v1915
    %v1922 = vpack.c.b16 %v1920, %v1919
    %v1923 = vpack.c.b16 %v1921, %v1921
    %v1925 = vsel %vm734, %v1912, 0
    %v1928 = vand.u32 %v1923, %v740
    %1930 = vmatprep.subr.bf16.mxu0 0
    %1931 = vmatpush1.bf16.msra.mxu0 %v1922
    %1932 = vmatprep.subr.bf16.mxu0 0
    %1933 = vmatpush1.bf16.msra.mxu0 %v1928
    %1934 = vmatprep.subr.bf16.mxu0 0
    %1935 = vmatpush1.bf16.msra.mxu0 0
    %1936 = vmatprep.subr.bf16.mxu0 0
    %1937 = vmatpush1.bf16.msra.mxu0 0
    %1938 = vmatprep.subr.bf16.mxu0 0
    %1939 = vmatpush1.bf16.msra.mxu0 0
    %1940 = vmatprep.subr.bf16.mxu0 0
    %1941 = vmatpush1.bf16.msra.mxu0 0
    %1942 = vmatprep.subr.bf16.mxu0 0
    %1943 = vmatpush1.bf16.msra.mxu0 0
    %1944 = vmatprep.subr.bf16.mxu0 0
    %1945 = vmatpush1.bf16.msra.mxu0 0
    %1946 = vmatprep.subr.bf16.mxu0 0
    %1947 = vmatpush1.bf16.msra.mxu0 0
    %1948 = vmatprep.subr.bf16.mxu0 0
    %1949 = vmatpush1.bf16.msra.mxu0 0
    %1950 = vmatprep.subr.bf16.mxu0 0
    %1951 = vmatpush1.bf16.msra.mxu0 0
    %1952 = vmatprep.subr.bf16.mxu0 0
    %1953 = vmatpush1.bf16.msra.mxu0 0
    %1954 = vmatprep.subr.bf16.mxu0 0
    %1955 = vmatpush1.bf16.msra.mxu0 0
    %1956 = vmatprep.subr.bf16.mxu0 0
    %1957 = vmatpush1.bf16.msra.mxu0 0
    %1958 = vmatprep.subr.bf16.mxu0 0
    %1959 = vmatpush1.bf16.msra.mxu0 0
    %1960 = vmatprep.subr.bf16.mxu0 0
    %1961 = vmatpush1.bf16.msra.mxu0 0
    %1962 = vmatprep.mubr.bf16.mxu0 0
    %1963 = vmatmul.mubr.bf16.gmra.mrb[0].mxu0 %v1925
    %v1964 = vpop.f32.mrb[0].mxu0
    %v1965 = vadd.f32 %v232, %v1964
    %v1966 = vpop.f32.mrb[0].mxu0
    %v1967 = vpop.f32.mrb[0].mxu0
    %v1968 = vadd.f32 %v233, %v1967
    %v1969 = vpop.f32.mrb[0].mxu0
    %1970 = vdwg.mxu0
    %v1971 = vxor.u32 %v1965, 2147483648
    %v1972 = vxor.u32 %v1968, 2147483648
    %v1973 = vmul.f32 %v1971, 1.442695
    %v1974 = vpow.pop %v1973
    %v1975 = vmul.f32 %v1972, 1.442695
    %v1976 = vpow.pop %v1975
    %v1977 = vadd.f32 %v1974, 1.0
    %v1978 = vadd.f32 %v1976, 1.0
    %v1979 = vrcp.pop %v1977
    %v1980 = vmul.f32 1.0, %v1979
    %v1981 = vrcp.pop %v1978
    %v1982 = vmul.f32 1.0, %v1981
    %1985 = vrot.lane.b32.xlu0 %v1965, 98
    %v1986 = vpop.permute.xlu0 %1985
    %1987 = vrot.lane.b32.xlu0 %v1968, 98
    %v1988 = vpop.permute.xlu0 %1987
    %v1991 = vmul.f32 %v1980, %v1986
    %v1992 = vmul.f32 %v1982, %v1988
    %1995 = vrot.lane.b32.xlu0 %v1991, 20
    %v1996 = vpop.permute.xlu0 %1995
    %1997 = vrot.lane.b32.xlu0 %v1992, 20
    %v1998 = vpop.permute.xlu0 %1997
    %v2001 = vadd.f32 %v1965, %v1996
    %v2002 = vadd.f32 %v1968, %v1998
    %v2003 = vtanh.pop %v2001
    %v2004 = vtanh.pop %v2002
    %v2005 = vsub.f32 1.0, %v1980
    %v2006 = vsub.f32 1.0, %v1982
    %2009 = vrot.lane.b32.xlu0 %v2003, 118
    %v2010 = vpop.permute.xlu0 %2009
    %2011 = vrot.lane.b32.xlu0 %v2004, 118
    %v2012 = vpop.permute.xlu0 %2011
    %v2015 = vmul.f32 %v2005, %v2010
    %v2016 = vmul.f32 %v2006, %v2012
    %v2017 = vmul.f32 %v1980, %v1426
    %v2018 = vmul.f32 %v1982, %v1427
    %v2019 = vadd.f32 %v2015, %v2017
    %v2020 = vadd.f32 %v2016, %v2018
    %2023 = vrot.lane.b32.xlu0 %v2019, 118
    %v2024 = vpop.permute.xlu0 %2023
    %2025 = vrot.lane.b32.xlu0 %v2020, 118
    %v2026 = vpop.permute.xlu0 %2025
    %2029 = vst.msk [vmem:[#allocation2 + $0x20] sm:$0xff] %vm325, %v2024
    %2030 = vst.msk [vmem:[#allocation2 + $0x28] sm:$0xff] %vm325, %v2026
    %v2031 = vpack.c.bf16 %v2020, %v2019
    %2033 = vrot.lane.b32.xlu0 %v2031, 118
    %v2034 = vpop.permute.xlu0 %2033
    %2036 = vmatprep.subr.bf16.mxu0 0
    %2037 = vmatpush1.bf16.msra.mxu0 %v2034
    %2038 = vmatprep.subr.bf16.mxu0 0
    %2039 = vmatpush1.bf16.msra.mxu0 0
    %2040 = vmatprep.subr.bf16.mxu0 0
    %2041 = vmatpush1.bf16.msra.mxu0 0
    %2042 = vmatprep.subr.bf16.mxu0 0
    %2043 = vmatpush1.bf16.msra.mxu0 0
    %2044 = vmatprep.subr.bf16.mxu0 0
    %2045 = vmatpush1.bf16.msra.mxu0 0
    %2046 = vmatprep.subr.bf16.mxu0 0
    %2047 = vmatpush1.bf16.msra.mxu0 0
    %2048 = vmatprep.subr.bf16.mxu0 0
    %2049 = vmatpush1.bf16.msra.mxu0 0
    %2050 = vmatprep.subr.bf16.mxu0 0
    %2051 = vmatpush1.bf16.msra.mxu0 0
    %2052 = vmatprep.subr.bf16.mxu0 0
    %2053 = vmatpush1.bf16.msra.mxu0 0
    %2054 = vmatprep.subr.bf16.mxu0 0
    %2055 = vmatpush1.bf16.msra.mxu0 0
    %2056 = vmatprep.subr.bf16.mxu0 0
    %2057 = vmatpush1.bf16.msra.mxu0 0
    %2058 = vmatprep.subr.bf16.mxu0 0
    %2059 = vmatpush1.bf16.msra.mxu0 0
    %2060 = vmatprep.subr.bf16.mxu0 0
    %2061 = vmatpush1.bf16.msra.mxu0 0
    %2062 = vmatprep.subr.bf16.mxu0 0
    %2063 = vmatpush1.bf16.msra.mxu0 0
    %2064 = vmatprep.subr.bf16.mxu0 0
    %2065 = vmatpush1.bf16.msra.mxu0 0
    %2066 = vmatprep.subr.bf16.mxu0 0
    %2067 = vmatpush1.bf16.msra.mxu0 0
    %2068 = vmatprep.mubr.bf16.mxu0 0
    %2069 = vmatmul.mubr.bf16.gmra.mrb[0].mxu0 %v236
    %v2070 = vpop.f32.mrb[0].mxu0
    %v2071 = vadd.f32 0.0, %v2070
    %v2072 = vpop.f32.mrb[0].mxu0
    %v2073 = vpop.f32.mrb[0].mxu0
    %v2074 = vadd.f32 0.0, %v2073
    %v2075 = vpop.f32.mrb[0].mxu0
    %2076 = vmatprep.mubr.bf16.mxu0 0
    %2077 = vmatmul.mubr.bf16.gmra.mrb[0].mxu0 %v239
    %v2078 = vpop.f32.mrb[0].mxu0
    %v2079 = vadd.f32 0.0, %v2078
    %v2080 = vpop.f32.mrb[0].mxu0
    %v2081 = vpop.f32.mrb[0].mxu0
    %v2082 = vadd.f32 0.0, %v2081
    %v2083 = vpop.f32.mrb[0].mxu0
    %2084 = vmatprep.mubr.bf16.mxu0 0
    %2085 = vmatmul.mubr.bf16.gmra.mrb[0].mxu0 %v242
    %v2086 = vpop.f32.mrb[0].mxu0
    %v2087 = vadd.f32 0.0, %v2086
    %v2088 = vpop.f32.mrb[0].mxu0
    %v2089 = vpop.f32.mrb[0].mxu0
    %v2090 = vadd.f32 0.0, %v2089
    %v2091 = vpop.f32.mrb[0].mxu0
    %2092 = vmatprep.mubr.bf16.mxu0 0
    %2093 = vmatmul.mubr.bf16.gmra.mrb[0].mxu0 %v245
    %v2094 = vpop.f32.mrb[0].mxu0
    %v2095 = vadd.f32 0.0, %v2094
    %v2096 = vpop.f32.mrb[0].mxu0
    %v2097 = vpop.f32.mrb[0].mxu0
    %v2098 = vadd.f32 0.0, %v2097
    %v2099 = vpop.f32.mrb[0].mxu0
    %2100 = vdwg.mxu0
    %v2101 = vpack.c.bf16 %v2074, %v2071
    %v2102 = vpack.c.bf16 %v2082, %v2079
    %v2103 = vpack.c.bf16 %v2090, %v2087
    %v2104 = vpack.c.bf16 %v2098, %v2095
    %v2105 = vld [vmem:[%s3] sm:$0xf]
    %v2106 = vld [vmem:[%s3 + $0x4] sm:$0x1]
    %v2107 = vld [vmem:[%s4] sm:$0xf]
    %v2108 = vld [vmem:[%s4 + $0x4] sm:$0x1]
    %v2111 = vunpack.c.l.b16 %v2107
    %v2112 = vunpack.c.l.b16 %v2108
    %v2113 = vpack.c.b16 %v2112, %v2111
    %v2115 = vsel %vm325, %v2103, 0
    %v2118 = vsel %vm325, %v2104, 0
    %v2121 = vsel %vm175, %v2113, 0
    %2123 = vmatprep.subr.bf16.mxu0 0
    %2124 = vmatpush1.bf16.msra.mxu0 %v2121
    %2125 = vmatprep.subr.bf16.mxu0 0
    %2126 = vmatpush1.bf16.msra.mxu0 0
    %2127 = vmatprep.subr.bf16.mxu0 0
    %2128 = vmatpush1.bf16.msra.mxu0 0
    %2129 = vmatprep.subr.bf16.mxu0 0
    %2130 = vmatpush1.bf16.msra.mxu0 0
    %2131 = vmatprep.subr.bf16.mxu0 0
    %2132 = vmatpush1.bf16.msra.mxu0 0
    %2133 = vmatprep.subr.bf16.mxu0 0
    %2134 = vmatpush1.bf16.msra.mxu0 0
    %2135 = vmatprep.subr.bf16.mxu0 0
    %2136 = vmatpush1.bf16.msra.mxu0 0
    %2137 = vmatprep.subr.bf16.mxu0 0
    %2138 = vmatpush1.bf16.msra.mxu0 0
    %2139 = vmatprep.subr.bf16.mxu0 0
    %2140 = vmatpush1.bf16.msra.mxu0 0
    %2141 = vmatprep.subr.bf16.mxu0 0
    %2142 = vmatpush1.bf16.msra.mxu0 0
    %2143 = vmatprep.subr.bf16.mxu0 0
    %2144 = vmatpush1.bf16.msra.mxu0 0
    %2145 = vmatprep.subr.bf16.mxu0 0
    %2146 = vmatpush1.bf16.msra.mxu0 0
    %2147 = vmatprep.subr.bf16.mxu0 0
    %2148 = vmatpush1.bf16.msra.mxu0 0
    %2149 = vmatprep.subr.bf16.mxu0 0
    %2150 = vmatpush1.bf16.msra.mxu0 0
    %2151 = vmatprep.subr.bf16.mxu0 0
    %2152 = vmatpush1.bf16.msra.mxu0 0
    %2153 = vmatprep.subr.bf16.mxu0 0
    %2154 = vmatpush1.bf16.msra.mxu0 0
    %2155 = vmatprep.mubr.bf16.mxu0 0
    %2156 = vmatmul.mubr.bf16.gmra.mrb[0].mxu0 %v2115
    %v2157 = vpop.f32.mrb[0].mxu0
    %v2158 = vadd.f32 0.0, %v2157
    %v2159 = vpop.f32.mrb[0].mxu0
    %v2160 = vpop.f32.mrb[0].mxu0
    %v2161 = vadd.f32 0.0, %v2160
    %v2162 = vpop.f32.mrb[0].mxu0
    %2163 = vmatprep.mubr.bf16.mxu0 0
    %2164 = vmatmul.mubr.bf16.gmra.mrb[0].mxu0 %v2118
    %v2165 = vpop.f32.mrb[0].mxu0
    %v2166 = vadd.f32 0.0, %v2165
    %v2167 = vpop.f32.mrb[0].mxu0
    %v2168 = vpop.f32.mrb[0].mxu0
    %v2169 = vadd.f32 0.0, %v2168
    %v2170 = vpop.f32.mrb[0].mxu0
    %2171 = vdwg.mxu0
    %v2174 = vunpack.c.l.b16 %v2105
    %v2175 = vunpack.c.l.b16 %v2106
    %v2176 = vpack.c.b16 %v2175, %v2174
    %v2178 = vsel %vm325, %v2101, 0
    %v2181 = vsel %vm325, %v2102, 0
    %v2184 = vsel %vm175, %v2176, 0
    %2186 = vmatprep.subr.bf16.mxu0 0
    %2187 = vmatpush1.bf16.msra.mxu0 %v2184
    %2188 = vmatprep.subr.bf16.mxu0 0
    %2189 = vmatpush1.bf16.msra.mxu0 0
    %2190 = vmatprep.subr.bf16.mxu0 0
    %2191 = vmatpush1.bf16.msra.mxu0 0
    %2192 = vmatprep.subr.bf16.mxu0 0
    %2193 = vmatpush1.bf16.msra.mxu0 0
    %2194 = vmatprep.subr.bf16.mxu0 0
    %2195 = vmatpush1.bf16.msra.mxu0 0
    %2196 = vmatprep.subr.bf16.mxu0 0
    %2197 = vmatpush1.bf16.msra.mxu0 0
    %2198 = vmatprep.subr.bf16.mxu0 0
    %2199 = vmatpush1.bf16.msra.mxu0 0
    %2200 = vmatprep.subr.bf16.mxu0 0
    %2201 = vmatpush1.bf16.msra.mxu0 0
    %2202 = vmatprep.subr.bf16.mxu0 0
    %2203 = vmatpush1.bf16.msra.mxu0 0
    %2204 = vmatprep.subr.bf16.mxu0 0
    %2205 = vmatpush1.bf16.msra.mxu0 0
    %2206 = vmatprep.subr.bf16.mxu0 0
    %2207 = vmatpush1.bf16.msra.mxu0 0
    %2208 = vmatprep.subr.bf16.mxu0 0
    %2209 = vmatpush1.bf16.msra.mxu0 0
    %2210 = vmatprep.subr.bf16.mxu0 0
    %2211 = vmatpush1.bf16.msra.mxu0 0
    %2212 = vmatprep.subr.bf16.mxu0 0
    %2213 = vmatpush1.bf16.msra.mxu0 0
    %2214 = vmatprep.subr.bf16.mxu0 0
    %2215 = vmatpush1.bf16.msra.mxu0 0
    %2216 = vmatprep.subr.bf16.mxu0 0
    %2217 = vmatpush1.bf16.msra.mxu0 0
    %2218 = vmatprep.mubr.bf16.mxu0 0
    %2219 = vmatmul.mubr.bf16.gmra.mrb[0].mxu0 %v2178
    %v2220 = vpop.f32.mrb[0].mxu0
    %v2221 = vadd.f32 %v2158, %v2220
    %v2222 = vpop.f32.mrb[0].mxu0
    %v2223 = vpop.f32.mrb[0].mxu0
    %v2224 = vadd.f32 %v2161, %v2223
    %v2225 = vpop.f32.mrb[0].mxu0
    %2226 = vmatprep.mubr.bf16.mxu0 0
    %2227 = vmatmul.mubr.bf16.gmra.mrb[0].mxu0 %v2181
    %v2228 = vpop.f32.mrb[0].mxu0
    %v2229 = vadd.f32 %v2166, %v2228
    %v2230 = vpop.f32.mrb[0].mxu0
    %v2231 = vpop.f32.mrb[0].mxu0
    %v2232 = vadd.f32 %v2169, %v2231
    %v2233 = vpop.f32.mrb[0].mxu0
    %2234 = vdwg.mxu0
    %v2235 = vadd.f32 %v2221, %v137
    %v2236 = vadd.f32 %v2224, %v137
    %v2237 = vadd.f32 %v2229, %v137
    %v2238 = vadd.f32 %v2232, %v137
    %v2239 = vmax.f32 %v2235, 0.0
    %v2240 = vmax.f32 %v2236, 0.0
    %v2241 = vmax.f32 %v2237, 0.0
    %v2242 = vmax.f32 %v2238, 0.0
    %v2243 = vpack.c.bf16 %v2240, %v2239
    %v2244 = vpack.c.bf16 %v2242, %v2241
    %v2245 = vld [vmem:[%s6] sm:$0xf]
    %v2246 = vld [vmem:[%s6 + $0x4] sm:$0xf]
    %v2247 = vld [vmem:[%s6 + $0x8] sm:$0xf]
    %v2248 = vld [vmem:[%s6 + $0xc] sm:$0xf]
    %v2249 = vld [vmem:[%s6 + $0x10] sm:$0xf]
    %v2250 = vld [vmem:[%s6 + $0x14] sm:$0xf]
    %v2251 = vld [vmem:[%s6 + $0x18] sm:$0xf]
    %v2252 = vld [vmem:[%s6 + $0x1c] sm:$0xf]
    %v2253 = vld [vmem:[%s6 + $0x20] sm:$0xf]
    %v2254 = vld [vmem:[%s6 + $0x24] sm:$0xf]
    %v2255 = vld [vmem:[%s6 + $0x28] sm:$0xf]
    %v2256 = vld [vmem:[%s6 + $0x2c] sm:$0xf]
    %v2269 = vunpack.c.l.b16 %v2245
    %v2270 = vunpack.c.l.b16 %v2246
    %v2271 = vunpack.c.l.b16 %v2247
    %v2272 = vunpack.c.l.b16 %v2248
    %v2273 = vunpack.c.l.b16 %v2249
    %v2274 = vunpack.c.l.b16 %v2250
    %v2275 = vunpack.c.l.b16 %v2251
    %v2276 = vunpack.c.l.b16 %v2252
    %v2277 = vunpack.c.l.b16 %v2253
    %v2278 = vunpack.c.l.b16 %v2254
    %v2279 = vunpack.c.l.b16 %v2255
    %v2280 = vunpack.c.l.b16 %v2256
    %v2281 = vpack.c.b16 %v2270, %v2269
    %v2282 = vpack.c.b16 %v2272, %v2271
    %v2283 = vpack.c.b16 %v2274, %v2273
    %v2284 = vpack.c.b16 %v2276, %v2275
    %v2285 = vpack.c.b16 %v2278, %v2277
    %v2286 = vpack.c.b16 %v2280, %v2279
    %v2294 = vsel %vm505, %v2243, 0
    %v2297 = vsel %vm505, %v2244, 0
    %2299 = vmatprep.subr.bf16.mxu0 0
    %2300 = vmatpush1.bf16.msra.mxu0 %v2281
    %2301 = vmatprep.subr.bf16.mxu0 0
    %2302 = vmatpush1.bf16.msra.mxu0 %v2282
    %2303 = vmatprep.subr.bf16.mxu0 0
    %2304 = vmatpush1.bf16.msra.mxu0 %v2283
    %2305 = vmatprep.subr.bf16.mxu0 0
    %2306 = vmatpush1.bf16.msra.mxu0 %v2284
    %2307 = vmatprep.subr.bf16.mxu0 0
    %2308 = vmatpush1.bf16.msra.mxu0 %v2285
    %2309 = vmatprep.subr.bf16.mxu0 0
    %2310 = vmatpush1.bf16.msra.mxu0 %v2286
    %2311 = vmatprep.subr.bf16.mxu0 0
    %2312 = vmatpush1.bf16.msra.mxu0 0
    %2313 = vmatprep.subr.bf16.mxu0 0
    %2314 = vmatpush1.bf16.msra.mxu0 0
    %2315 = vmatprep.subr.bf16.mxu0 0
    %2316 = vmatpush1.bf16.msra.mxu0 0
    %2317 = vmatprep.subr.bf16.mxu0 0
    %2318 = vmatpush1.bf16.msra.mxu0 0
    %2319 = vmatprep.subr.bf16.mxu0 0
    %2320 = vmatpush1.bf16.msra.mxu0 0
    %2321 = vmatprep.subr.bf16.mxu0 0
    %2322 = vmatpush1.bf16.msra.mxu0 0
    %2323 = vmatprep.subr.bf16.mxu0 0
    %2324 = vmatpush1.bf16.msra.mxu0 0
    %2325 = vmatprep.subr.bf16.mxu0 0
    %2326 = vmatpush1.bf16.msra.mxu0 0
    %2327 = vmatprep.subr.bf16.mxu0 0
    %2328 = vmatpush1.bf16.msra.mxu0 0
    %2329 = vmatprep.subr.bf16.mxu0 0
    %2330 = vmatpush1.bf16.msra.mxu0 0
    %2331 = vmatprep.mubr.bf16.mxu0 0
    %2332 = vmatmul.mubr.bf16.gmra.mrb[0].mxu0 %v2294
    %v2333 = vpop.f32.mrb[0].mxu0
    %v2334 = vadd.f32 %v144, %v2333
    %v2335 = vpop.f32.mrb[0].mxu0
    %v2336 = vpop.f32.mrb[0].mxu0
    %v2337 = vadd.f32 %v144, %v2336
    %v2338 = vpop.f32.mrb[0].mxu0
    %2339 = vmatprep.mubr.bf16.mxu0 0
    %2340 = vmatmul.mubr.bf16.gmra.mrb[0].mxu0 %v2297
    %v2341 = vpop.f32.mrb[0].mxu0
    %v2342 = vadd.f32 %v144, %v2341
    %v2343 = vpop.f32.mrb[0].mxu0
    %v2344 = vpop.f32.mrb[0].mxu0
    %v2345 = vadd.f32 %v144, %v2344
    %v2346 = vpop.f32.mrb[0].mxu0
    %2347 = vdwg.mxu0
    %v2348 = vmax.f32 %v2334, 0.0
    %v2349 = vmax.f32 %v2337, 0.0
    %v2350 = vmax.f32 %v2342, 0.0
    %v2351 = vmax.f32 %v2345, 0.0
    %v2352 = vpack.c.bf16 %v2349, %v2348
    %v2353 = vpack.c.bf16 %v2351, %v2350
    %v2354 = vld [vmem:[%s8] sm:$0xf]
    %v2355 = vld [vmem:[%s8 + $0x4] sm:$0xf]
    %v2356 = vld [vmem:[%s8 + $0x8] sm:$0xf]
    %v2357 = vld [vmem:[%s8 + $0xc] sm:$0xf]
    %v2358 = vld [vmem:[%s8 + $0x10] sm:$0xf]
    %v2359 = vld [vmem:[%s8 + $0x14] sm:$0xf]
    %v2360 = vld [vmem:[%s8 + $0x18] sm:$0xf]
    %v2361 = vld [vmem:[%s8 + $0x1c] sm:$0xf]
    %v2362 = vld [vmem:[%s8 + $0x20] sm:$0xf]
    %v2363 = vld [vmem:[%s8 + $0x24] sm:$0xf]
    %v2364 = vld [vmem:[%s8 + $0x28] sm:$0xf]
    %v2365 = vld [vmem:[%s8 + $0x2c] sm:$0xf]
    %v2378 = vunpack.c.l.b16 %v2354
    %v2379 = vunpack.c.l.b16 %v2355
    %v2380 = vunpack.c.l.b16 %v2356
    %v2381 = vunpack.c.l.b16 %v2357
    %v2382 = vunpack.c.l.b16 %v2358
    %v2383 = vunpack.c.l.b16 %v2359
    %v2384 = vunpack.c.l.b16 %v2360
    %v2385 = vunpack.c.l.b16 %v2361
    %v2386 = vunpack.c.l.b16 %v2362
    %v2387 = vunpack.c.l.b16 %v2363
    %v2388 = vunpack.c.l.b16 %v2364
    %v2389 = vunpack.c.l.b16 %v2365
    %v2390 = vpack.c.b16 %v2379, %v2378
    %v2391 = vpack.c.b16 %v2381, %v2380
    %v2392 = vpack.c.b16 %v2383, %v2382
    %v2393 = vpack.c.b16 %v2385, %v2384
    %v2394 = vpack.c.b16 %v2387, %v2386
    %v2395 = vpack.c.b16 %v2389, %v2388
    %v2403 = vsel %vm505, %v2352, 0
    %v2406 = vsel %vm505, %v2353, 0
    %2408 = vmatprep.subr.bf16.mxu0 0
    %2409 = vmatpush1.bf16.msra.mxu0 %v2390
    %2410 = vmatprep.subr.bf16.mxu0 0
    %2411 = vmatpush1.bf16.msra.mxu0 %v2391
    %2412 = vmatprep.subr.bf16.mxu0 0
    %2413 = vmatpush1.bf16.msra.mxu0 %v2392
    %2414 = vmatprep.subr.bf16.mxu0 0
    %2415 = vmatpush1.bf16.msra.mxu0 %v2393
    %2416 = vmatprep.subr.bf16.mxu0 0
    %2417 = vmatpush1.bf16.msra.mxu0 %v2394
    %2418 = vmatprep.subr.bf16.mxu0 0
    %2419 = vmatpush1.bf16.msra.mxu0 %v2395
    %2420 = vmatprep.subr.bf16.mxu0 0
    %2421 = vmatpush1.bf16.msra.mxu0 0
    %2422 = vmatprep.subr.bf16.mxu0 0
    %2423 = vmatpush1.bf16.msra.mxu0 0
    %2424 = vmatprep.subr.bf16.mxu0 0
    %2425 = vmatpush1.bf16.msra.mxu0 0
    %2426 = vmatprep.subr.bf16.mxu0 0
    %2427 = vmatpush1.bf16.msra.mxu0 0
    %2428 = vmatprep.subr.bf16.mxu0 0
    %2429 = vmatpush1.bf16.msra.mxu0 0
    %2430 = vmatprep.subr.bf16.mxu0 0
    %2431 = vmatpush1.bf16.msra.mxu0 0
    %2432 = vmatprep.subr.bf16.mxu0 0
    %2433 = vmatpush1.bf16.msra.mxu0 0
    %2434 = vmatprep.subr.bf16.mxu0 0
    %2435 = vmatpush1.bf16.msra.mxu0 0
    %2436 = vmatprep.subr.bf16.mxu0 0
    %2437 = vmatpush1.bf16.msra.mxu0 0
    %2438 = vmatprep.subr.bf16.mxu0 0
    %2439 = vmatpush1.bf16.msra.mxu0 0
    %2440 = vmatprep.mubr.bf16.mxu0 0
    %2441 = vmatmul.mubr.bf16.gmra.mrb[0].mxu0 %v2403
    %v2442 = vpop.f32.mrb[0].mxu0
    %v2443 = vadd.f32 %v151, %v2442
    %v2444 = vpop.f32.mrb[0].mxu0
    %v2445 = vpop.f32.mrb[0].mxu0
    %v2446 = vadd.f32 %v151, %v2445
    %v2447 = vpop.f32.mrb[0].mxu0
    %2448 = vmatprep.mubr.bf16.mxu0 0
    %2449 = vmatmul.mubr.bf16.gmra.mrb[0].mxu0 %v2406
    %v2450 = vpop.f32.mrb[0].mxu0
    %v2451 = vadd.f32 %v151, %v2450
    %v2452 = vpop.f32.mrb[0].mxu0
    %v2453 = vpop.f32.mrb[0].mxu0
    %v2454 = vadd.f32 %v151, %v2453
    %v2455 = vpop.f32.mrb[0].mxu0
    %2456 = vdwg.mxu0
    %v2457 = vpack.c.bf16 %v2446, %v2443
    %v2458 = vpack.c.bf16 %v2454, %v2451
    %2459 = vmatprep.subr.bf16.mxu0 0
    %2460 = vmatpush1.bf16.msra.mxu0 %v2457
    %2461 = vmatprep.subr.bf16.mxu0 0
    %2462 = vmatpush1.bf16.msra.mxu0 %v2458
    %2463 = vmatprep.subr.bf16.mxu0 0
    %2464 = vmatpush1.bf16.msra.mxu0 0
    %2465 = vmatprep.subr.bf16.mxu0 0
    %2466 = vmatpush1.bf16.msra.mxu0 0
    %2467 = vmatprep.subr.bf16.mxu0 0
    %2468 = vmatpush1.bf16.msra.mxu0 0
    %2469 = vmatprep.subr.bf16.mxu0 0
    %2470 = vmatpush1.bf16.msra.mxu0 0
    %2471 = vmatprep.subr.bf16.mxu0 0
    %2472 = vmatpush1.bf16.msra.mxu0 0
    %2473 = vmatprep.subr.bf16.mxu0 0
    %2474 = vmatpush1.bf16.msra.mxu0 0
    %2475 = vmatprep.subr.bf16.mxu0 0
    %2476 = vmatpush1.bf16.msra.mxu0 0
    %2477 = vmatprep.subr.bf16.mxu0 0
    %2478 = vmatpush1.bf16.msra.mxu0 0
    %2479 = vmatprep.subr.bf16.mxu0 0
    %2480 = vmatpush1.bf16.msra.mxu0 0
    %2481 = vmatprep.subr.bf16.mxu0 0
    %2482 = vmatpush1.bf16.msra.mxu0 0
    %2483 = vmatprep.subr.bf16.mxu0 0
    %2484 = vmatpush1.bf16.msra.mxu0 0
    %2485 = vmatprep.subr.bf16.mxu0 0
    %2486 = vmatpush1.bf16.msra.mxu0 0
    %2487 = vmatprep.subr.bf16.mxu0 0
    %2488 = vmatpush1.bf16.msra.mxu0 0
    %2489 = vmatprep.subr.bf16.mxu0 0
    %2490 = vmatpush1.bf16.msra.mxu0 0
    %2491 = vmatprep.mubr.bf16.mxu0 0
    %2492 = vmatmul.mubr.bf16.gmra.mrb[0].mxu0 %v674
    %v2493 = vpop.f32.mrb[0].mxu0
    %v2494 = vadd.f32 0.0, %v2493
    %v2495 = vpop.f32.mrb[0].mxu0
    %v2496 = vpop.f32.mrb[0].mxu0
    %v2497 = vadd.f32 0.0, %v2496
    %v2498 = vpop.f32.mrb[0].mxu0
    %2499 = vdwg.mxu0
    %v2500 = vpack.c.bf16 %v2497, %v2494
    %2501 = vrot.lane.b32.xlu0 %v2031, 1
    %v2502 = vpop.permute.xlu0 %2501
    %v2505 = vsel %vm718, %v2500, %v2502
    %v2506 = vld [vmem:[%s12] sm:$0xf]
    %v2507 = vld [vmem:[%s12 + $0x4] sm:$0xf]
    %v2508 = vld [vmem:[%s12 + $0x8] sm:$0x7]
    %v2512 = vunpack.c.l.b16 %v2506
    %v2513 = vunpack.c.l.b16 %v2507
    %v2514 = vunpack.c.l.b16 %v2508
    %v2515 = vpack.c.b16 %v2513, %v2512
    %v2516 = vpack.c.b16 %v2514, %v2514
    %v2518 = vsel %vm734, %v2505, 0
    %v2521 = vand.u32 %v2516, %v740
    %2523 = vmatprep.subr.bf16.mxu0 0
    %2524 = vmatpush1.bf16.msra.mxu0 %v2515
    %2525 = vmatprep.subr.bf16.mxu0 0
    %2526 = vmatpush1.bf16.msra.mxu0 %v2521
    %2527 = vmatprep.subr.bf16.mxu0 0
    %2528 = vmatpush1.bf16.msra.mxu0 0
    %2529 = vmatprep.subr.bf16.mxu0 0
    %2530 = vmatpush1.bf16.msra.mxu0 0
    %2531 = vmatprep.subr.bf16.mxu0 0
    %2532 = vmatpush1.bf16.msra.mxu0 0
    %2533 = vmatprep.subr.bf16.mxu0 0
    %2534 = vmatpush1.bf16.msra.mxu0 0
    %2535 = vmatprep.subr.bf16.mxu0 0
    %2536 = vmatpush1.bf16.msra.mxu0 0
    %2537 = vmatprep.subr.bf16.mxu0 0
    %2538 = vmatpush1.bf16.msra.mxu0 0
    %2539 = vmatprep.subr.bf16.mxu0 0
    %2540 = vmatpush1.bf16.msra.mxu0 0
    %2541 = vmatprep.subr.bf16.mxu0 0
    %2542 = vmatpush1.bf16.msra.mxu0 0
    %2543 = vmatprep.subr.bf16.mxu0 0
    %2544 = vmatpush1.bf16.msra.mxu0 0
    %2545 = vmatprep.subr.bf16.mxu0 0
    %2546 = vmatpush1.bf16.msra.mxu0 0
    %2547 = vmatprep.subr.bf16.mxu0 0
    %2548 = vmatpush1.bf16.msra.mxu0 0
    %2549 = vmatprep.subr.bf16.mxu0 0
    %2550 = vmatpush1.bf16.msra.mxu0 0
    %2551 = vmatprep.subr.bf16.mxu0 0
    %2552 = vmatpush1.bf16.msra.mxu0 0
    %2553 = vmatprep.subr.bf16.mxu0 0
    %2554 = vmatpush1.bf16.msra.mxu0 0
    %2555 = vmatprep.mubr.bf16.mxu0 0
    %2556 = vmatmul.mubr.bf16.gmra.mrb[0].mxu0 %v2518
    %v2557 = vpop.f32.mrb[0].mxu0
    %v2558 = vadd.f32 %v232, %v2557
    %v2559 = vpop.f32.mrb[0].mxu0
    %v2560 = vpop.f32.mrb[0].mxu0
    %v2561 = vadd.f32 %v233, %v2560
    %v2562 = vpop.f32.mrb[0].mxu0
    %2563 = vdwg.mxu0
    %v2564 = vxor.u32 %v2558, 2147483648
    %v2565 = vxor.u32 %v2561, 2147483648
    %v2566 = vmul.f32 %v2564, 1.442695
    %v2567 = vpow.pop %v2566
    %v2568 = vmul.f32 %v2565, 1.442695
    %v2569 = vpow.pop %v2568
    %v2570 = vadd.f32 %v2567, 1.0
    %v2571 = vadd.f32 %v2569, 1.0
    %v2572 = vrcp.pop %v2570
    %v2573 = vmul.f32 1.0, %v2572
    %v2574 = vrcp.pop %v2571
    %v2575 = vmul.f32 1.0, %v2574
    %2578 = vrot.lane.b32.xlu0 %v2558, 98
    %v2579 = vpop.permute.xlu0 %2578
    %2580 = vrot.lane.b32.xlu0 %v2561, 98
    %v2581 = vpop.permute.xlu0 %2580
    %v2584 = vmul.f32 %v2573, %v2579
    %v2585 = vmul.f32 %v2575, %v2581
    %2588 = vrot.lane.b32.xlu0 %v2584, 20
    %v2589 = vpop.permute.xlu0 %2588
    %2590 = vrot.lane.b32.xlu0 %v2585, 20
    %v2591 = vpop.permute.xlu0 %2590
    %v2594 = vadd.f32 %v2558, %v2589
    %v2595 = vadd.f32 %v2561, %v2591
    %v2596 = vtanh.pop %v2594
    %v2597 = vtanh.pop %v2595
    %v2598 = vsub.f32 1.0, %v2573
    %v2599 = vsub.f32 1.0, %v2575
    %2602 = vrot.lane.b32.xlu0 %v2596, 118
    %v2603 = vpop.permute.xlu0 %2602
    %2604 = vrot.lane.b32.xlu0 %v2597, 118
    %v2605 = vpop.permute.xlu0 %2604
    %v2608 = vmul.f32 %v2598, %v2603
    %v2609 = vmul.f32 %v2599, %v2605
    %v2610 = vmul.f32 %v2573, %v2019
    %v2611 = vmul.f32 %v2575, %v2020
    %v2612 = vadd.f32 %v2608, %v2610
    %v2613 = vadd.f32 %v2609, %v2611
    %2616 = vrot.lane.b32.xlu0 %v2612, 118
    %v2617 = vpop.permute.xlu0 %2616
    %2618 = vrot.lane.b32.xlu0 %v2613, 118
    %v2619 = vpop.permute.xlu0 %2618
    %2622 = vst.msk [vmem:[#allocation2 + $0x30] sm:$0xff] %vm325, %v2617
    %2623 = vst.msk [vmem:[#allocation2 + $0x38] sm:$0xff] %vm325, %v2619
    %v2624 = vpack.c.bf16 %v2613, %v2612
    %2626 = vrot.lane.b32.xlu0 %v2624, 118
    %v2627 = vpop.permute.xlu0 %2626
    %2629 = vmatprep.subr.bf16.mxu0 0
    %2630 = vmatpush1.bf16.msra.mxu0 %v2627
    %2631 = vmatprep.subr.bf16.mxu0 0
    %2632 = vmatpush1.bf16.msra.mxu0 0
    %2633 = vmatprep.subr.bf16.mxu0 0
    %2634 = vmatpush1.bf16.msra.mxu0 0
    %2635 = vmatprep.subr.bf16.mxu0 0
    %2636 = vmatpush1.bf16.msra.mxu0 0
    %2637 = vmatprep.subr.bf16.mxu0 0
    %2638 = vmatpush1.bf16.msra.mxu0 0
    %2639 = vmatprep.subr.bf16.mxu0 0
    %2640 = vmatpush1.bf16.msra.mxu0 0
    %2641 = vmatprep.subr.bf16.mxu0 0
    %2642 = vmatpush1.bf16.msra.mxu0 0
    %2643 = vmatprep.subr.bf16.mxu0 0
    %2644 = vmatpush1.bf16.msra.mxu0 0
    %2645 = vmatprep.subr.bf16.mxu0 0
    %2646 = vmatpush1.bf16.msra.mxu0 0
    %2647 = vmatprep.subr.bf16.mxu0 0
    %2648 = vmatpush1.bf16.msra.mxu0 0
    %2649 = vmatprep.subr.bf16.mxu0 0
    %2650 = vmatpush1.bf16.msra.mxu0 0
    %2651 = vmatprep.subr.bf16.mxu0 0
    %2652 = vmatpush1.bf16.msra.mxu0 0
    %2653 = vmatprep.subr.bf16.mxu0 0
    %2654 = vmatpush1.bf16.msra.mxu0 0
    %2655 = vmatprep.subr.bf16.mxu0 0
    %2656 = vmatpush1.bf16.msra.mxu0 0
    %2657 = vmatprep.subr.bf16.mxu0 0
    %2658 = vmatpush1.bf16.msra.mxu0 0
    %2659 = vmatprep.subr.bf16.mxu0 0
    %2660 = vmatpush1.bf16.msra.mxu0 0
    %2661 = vmatprep.mubr.bf16.mxu0 0
    %2662 = vmatmul.mubr.bf16.gmra.mrb[0].mxu0 %v236
    %v2663 = vpop.f32.mrb[0].mxu0
    %v2664 = vadd.f32 0.0, %v2663
    %v2665 = vpop.f32.mrb[0].mxu0
    %v2666 = vpop.f32.mrb[0].mxu0
    %v2667 = vadd.f32 0.0, %v2666
    %v2668 = vpop.f32.mrb[0].mxu0
    %2669 = vmatprep.mubr.bf16.mxu0 0
    %2670 = vmatmul.mubr.bf16.gmra.mrb[0].mxu0 %v239
    %v2671 = vpop.f32.mrb[0].mxu0
    %v2672 = vadd.f32 0.0, %v2671
    %v2673 = vpop.f32.mrb[0].mxu0
    %v2674 = vpop.f32.mrb[0].mxu0
    %v2675 = vadd.f32 0.0, %v2674
    %v2676 = vpop.f32.mrb[0].mxu0
    %2677 = vmatprep.mubr.bf16.mxu0 0
    %2678 = vmatmul.mubr.bf16.gmra.mrb[0].mxu0 %v242
    %v2679 = vpop.f32.mrb[0].mxu0
    %v2680 = vadd.f32 0.0, %v2679
    %v2681 = vpop.f32.mrb[0].mxu0
    %v2682 = vpop.f32.mrb[0].mxu0
    %v2683 = vadd.f32 0.0, %v2682
    %v2684 = vpop.f32.mrb[0].mxu0
    %2685 = vmatprep.mubr.bf16.mxu0 0
    %2686 = vmatmul.mubr.bf16.gmra.mrb[0].mxu0 %v245
    %v2687 = vpop.f32.mrb[0].mxu0
    %v2688 = vadd.f32 0.0, %v2687
    %v2689 = vpop.f32.mrb[0].mxu0
    %v2690 = vpop.f32.mrb[0].mxu0
    %v2691 = vadd.f32 0.0, %v2690
    %v2692 = vpop.f32.mrb[0].mxu0
    %2693 = vdwg.mxu0
    %v2694 = vpack.c.bf16 %v2667, %v2664
    %v2695 = vpack.c.bf16 %v2675, %v2672
    %v2696 = vpack.c.bf16 %v2683, %v2680
    %v2697 = vpack.c.bf16 %v2691, %v2688
    %v2698 = vld [vmem:[%s3] sm:$0xf]
    %v2699 = vld [vmem:[%s3 + $0x4] sm:$0x1]
    %v2700 = vld [vmem:[%s4] sm:$0xf]
    %v2701 = vld [vmem:[%s4 + $0x4] sm:$0x1]
    %v2704 = vunpack.c.l.b16 %v2700
    %v2705 = vunpack.c.l.b16 %v2701
    %v2706 = vpack.c.b16 %v2705, %v2704
    %v2708 = vsel %vm325, %v2696, 0
    %v2711 = vsel %vm325, %v2697, 0
    %v2714 = vsel %vm175, %v2706, 0
    %2716 = vmatprep.subr.bf16.mxu0 0
    %2717 = vmatpush1.bf16.msra.mxu0 %v2714
    %2718 = vmatprep.subr.bf16.mxu0 0
    %2719 = vmatpush1.bf16.msra.mxu0 0
    %2720 = vmatprep.subr.bf16.mxu0 0
    %2721 = vmatpush1.bf16.msra.mxu0 0
    %2722 = vmatprep.subr.bf16.mxu0 0
    %2723 = vmatpush1.bf16.msra.mxu0 0
    %2724 = vmatprep.subr.bf16.mxu0 0
    %2725 = vmatpush1.bf16.msra.mxu0 0
    %2726 = vmatprep.subr.bf16.mxu0 0
    %2727 = vmatpush1.bf16.msra.mxu0 0
    %2728 = vmatprep.subr.bf16.mxu0 0
    %2729 = vmatpush1.bf16.msra.mxu0 0
    %2730 = vmatprep.subr.bf16.mxu0 0
    %2731 = vmatpush1.bf16.msra.mxu0 0
    %2732 = vmatprep.subr.bf16.mxu0 0
    %2733 = vmatpush1.bf16.msra.mxu0 0
    %2734 = vmatprep.subr.bf16.mxu0 0
    %2735 = vmatpush1.bf16.msra.mxu0 0
    %2736 = vmatprep.subr.bf16.mxu0 0
    %2737 = vmatpush1.bf16.msra.mxu0 0
    %2738 = vmatprep.subr.bf16.mxu0 0
    %2739 = vmatpush1.bf16.msra.mxu0 0
    %2740 = vmatprep.subr.bf16.mxu0 0
    %2741 = vmatpush1.bf16.msra.mxu0 0
    %2742 = vmatprep.subr.bf16.mxu0 0
    %2743 = vmatpush1.bf16.msra.mxu0 0
    %2744 = vmatprep.subr.bf16.mxu0 0
    %2745 = vmatpush1.bf16.msra.mxu0 0
    %2746 = vmatprep.subr.bf16.mxu0 0
    %2747 = vmatpush1.bf16.msra.mxu0 0
    %2748 = vmatprep.mubr.bf16.mxu0 0
    %2749 = vmatmul.mubr.bf16.gmra.mrb[0].mxu0 %v2708
    %v2750 = vpop.f32.mrb[0].mxu0
    %v2751 = vadd.f32 0.0, %v2750
    %v2752 = vpop.f32.mrb[0].mxu0
    %v2753 = vpop.f32.mrb[0].mxu0
    %v2754 = vadd.f32 0.0, %v2753
    %v2755 = vpop.f32.mrb[0].mxu0
    %2756 = vmatprep.mubr.bf16.mxu0 0
    %2757 = vmatmul.mubr.bf16.gmra.mrb[0].mxu0 %v2711
    %v2758 = vpop.f32.mrb[0].mxu0
    %v2759 = vadd.f32 0.0, %v2758
    %v2760 = vpop.f32.mrb[0].mxu0
    %v2761 = vpop.f32.mrb[0].mxu0
    %v2762 = vadd.f32 0.0, %v2761
    %v2763 = vpop.f32.mrb[0].mxu0
    %2764 = vdwg.mxu0
    %v2767 = vunpack.c.l.b16 %v2698
    %v2768 = vunpack.c.l.b16 %v2699
    %v2769 = vpack.c.b16 %v2768, %v2767
    %v2771 = vsel %vm325, %v2694, 0
    %v2774 = vsel %vm325, %v2695, 0
    %v2777 = vsel %vm175, %v2769, 0
    %2779 = vmatprep.subr.bf16.mxu0 0
    %2780 = vmatpush1.bf16.msra.mxu0 %v2777
    %2781 = vmatprep.subr.bf16.mxu0 0
    %2782 = vmatpush1.bf16.msra.mxu0 0
    %2783 = vmatprep.subr.bf16.mxu0 0
    %2784 = vmatpush1.bf16.msra.mxu0 0
    %2785 = vmatprep.subr.bf16.mxu0 0
    %2786 = vmatpush1.bf16.msra.mxu0 0
    %2787 = vmatprep.subr.bf16.mxu0 0
    %2788 = vmatpush1.bf16.msra.mxu0 0
    %2789 = vmatprep.subr.bf16.mxu0 0
    %2790 = vmatpush1.bf16.msra.mxu0 0
    %2791 = vmatprep.subr.bf16.mxu0 0
    %2792 = vmatpush1.bf16.msra.mxu0 0
    %2793 = vmatprep.subr.bf16.mxu0 0
    %2794 = vmatpush1.bf16.msra.mxu0 0
    %2795 = vmatprep.subr.bf16.mxu0 0
    %2796 = vmatpush1.bf16.msra.mxu0 0
    %2797 = vmatprep.subr.bf16.mxu0 0
    %2798 = vmatpush1.bf16.msra.mxu0 0
    %2799 = vmatprep.subr.bf16.mxu0 0
    %2800 = vmatpush1.bf16.msra.mxu0 0
    %2801 = vmatprep.subr.bf16.mxu0 0
    %2802 = vmatpush1.bf16.msra.mxu0 0
    %2803 = vmatprep.subr.bf16.mxu0 0
    %2804 = vmatpush1.bf16.msra.mxu0 0
    %2805 = vmatprep.subr.bf16.mxu0 0
    %2806 = vmatpush1.bf16.msra.mxu0 0
    %2807 = vmatprep.subr.bf16.mxu0 0
    %2808 = vmatpush1.bf16.msra.mxu0 0
    %2809 = vmatprep.subr.bf16.mxu0 0
    %2810 = vmatpush1.bf16.msra.mxu0 0
    %2811 = vmatprep.mubr.bf16.mxu0 0
    %2812 = vmatmul.mubr.bf16.gmra.mrb[0].mxu0 %v2771
    %v2813 = vpop.f32.mrb[0].mxu0
    %v2814 = vadd.f32 %v2751, %v2813
    %v2815 = vpop.f32.mrb[0].mxu0
    %v2816 = vpop.f32.mrb[0].mxu0
    %v2817 = vadd.f32 %v2754, %v2816
    %v2818 = vpop.f32.mrb[0].mxu0
    %2819 = vmatprep.mubr.bf16.mxu0 0
    %2820 = vmatmul.mubr.bf16.gmra.mrb[0].mxu0 %v2774
    %v2821 = vpop.f32.mrb[0].mxu0
    %v2822 = vadd.f32 %v2759, %v2821
    %v2823 = vpop.f32.mrb[0].mxu0
    %v2824 = vpop.f32.mrb[0].mxu0
    %v2825 = vadd.f32 %v2762, %v2824
    %v2826 = vpop.f32.mrb[0].mxu0
    %2827 = vdwg.mxu0
    %v2828 = vadd.f32 %v2814, %v137
    %v2829 = vadd.f32 %v2817, %v137
    %v2830 = vadd.f32 %v2822, %v137
    %v2831 = vadd.f32 %v2825, %v137
    %v2832 = vmax.f32 %v2828, 0.0
    %v2833 = vmax.f32 %v2829, 0.0
    %v2834 = vmax.f32 %v2830, 0.0
    %v2835 = vmax.f32 %v2831, 0.0
    %v2836 = vpack.c.bf16 %v2833, %v2832
    %v2837 = vpack.c.bf16 %v2835, %v2834
    %v2838 = vld [vmem:[%s6] sm:$0xf]
    %v2839 = vld [vmem:[%s6 + $0x4] sm:$0xf]
    %v2840 = vld [vmem:[%s6 + $0x8] sm:$0xf]
    %v2841 = vld [vmem:[%s6 + $0xc] sm:$0xf]
    %v2842 = vld [vmem:[%s6 + $0x10] sm:$0xf]
    %v2843 = vld [vmem:[%s6 + $0x14] sm:$0xf]
    %v2844 = vld [vmem:[%s6 + $0x18] sm:$0xf]
    %v2845 = vld [vmem:[%s6 + $0x1c] sm:$0xf]
    %v2846 = vld [vmem:[%s6 + $0x20] sm:$0xf]
    %v2847 = vld [vmem:[%s6 + $0x24] sm:$0xf]
    %v2848 = vld [vmem:[%s6 + $0x28] sm:$0xf]
    %v2849 = vld [vmem:[%s6 + $0x2c] sm:$0xf]
    %v2862 = vunpack.c.l.b16 %v2838
    %v2863 = vunpack.c.l.b16 %v2839
    %v2864 = vunpack.c.l.b16 %v2840
    %v2865 = vunpack.c.l.b16 %v2841
    %v2866 = vunpack.c.l.b16 %v2842
    %v2867 = vunpack.c.l.b16 %v2843
    %v2868 = vunpack.c.l.b16 %v2844
    %v2869 = vunpack.c.l.b16 %v2845
    %v2870 = vunpack.c.l.b16 %v2846
    %v2871 = vunpack.c.l.b16 %v2847
    %v2872 = vunpack.c.l.b16 %v2848
    %v2873 = vunpack.c.l.b16 %v2849
    %v2874 = vpack.c.b16 %v2863, %v2862
    %v2875 = vpack.c.b16 %v2865, %v2864
    %v2876 = vpack.c.b16 %v2867, %v2866
    %v2877 = vpack.c.b16 %v2869, %v2868
    %v2878 = vpack.c.b16 %v2871, %v2870
    %v2879 = vpack.c.b16 %v2873, %v2872
    %v2887 = vsel %vm505, %v2836, 0
    %v2890 = vsel %vm505, %v2837, 0
    %2892 = vmatprep.subr.bf16.mxu0 0
    %2893 = vmatpush1.bf16.msra.mxu0 %v2874
    %2894 = vmatprep.subr.bf16.mxu0 0
    %2895 = vmatpush1.bf16.msra.mxu0 %v2875
    %2896 = vmatprep.subr.bf16.mxu0 0
    %2897 = vmatpush1.bf16.msra.mxu0 %v2876
    %2898 = vmatprep.subr.bf16.mxu0 0
    %2899 = vmatpush1.bf16.msra.mxu0 %v2877
    %2900 = vmatprep.subr.bf16.mxu0 0
    %2901 = vmatpush1.bf16.msra.mxu0 %v2878
    %2902 = vmatprep.subr.bf16.mxu0 0
    %2903 = vmatpush1.bf16.msra.mxu0 %v2879
    %2904 = vmatprep.subr.bf16.mxu0 0
    %2905 = vmatpush1.bf16.msra.mxu0 0
    %2906 = vmatprep.subr.bf16.mxu0 0
    %2907 = vmatpush1.bf16.msra.mxu0 0
    %2908 = vmatprep.subr.bf16.mxu0 0
    %2909 = vmatpush1.bf16.msra.mxu0 0
    %2910 = vmatprep.subr.bf16.mxu0 0
    %2911 = vmatpush1.bf16.msra.mxu0 0
    %2912 = vmatprep.subr.bf16.mxu0 0
    %2913 = vmatpush1.bf16.msra.mxu0 0
    %2914 = vmatprep.subr.bf16.mxu0 0
    %2915 = vmatpush1.bf16.msra.mxu0 0
    %2916 = vmatprep.subr.bf16.mxu0 0
    %2917 = vmatpush1.bf16.msra.mxu0 0
    %2918 = vmatprep.subr.bf16.mxu0 0
    %2919 = vmatpush1.bf16.msra.mxu0 0
    %2920 = vmatprep.subr.bf16.mxu0 0
    %2921 = vmatpush1.bf16.msra.mxu0 0
    %2922 = vmatprep.subr.bf16.mxu0 0
    %2923 = vmatpush1.bf16.msra.mxu0 0
    %2924 = vmatprep.mubr.bf16.mxu0 0
    %2925 = vmatmul.mubr.bf16.gmra.mrb[0].mxu0 %v2887
    %v2926 = vpop.f32.mrb[0].mxu0
    %v2927 = vadd.f32 %v144, %v2926
    %v2928 = vpop.f32.mrb[0].mxu0
    %v2929 = vpop.f32.mrb[0].mxu0
    %v2930 = vadd.f32 %v144, %v2929
    %v2931 = vpop.f32.mrb[0].mxu0
    %2932 = vmatprep.mubr.bf16.mxu0 0
    %2933 = vmatmul.mubr.bf16.gmra.mrb[0].mxu0 %v2890
    %v2934 = vpop.f32.mrb[0].mxu0
    %v2935 = vadd.f32 %v144, %v2934
    %v2936 = vpop.f32.mrb[0].mxu0
    %v2937 = vpop.f32.mrb[0].mxu0
    %v2938 = vadd.f32 %v144, %v2937
    %v2939 = vpop.f32.mrb[0].mxu0
    %2940 = vdwg.mxu0
    %v2941 = vmax.f32 %v2927, 0.0
    %v2942 = vmax.f32 %v2930, 0.0
    %v2943 = vmax.f32 %v2935, 0.0
    %v2944 = vmax.f32 %v2938, 0.0
    %v2945 = vpack.c.bf16 %v2942, %v2941
    %v2946 = vpack.c.bf16 %v2944, %v2943
    %v2947 = vld [vmem:[%s8] sm:$0xf]
    %v2948 = vld [vmem:[%s8 + $0x4] sm:$0xf]
    %v2949 = vld [vmem:[%s8 + $0x8] sm:$0xf]
    %v2950 = vld [vmem:[%s8 + $0xc] sm:$0xf]
    %v2951 = vld [vmem:[%s8 + $0x10] sm:$0xf]
    %v2952 = vld [vmem:[%s8 + $0x14] sm:$0xf]
    %v2953 = vld [vmem:[%s8 + $0x18] sm:$0xf]
    %v2954 = vld [vmem:[%s8 + $0x1c] sm:$0xf]
    %v2955 = vld [vmem:[%s8 + $0x20] sm:$0xf]
    %v2956 = vld [vmem:[%s8 + $0x24] sm:$0xf]
    %v2957 = vld [vmem:[%s8 + $0x28] sm:$0xf]
    %v2958 = vld [vmem:[%s8 + $0x2c] sm:$0xf]
    %v2971 = vunpack.c.l.b16 %v2947
    %v2972 = vunpack.c.l.b16 %v2948
    %v2973 = vunpack.c.l.b16 %v2949
    %v2974 = vunpack.c.l.b16 %v2950
    %v2975 = vunpack.c.l.b16 %v2951
    %v2976 = vunpack.c.l.b16 %v2952
    %v2977 = vunpack.c.l.b16 %v2953
    %v2978 = vunpack.c.l.b16 %v2954
    %v2979 = vunpack.c.l.b16 %v2955
    %v2980 = vunpack.c.l.b16 %v2956
    %v2981 = vunpack.c.l.b16 %v2957
    %v2982 = vunpack.c.l.b16 %v2958
    %v2983 = vpack.c.b16 %v2972, %v2971
    %v2984 = vpack.c.b16 %v2974, %v2973
    %v2985 = vpack.c.b16 %v2976, %v2975
    %v2986 = vpack.c.b16 %v2978, %v2977
    %v2987 = vpack.c.b16 %v2980, %v2979
    %v2988 = vpack.c.b16 %v2982, %v2981
    %v2996 = vsel %vm505, %v2945, 0
    %v2999 = vsel %vm505, %v2946, 0
    %3001 = vmatprep.subr.bf16.mxu0 0
    %3002 = vmatpush1.bf16.msra.mxu0 %v2983
    %3003 = vmatprep.subr.bf16.mxu0 0
    %3004 = vmatpush1.bf16.msra.mxu0 %v2984
    %3005 = vmatprep.subr.bf16.mxu0 0
    %3006 = vmatpush1.bf16.msra.mxu0 %v2985
    %3007 = vmatprep.subr.bf16.mxu0 0
    %3008 = vmatpush1.bf16.msra.mxu0 %v2986
    %3009 = vmatprep.subr.bf16.mxu0 0
    %3010 = vmatpush1.bf16.msra.mxu0 %v2987
    %3011 = vmatprep.subr.bf16.mxu0 0
    %3012 = vmatpush1.bf16.msra.mxu0 %v2988
    %3013 = vmatprep.subr.bf16.mxu0 0
    %3014 = vmatpush1.bf16.msra.mxu0 0
    %3015 = vmatprep.subr.bf16.mxu0 0
    %3016 = vmatpush1.bf16.msra.mxu0 0
    %3017 = vmatprep.subr.bf16.mxu0 0
    %3018 = vmatpush1.bf16.msra.mxu0 0
    %3019 = vmatprep.subr.bf16.mxu0 0
    %3020 = vmatpush1.bf16.msra.mxu0 0
    %3021 = vmatprep.subr.bf16.mxu0 0
    %3022 = vmatpush1.bf16.msra.mxu0 0
    %3023 = vmatprep.subr.bf16.mxu0 0
    %3024 = vmatpush1.bf16.msra.mxu0 0
    %3025 = vmatprep.subr.bf16.mxu0 0
    %3026 = vmatpush1.bf16.msra.mxu0 0
    %3027 = vmatprep.subr.bf16.mxu0 0
    %3028 = vmatpush1.bf16.msra.mxu0 0
    %3029 = vmatprep.subr.bf16.mxu0 0
    %3030 = vmatpush1.bf16.msra.mxu0 0
    %3031 = vmatprep.subr.bf16.mxu0 0
    %3032 = vmatpush1.bf16.msra.mxu0 0
    %3033 = vmatprep.mubr.bf16.mxu0 0
    %3034 = vmatmul.mubr.bf16.gmra.mrb[0].mxu0 %v2996
    %v3035 = vpop.f32.mrb[0].mxu0
    %v3036 = vadd.f32 %v151, %v3035
    %v3037 = vpop.f32.mrb[0].mxu0
    %v3038 = vpop.f32.mrb[0].mxu0
    %v3039 = vadd.f32 %v151, %v3038
    %v3040 = vpop.f32.mrb[0].mxu0
    %3041 = vmatprep.mubr.bf16.mxu0 0
    %3042 = vmatmul.mubr.bf16.gmra.mrb[0].mxu0 %v2999
    %v3043 = vpop.f32.mrb[0].mxu0
    %v3044 = vadd.f32 %v151, %v3043
    %v3045 = vpop.f32.mrb[0].mxu0
    %v3046 = vpop.f32.mrb[0].mxu0
    %v3047 = vadd.f32 %v151, %v3046
    %v3048 = vpop.f32.mrb[0].mxu0
    %3049 = vdwg.mxu0
    %v3050 = vpack.c.bf16 %v3039, %v3036
    %v3051 = vpack.c.bf16 %v3047, %v3044
    %3052 = vmatprep.subr.bf16.mxu0 0
    %3053 = vmatpush1.bf16.msra.mxu0 %v3050
    %3054 = vmatprep.subr.bf16.mxu0 0
    %3055 = vmatpush1.bf16.msra.mxu0 %v3051
    %3056 = vmatprep.subr.bf16.mxu0 0
    %3057 = vmatpush1.bf16.msra.mxu0 0
    %3058 = vmatprep.subr.bf16.mxu0 0
    %3059 = vmatpush1.bf16.msra.mxu0 0
    %3060 = vmatprep.subr.bf16.mxu0 0
    %3061 = vmatpush1.bf16.msra.mxu0 0
    %3062 = vmatprep.subr.bf16.mxu0 0
    %3063 = vmatpush1.bf16.msra.mxu0 0
    %3064 = vmatprep.subr.bf16.mxu0 0
    %3065 = vmatpush1.bf16.msra.mxu0 0
    %3066 = vmatprep.subr.bf16.mxu0 0
    %3067 = vmatpush1.bf16.msra.mxu0 0
    %3068 = vmatprep.subr.bf16.mxu0 0
    %3069 = vmatpush1.bf16.msra.mxu0 0
    %3070 = vmatprep.subr.bf16.mxu0 0
    %3071 = vmatpush1.bf16.msra.mxu0 0
    %3072 = vmatprep.subr.bf16.mxu0 0
    %3073 = vmatpush1.bf16.msra.mxu0 0
    %3074 = vmatprep.subr.bf16.mxu0 0
    %3075 = vmatpush1.bf16.msra.mxu0 0
    %3076 = vmatprep.subr.bf16.mxu0 0
    %3077 = vmatpush1.bf16.msra.mxu0 0
    %3078 = vmatprep.subr.bf16.mxu0 0
    %3079 = vmatpush1.bf16.msra.mxu0 0
    %3080 = vmatprep.subr.bf16.mxu0 0
    %3081 = vmatpush1.bf16.msra.mxu0 0
    %3082 = vmatprep.subr.bf16.mxu0 0
    %3083 = vmatpush1.bf16.msra.mxu0 0
    %3084 = vmatprep.mubr.bf16.mxu0 0
    %3085 = vmatmul.mubr.bf16.gmra.mrb[0].mxu0 %v674
    %v3086 = vpop.f32.mrb[0].mxu0
    %v3087 = vadd.f32 0.0, %v3086
    %v3088 = vpop.f32.mrb[0].mxu0
    %v3089 = vpop.f32.mrb[0].mxu0
    %v3090 = vadd.f32 0.0, %v3089
    %v3091 = vpop.f32.mrb[0].mxu0
    %3092 = vdwg.mxu0
    %v3093 = vpack.c.bf16 %v3090, %v3087
    %3094 = vrot.lane.b32.xlu0 %v2624, 1
    %v3095 = vpop.permute.xlu0 %3094
    %v3098 = vsel %vm718, %v3093, %v3095
    %v3099 = vld [vmem:[%s12] sm:$0xf]
    %v3100 = vld [vmem:[%s12 + $0x4] sm:$0xf]
    %v3101 = vld [vmem:[%s12 + $0x8] sm:$0x7]
    %v3105 = vunpack.c.l.b16 %v3099
    %v3106 = vunpack.c.l.b16 %v3100
    %v3107 = vunpack.c.l.b16 %v3101
    %v3108 = vpack.c.b16 %v3106, %v3105
    %v3109 = vpack.c.b16 %v3107, %v3107
    %v3111 = vsel %vm734, %v3098, 0
    %v3114 = vand.u32 %v3109, %v740
    %3116 = vmatprep.subr.bf16.mxu0 0
    %3117 = vmatpush1.bf16.msra.mxu0 %v3108
    %3118 = vmatprep.subr.bf16.mxu0 0
    %3119 = vmatpush1.bf16.msra.mxu0 %v3114
    %3120 = vmatprep.subr.bf16.mxu0 0
    %3121 = vmatpush1.bf16.msra.mxu0 0
    %3122 = vmatprep.subr.bf16.mxu0 0
    %3123 = vmatpush1.bf16.msra.mxu0 0
    %3124 = vmatprep.subr.bf16.mxu0 0
    %3125 = vmatpush1.bf16.msra.mxu0 0
    %3126 = vmatprep.subr.bf16.mxu0 0
    %3127 = vmatpush1.bf16.msra.mxu0 0
    %3128 = vmatprep.subr.bf16.mxu0 0
    %3129 = vmatpush1.bf16.msra.mxu0 0
    %3130 = vmatprep.subr.bf16.mxu0 0
    %3131 = vmatpush1.bf16.msra.mxu0 0
    %3132 = vmatprep.subr.bf16.mxu0 0
    %3133 = vmatpush1.bf16.msra.mxu0 0
    %3134 = vmatprep.subr.bf16.mxu0 0
    %3135 = vmatpush1.bf16.msra.mxu0 0
    %3136 = vmatprep.subr.bf16.mxu0 0
    %3137 = vmatpush1.bf16.msra.mxu0 0
    %3138 = vmatprep.subr.bf16.mxu0 0
    %3139 = vmatpush1.bf16.msra.mxu0 0
    %3140 = vmatprep.subr.bf16.mxu0 0
    %3141 = vmatpush1.bf16.msra.mxu0 0
    %3142 = vmatprep.subr.bf16.mxu0 0
    %3143 = vmatpush1.bf16.msra.mxu0 0
    %3144 = vmatprep.subr.bf16.mxu0 0
    %3145 = vmatpush1.bf16.msra.mxu0 0
    %3146 = vmatprep.subr.bf16.mxu0 0
    %3147 = vmatpush1.bf16.msra.mxu0 0
    %3148 = vmatprep.mubr.bf16.mxu0 0
    %3149 = vmatmul.mubr.bf16.gmra.mrb[0].mxu0 %v3111
    %v3150 = vpop.f32.mrb[0].mxu0
    %v3151 = vadd.f32 %v232, %v3150
    %v3152 = vpop.f32.mrb[0].mxu0
    %v3153 = vpop.f32.mrb[0].mxu0
    %v3154 = vadd.f32 %v233, %v3153
    %v3155 = vpop.f32.mrb[0].mxu0
    %3156 = vdwg.mxu0
    %v3157 = vxor.u32 %v3151, 2147483648
    %v3158 = vxor.u32 %v3154, 2147483648
    %v3159 = vmul.f32 %v3157, 1.442695
    %v3160 = vpow.pop %v3159
    %v3161 = vmul.f32 %v3158, 1.442695
    %v3162 = vpow.pop %v3161
    %v3163 = vadd.f32 %v3160, 1.0
    %v3164 = vadd.f32 %v3162, 1.0
    %v3165 = vrcp.pop %v3163
    %v3166 = vmul.f32 1.0, %v3165
    %v3167 = vrcp.pop %v3164
    %v3168 = vmul.f32 1.0, %v3167
    %3171 = vrot.lane.b32.xlu0 %v3151, 98
    %v3172 = vpop.permute.xlu0 %3171
    %3173 = vrot.lane.b32.xlu0 %v3154, 98
    %v3174 = vpop.permute.xlu0 %3173
    %v3177 = vmul.f32 %v3166, %v3172
    %v3178 = vmul.f32 %v3168, %v3174
    %3181 = vrot.lane.b32.xlu0 %v3177, 20
    %v3182 = vpop.permute.xlu0 %3181
    %3183 = vrot.lane.b32.xlu0 %v3178, 20
    %v3184 = vpop.permute.xlu0 %3183
    %v3187 = vadd.f32 %v3151, %v3182
    %v3188 = vadd.f32 %v3154, %v3184
    %v3189 = vtanh.pop %v3187
    %v3190 = vtanh.pop %v3188
    %v3191 = vsub.f32 1.0, %v3166
    %v3192 = vsub.f32 1.0, %v3168
    %3195 = vrot.lane.b32.xlu0 %v3189, 118
    %v3196 = vpop.permute.xlu0 %3195
    %3197 = vrot.lane.b32.xlu0 %v3190, 118
    %v3198 = vpop.permute.xlu0 %3197
    %v3201 = vmul.f32 %v3191, %v3196
    %v3202 = vmul.f32 %v3192, %v3198
    %v3203 = vmul.f32 %v3166, %v2612
    %v3204 = vmul.f32 %v3168, %v2613
    %v3205 = vadd.f32 %v3201, %v3203
    %v3206 = vadd.f32 %v3202, %v3204
    %3209 = vrot.lane.b32.xlu0 %v3205, 118
    %v3210 = vpop.permute.xlu0 %3209
    %3211 = vrot.lane.b32.xlu0 %v3206, 118
    %v3212 = vpop.permute.xlu0 %3211
    %3215 = vst.msk [vmem:[#allocation2 + $0x40] sm:$0xff] %vm325, %v3210
    %3216 = vst.msk [vmem:[#allocation2 + $0x48] sm:$0xff] %vm325, %v3212
    %v3217 = vpack.c.bf16 %v3206, %v3205
    %3219 = vrot.lane.b32.xlu0 %v3217, 118
    %v3220 = vpop.permute.xlu0 %3219
    %3222 = vmatprep.subr.bf16.mxu0 0
    %3223 = vmatpush1.bf16.msra.mxu0 %v3220
    %3224 = vmatprep.subr.bf16.mxu0 0
    %3225 = vmatpush1.bf16.msra.mxu0 0
    %3226 = vmatprep.subr.bf16.mxu0 0
    %3227 = vmatpush1.bf16.msra.mxu0 0
    %3228 = vmatprep.subr.bf16.mxu0 0
    %3229 = vmatpush1.bf16.msra.mxu0 0
    %3230 = vmatprep.subr.bf16.mxu0 0
    %3231 = vmatpush1.bf16.msra.mxu0 0
    %3232 = vmatprep.subr.bf16.mxu0 0
    %3233 = vmatpush1.bf16.msra.mxu0 0
    %3234 = vmatprep.subr.bf16.mxu0 0
    %3235 = vmatpush1.bf16.msra.mxu0 0
    %3236 = vmatprep.subr.bf16.mxu0 0
    %3237 = vmatpush1.bf16.msra.mxu0 0
    %3238 = vmatprep.subr.bf16.mxu0 0
    %3239 = vmatpush1.bf16.msra.mxu0 0
    %3240 = vmatprep.subr.bf16.mxu0 0
    %3241 = vmatpush1.bf16.msra.mxu0 0
    %3242 = vmatprep.subr.bf16.mxu0 0
    %3243 = vmatpush1.bf16.msra.mxu0 0
    %3244 = vmatprep.subr.bf16.mxu0 0
    %3245 = vmatpush1.bf16.msra.mxu0 0
    %3246 = vmatprep.subr.bf16.mxu0 0
    %3247 = vmatpush1.bf16.msra.mxu0 0
    %3248 = vmatprep.subr.bf16.mxu0 0
    %3249 = vmatpush1.bf16.msra.mxu0 0
    %3250 = vmatprep.subr.bf16.mxu0 0
    %3251 = vmatpush1.bf16.msra.mxu0 0
    %3252 = vmatprep.subr.bf16.mxu0 0
    %3253 = vmatpush1.bf16.msra.mxu0 0
    %3254 = vmatprep.mubr.bf16.mxu0 0
    %3255 = vmatmul.mubr.bf16.gmra.mrb[0].mxu0 %v236
    %v3256 = vpop.f32.mrb[0].mxu0
    %v3257 = vadd.f32 0.0, %v3256
    %v3258 = vpop.f32.mrb[0].mxu0
    %v3259 = vpop.f32.mrb[0].mxu0
    %v3260 = vadd.f32 0.0, %v3259
    %v3261 = vpop.f32.mrb[0].mxu0
    %3262 = vmatprep.mubr.bf16.mxu0 0
    %3263 = vmatmul.mubr.bf16.gmra.mrb[0].mxu0 %v239
    %v3264 = vpop.f32.mrb[0].mxu0
    %v3265 = vadd.f32 0.0, %v3264
    %v3266 = vpop.f32.mrb[0].mxu0
    %v3267 = vpop.f32.mrb[0].mxu0
    %v3268 = vadd.f32 0.0, %v3267
    %v3269 = vpop.f32.mrb[0].mxu0
    %3270 = vmatprep.mubr.bf16.mxu0 0
    %3271 = vmatmul.mubr.bf16.gmra.mrb[0].mxu0 %v242
    %v3272 = vpop.f32.mrb[0].mxu0
    %v3273 = vadd.f32 0.0, %v3272
    %v3274 = vpop.f32.mrb[0].mxu0
    %v3275 = vpop.f32.mrb[0].mxu0
    %v3276 = vadd.f32 0.0, %v3275
    %v3277 = vpop.f32.mrb[0].mxu0
    %3278 = vmatprep.mubr.bf16.mxu0 0
    %3279 = vmatmul.mubr.bf16.gmra.mrb[0].mxu0 %v245
    %v3280 = vpop.f32.mrb[0].mxu0
    %v3281 = vadd.f32 0.0, %v3280
    %v3282 = vpop.f32.mrb[0].mxu0
    %v3283 = vpop.f32.mrb[0].mxu0
    %v3284 = vadd.f32 0.0, %v3283
    %v3285 = vpop.f32.mrb[0].mxu0
    %3286 = vdwg.mxu0
    %v3287 = vpack.c.bf16 %v3260, %v3257
    %v3288 = vpack.c.bf16 %v3268, %v3265
    %v3289 = vpack.c.bf16 %v3276, %v3273
    %v3290 = vpack.c.bf16 %v3284, %v3281
    %v3291 = vld [vmem:[%s3] sm:$0xf]
    %v3292 = vld [vmem:[%s3 + $0x4] sm:$0x1]
    %v3293 = vld [vmem:[%s4] sm:$0xf]
    %v3294 = vld [vmem:[%s4 + $0x4] sm:$0x1]
    %v3297 = vunpack.c.l.b16 %v3293
    %v3298 = vunpack.c.l.b16 %v3294
    %v3299 = vpack.c.b16 %v3298, %v3297
    %v3301 = vsel %vm325, %v3289, 0
    %v3304 = vsel %vm325, %v3290, 0
    %v3307 = vsel %vm175, %v3299, 0
    %3309 = vmatprep.subr.bf16.mxu0 0
    %3310 = vmatpush1.bf16.msra.mxu0 %v3307
    %3311 = vmatprep.subr.bf16.mxu0 0
    %3312 = vmatpush1.bf16.msra.mxu0 0
    %3313 = vmatprep.subr.bf16.mxu0 0
    %3314 = vmatpush1.bf16.msra.mxu0 0
    %3315 = vmatprep.subr.bf16.mxu0 0
    %3316 = vmatpush1.bf16.msra.mxu0 0
    %3317 = vmatprep.subr.bf16.mxu0 0
    %3318 = vmatpush1.bf16.msra.mxu0 0
    %3319 = vmatprep.subr.bf16.mxu0 0
    %3320 = vmatpush1.bf16.msra.mxu0 0
    %3321 = vmatprep.subr.bf16.mxu0 0
    %3322 = vmatpush1.bf16.msra.mxu0 0
    %3323 = vmatprep.subr.bf16.mxu0 0
    %3324 = vmatpush1.bf16.msra.mxu0 0
    %3325 = vmatprep.subr.bf16.mxu0 0
    %3326 = vmatpush1.bf16.msra.mxu0 0
    %3327 = vmatprep.subr.bf16.mxu0 0
    %3328 = vmatpush1.bf16.msra.mxu0 0
    %3329 = vmatprep.subr.bf16.mxu0 0
    %3330 = vmatpush1.bf16.msra.mxu0 0
    %3331 = vmatprep.subr.bf16.mxu0 0
    %3332 = vmatpush1.bf16.msra.mxu0 0
    %3333 = vmatprep.subr.bf16.mxu0 0
    %3334 = vmatpush1.bf16.msra.mxu0 0
    %3335 = vmatprep.subr.bf16.mxu0 0
    %3336 = vmatpush1.bf16.msra.mxu0 0
    %3337 = vmatprep.subr.bf16.mxu0 0
    %3338 = vmatpush1.bf16.msra.mxu0 0
    %3339 = vmatprep.subr.bf16.mxu0 0
    %3340 = vmatpush1.bf16.msra.mxu0 0
    %3341 = vmatprep.mubr.bf16.mxu0 0
    %3342 = vmatmul.mubr.bf16.gmra.mrb[0].mxu0 %v3301
    %v3343 = vpop.f32.mrb[0].mxu0
    %v3344 = vadd.f32 0.0, %v3343
    %v3345 = vpop.f32.mrb[0].mxu0
    %v3346 = vpop.f32.mrb[0].mxu0
    %v3347 = vadd.f32 0.0, %v3346
    %v3348 = vpop.f32.mrb[0].mxu0
    %3349 = vmatprep.mubr.bf16.mxu0 0
    %3350 = vmatmul.mubr.bf16.gmra.mrb[0].mxu0 %v3304
    %v3351 = vpop.f32.mrb[0].mxu0
    %v3352 = vadd.f32 0.0, %v3351
    %v3353 = vpop.f32.mrb[0].mxu0
    %v3354 = vpop.f32.mrb[0].mxu0
    %v3355 = vadd.f32 0.0, %v3354
    %v3356 = vpop.f32.mrb[0].mxu0
    %3357 = vdwg.mxu0
    %v3360 = vunpack.c.l.b16 %v3291
    %v3361 = vunpack.c.l.b16 %v3292
    %v3362 = vpack.c.b16 %v3361, %v3360
    %v3364 = vsel %vm325, %v3287, 0
    %v3367 = vsel %vm325, %v3288, 0
    %v3370 = vsel %vm175, %v3362, 0
    %3372 = vmatprep.subr.bf16.mxu0 0
    %3373 = vmatpush1.bf16.msra.mxu0 %v3370
    %3374 = vmatprep.subr.bf16.mxu0 0
    %3375 = vmatpush1.bf16.msra.mxu0 0
    %3376 = vmatprep.subr.bf16.mxu0 0
    %3377 = vmatpush1.bf16.msra.mxu0 0
    %3378 = vmatprep.subr.bf16.mxu0 0
    %3379 = vmatpush1.bf16.msra.mxu0 0
    %3380 = vmatprep.subr.bf16.mxu0 0
    %3381 = vmatpush1.bf16.msra.mxu0 0
    %3382 = vmatprep.subr.bf16.mxu0 0
    %3383 = vmatpush1.bf16.msra.mxu0 0
    %3384 = vmatprep.subr.bf16.mxu0 0
    %3385 = vmatpush1.bf16.msra.mxu0 0
    %3386 = vmatprep.subr.bf16.mxu0 0
    %3387 = vmatpush1.bf16.msra.mxu0 0
    %3388 = vmatprep.subr.bf16.mxu0 0
    %3389 = vmatpush1.bf16.msra.mxu0 0
    %3390 = vmatprep.subr.bf16.mxu0 0
    %3391 = vmatpush1.bf16.msra.mxu0 0
    %3392 = vmatprep.subr.bf16.mxu0 0
    %3393 = vmatpush1.bf16.msra.mxu0 0
    %3394 = vmatprep.subr.bf16.mxu0 0
    %3395 = vmatpush1.bf16.msra.mxu0 0
    %3396 = vmatprep.subr.bf16.mxu0 0
    %3397 = vmatpush1.bf16.msra.mxu0 0
    %3398 = vmatprep.subr.bf16.mxu0 0
    %3399 = vmatpush1.bf16.msra.mxu0 0
    %3400 = vmatprep.subr.bf16.mxu0 0
    %3401 = vmatpush1.bf16.msra.mxu0 0
    %3402 = vmatprep.subr.bf16.mxu0 0
    %3403 = vmatpush1.bf16.msra.mxu0 0
    %3404 = vmatprep.mubr.bf16.mxu0 0
    %3405 = vmatmul.mubr.bf16.gmra.mrb[0].mxu0 %v3364
    %v3406 = vpop.f32.mrb[0].mxu0
    %v3407 = vadd.f32 %v3344, %v3406
    %v3408 = vpop.f32.mrb[0].mxu0
    %v3409 = vpop.f32.mrb[0].mxu0
    %v3410 = vadd.f32 %v3347, %v3409
    %v3411 = vpop.f32.mrb[0].mxu0
    %3412 = vmatprep.mubr.bf16.mxu0 0
    %3413 = vmatmul.mubr.bf16.gmra.mrb[0].mxu0 %v3367
    %v3414 = vpop.f32.mrb[0].mxu0
    %v3415 = vadd.f32 %v3352, %v3414
    %v3416 = vpop.f32.mrb[0].mxu0
    %v3417 = vpop.f32.mrb[0].mxu0
    %v3418 = vadd.f32 %v3355, %v3417
    %v3419 = vpop.f32.mrb[0].mxu0
    %3420 = vdwg.mxu0
    %v3421 = vadd.f32 %v3407, %v137
    %v3422 = vadd.f32 %v3410, %v137
    %v3423 = vadd.f32 %v3415, %v137
    %v3424 = vadd.f32 %v3418, %v137
    %v3425 = vmax.f32 %v3421, 0.0
    %v3426 = vmax.f32 %v3422, 0.0
    %v3427 = vmax.f32 %v3423, 0.0
    %v3428 = vmax.f32 %v3424, 0.0
    %v3429 = vpack.c.bf16 %v3426, %v3425
    %v3430 = vpack.c.bf16 %v3428, %v3427
    %v3431 = vld [vmem:[%s6] sm:$0xf]
    %v3432 = vld [vmem:[%s6 + $0x4] sm:$0xf]
    %v3433 = vld [vmem:[%s6 + $0x8] sm:$0xf]
    %v3434 = vld [vmem:[%s6 + $0xc] sm:$0xf]
    %v3435 = vld [vmem:[%s6 + $0x10] sm:$0xf]
    %v3436 = vld [vmem:[%s6 + $0x14] sm:$0xf]
    %v3437 = vld [vmem:[%s6 + $0x18] sm:$0xf]
    %v3438 = vld [vmem:[%s6 + $0x1c] sm:$0xf]
    %v3439 = vld [vmem:[%s6 + $0x20] sm:$0xf]
    %v3440 = vld [vmem:[%s6 + $0x24] sm:$0xf]
    %v3441 = vld [vmem:[%s6 + $0x28] sm:$0xf]
    %v3442 = vld [vmem:[%s6 + $0x2c] sm:$0xf]
    %v3455 = vunpack.c.l.b16 %v3431
    %v3456 = vunpack.c.l.b16 %v3432
    %v3457 = vunpack.c.l.b16 %v3433
    %v3458 = vunpack.c.l.b16 %v3434
    %v3459 = vunpack.c.l.b16 %v3435
    %v3460 = vunpack.c.l.b16 %v3436
    %v3461 = vunpack.c.l.b16 %v3437
    %v3462 = vunpack.c.l.b16 %v3438
    %v3463 = vunpack.c.l.b16 %v3439
    %v3464 = vunpack.c.l.b16 %v3440
    %v3465 = vunpack.c.l.b16 %v3441
    %v3466 = vunpack.c.l.b16 %v3442
    %v3467 = vpack.c.b16 %v3456, %v3455
    %v3468 = vpack.c.b16 %v3458, %v3457
    %v3469 = vpack.c.b16 %v3460, %v3459
    %v3470 = vpack.c.b16 %v3462, %v3461
    %v3471 = vpack.c.b16 %v3464, %v3463
    %v3472 = vpack.c.b16 %v3466, %v3465
    %v3480 = vsel %vm505, %v3429, 0
    %v3483 = vsel %vm505, %v3430, 0
    %3485 = vmatprep.subr.bf16.mxu0 0
    %3486 = vmatpush1.bf16.msra.mxu0 %v3467
    %3487 = vmatprep.subr.bf16.mxu0 0
    %3488 = vmatpush1.bf16.msra.mxu0 %v3468
    %3489 = vmatprep.subr.bf16.mxu0 0
    %3490 = vmatpush1.bf16.msra.mxu0 %v3469
    %3491 = vmatprep.subr.bf16.mxu0 0
    %3492 = vmatpush1.bf16.msra.mxu0 %v3470
    %3493 = vmatprep.subr.bf16.mxu0 0
    %3494 = vmatpush1.bf16.msra.mxu0 %v3471
    %3495 = vmatprep.subr.bf16.mxu0 0
    %3496 = vmatpush1.bf16.msra.mxu0 %v3472
    %3497 = vmatprep.subr.bf16.mxu0 0
    %3498 = vmatpush1.bf16.msra.mxu0 0
    %3499 = vmatprep.subr.bf16.mxu0 0
    %3500 = vmatpush1.bf16.msra.mxu0 0
    %3501 = vmatprep.subr.bf16.mxu0 0
    %3502 = vmatpush1.bf16.msra.mxu0 0
    %3503 = vmatprep.subr.bf16.mxu0 0
    %3504 = vmatpush1.bf16.msra.mxu0 0
    %3505 = vmatprep.subr.bf16.mxu0 0
    %3506 = vmatpush1.bf16.msra.mxu0 0
    %3507 = vmatprep.subr.bf16.mxu0 0
    %3508 = vmatpush1.bf16.msra.mxu0 0
    %3509 = vmatprep.subr.bf16.mxu0 0
    %3510 = vmatpush1.bf16.msra.mxu0 0
    %3511 = vmatprep.subr.bf16.mxu0 0
    %3512 = vmatpush1.bf16.msra.mxu0 0
    %3513 = vmatprep.subr.bf16.mxu0 0
    %3514 = vmatpush1.bf16.msra.mxu0 0
    %3515 = vmatprep.subr.bf16.mxu0 0
    %3516 = vmatpush1.bf16.msra.mxu0 0
    %3517 = vmatprep.mubr.bf16.mxu0 0
    %3518 = vmatmul.mubr.bf16.gmra.mrb[0].mxu0 %v3480
    %v3519 = vpop.f32.mrb[0].mxu0
    %v3520 = vadd.f32 %v144, %v3519
    %v3521 = vpop.f32.mrb[0].mxu0
    %v3522 = vpop.f32.mrb[0].mxu0
    %v3523 = vadd.f32 %v144, %v3522
    %v3524 = vpop.f32.mrb[0].mxu0
    %3525 = vmatprep.mubr.bf16.mxu0 0
    %3526 = vmatmul.mubr.bf16.gmra.mrb[0].mxu0 %v3483
    %v3527 = vpop.f32.mrb[0].mxu0
    %v3528 = vadd.f32 %v144, %v3527
    %v3529 = vpop.f32.mrb[0].mxu0
    %v3530 = vpop.f32.mrb[0].mxu0
    %v3531 = vadd.f32 %v144, %v3530
    %v3532 = vpop.f32.mrb[0].mxu0
    %3533 = vdwg.mxu0
    %v3534 = vmax.f32 %v3520, 0.0
    %v3535 = vmax.f32 %v3523, 0.0
    %v3536 = vmax.f32 %v3528, 0.0
    %v3537 = vmax.f32 %v3531, 0.0
    %v3538 = vpack.c.bf16 %v3535, %v3534
    %v3539 = vpack.c.bf16 %v3537, %v3536
    %v3540 = vld [vmem:[%s8] sm:$0xf]
    %v3541 = vld [vmem:[%s8 + $0x4] sm:$0xf]
    %v3542 = vld [vmem:[%s8 + $0x8] sm:$0xf]
    %v3543 = vld [vmem:[%s8 + $0xc] sm:$0xf]
    %v3544 = vld [vmem:[%s8 + $0x10] sm:$0xf]
    %v3545 = vld [vmem:[%s8 + $0x14] sm:$0xf]
    %v3546 = vld [vmem:[%s8 + $0x18] sm:$0xf]
    %v3547 = vld [vmem:[%s8 + $0x1c] sm:$0xf]
    %v3548 = vld [vmem:[%s8 + $0x20] sm:$0xf]
    %v3549 = vld [vmem:[%s8 + $0x24] sm:$0xf]
    %v3550 = vld [vmem:[%s8 + $0x28] sm:$0xf]
    %v3551 = vld [vmem:[%s8 + $0x2c] sm:$0xf]
    %v3564 = vunpack.c.l.b16 %v3540
    %v3565 = vunpack.c.l.b16 %v3541
    %v3566 = vunpack.c.l.b16 %v3542
    %v3567 = vunpack.c.l.b16 %v3543
    %v3568 = vunpack.c.l.b16 %v3544
    %v3569 = vunpack.c.l.b16 %v3545
    %v3570 = vunpack.c.l.b16 %v3546
    %v3571 = vunpack.c.l.b16 %v3547
    %v3572 = vunpack.c.l.b16 %v3548
    %v3573 = vunpack.c.l.b16 %v3549
    %v3574 = vunpack.c.l.b16 %v3550
    %v3575 = vunpack.c.l.b16 %v3551
    %v3576 = vpack.c.b16 %v3565, %v3564
    %v3577 = vpack.c.b16 %v3567, %v3566
    %v3578 = vpack.c.b16 %v3569, %v3568
    %v3579 = vpack.c.b16 %v3571, %v3570
    %v3580 = vpack.c.b16 %v3573, %v3572
    %v3581 = vpack.c.b16 %v3575, %v3574
    %v3589 = vsel %vm505, %v3538, 0
    %v3592 = vsel %vm505, %v3539, 0
    %3594 = vmatprep.subr.bf16.mxu0 0
    %3595 = vmatpush1.bf16.msra.mxu0 %v3576
    %3596 = vmatprep.subr.bf16.mxu0 0
    %3597 = vmatpush1.bf16.msra.mxu0 %v3577
    %3598 = vmatprep.subr.bf16.mxu0 0
    %3599 = vmatpush1.bf16.msra.mxu0 %v3578
    %3600 = vmatprep.subr.bf16.mxu0 0
    %3601 = vmatpush1.bf16.msra.mxu0 %v3579
    %3602 = vmatprep.subr.bf16.mxu0 0
    %3603 = vmatpush1.bf16.msra.mxu0 %v3580
    %3604 = vmatprep.subr.bf16.mxu0 0
    %3605 = vmatpush1.bf16.msra.mxu0 %v3581
    %3606 = vmatprep.subr.bf16.mxu0 0
    %3607 = vmatpush1.bf16.msra.mxu0 0
    %3608 = vmatprep.subr.bf16.mxu0 0
    %3609 = vmatpush1.bf16.msra.mxu0 0
    %3610 = vmatprep.subr.bf16.mxu0 0
    %3611 = vmatpush1.bf16.msra.mxu0 0
    %3612 = vmatprep.subr.bf16.mxu0 0
    %3613 = vmatpush1.bf16.msra.mxu0 0
    %3614 = vmatprep.subr.bf16.mxu0 0
    %3615 = vmatpush1.bf16.msra.mxu0 0
    %3616 = vmatprep.subr.bf16.mxu0 0
    %3617 = vmatpush1.bf16.msra.mxu0 0
    %3618 = vmatprep.subr.bf16.mxu0 0
    %3619 = vmatpush1.bf16.msra.mxu0 0
    %3620 = vmatprep.subr.bf16.mxu0 0
    %3621 = vmatpush1.bf16.msra.mxu0 0
    %3622 = vmatprep.subr.bf16.mxu0 0
    %3623 = vmatpush1.bf16.msra.mxu0 0
    %3624 = vmatprep.subr.bf16.mxu0 0
    %3625 = vmatpush1.bf16.msra.mxu0 0
    %3626 = vmatprep.mubr.bf16.mxu0 0
    %3627 = vmatmul.mubr.bf16.gmra.mrb[0].mxu0 %v3589
    %v3628 = vpop.f32.mrb[0].mxu0
    %v3629 = vadd.f32 %v151, %v3628
    %v3630 = vpop.f32.mrb[0].mxu0
    %v3631 = vpop.f32.mrb[0].mxu0
    %v3632 = vadd.f32 %v151, %v3631
    %v3633 = vpop.f32.mrb[0].mxu0
    %3634 = vmatprep.mubr.bf16.mxu0 0
    %3635 = vmatmul.mubr.bf16.gmra.mrb[0].mxu0 %v3592
    %v3636 = vpop.f32.mrb[0].mxu0
    %v3637 = vadd.f32 %v151, %v3636
    %v3638 = vpop.f32.mrb[0].mxu0
    %v3639 = vpop.f32.mrb[0].mxu0
    %v3640 = vadd.f32 %v151, %v3639
    %v3641 = vpop.f32.mrb[0].mxu0
    %3642 = vdwg.mxu0
    %v3643 = vpack.c.bf16 %v3632, %v3629
    %v3644 = vpack.c.bf16 %v3640, %v3637
    %3645 = vmatprep.subr.bf16.mxu0 0
    %3646 = vmatpush1.bf16.msra.mxu0 %v3643
    %3647 = vmatprep.subr.bf16.mxu0 0
    %3648 = vmatpush1.bf16.msra.mxu0 %v3644
    %3649 = vmatprep.subr.bf16.mxu0 0
    %3650 = vmatpush1.bf16.msra.mxu0 0
    %3651 = vmatprep.subr.bf16.mxu0 0
    %3652 = vmatpush1.bf16.msra.mxu0 0
    %3653 = vmatprep.subr.bf16.mxu0 0
    %3654 = vmatpush1.bf16.msra.mxu0 0
    %3655 = vmatprep.subr.bf16.mxu0 0
    %3656 = vmatpush1.bf16.msra.mxu0 0
    %3657 = vmatprep.subr.bf16.mxu0 0
    %3658 = vmatpush1.bf16.msra.mxu0 0
    %3659 = vmatprep.subr.bf16.mxu0 0
    %3660 = vmatpush1.bf16.msra.mxu0 0
    %3661 = vmatprep.subr.bf16.mxu0 0
    %3662 = vmatpush1.bf16.msra.mxu0 0
    %3663 = vmatprep.subr.bf16.mxu0 0
    %3664 = vmatpush1.bf16.msra.mxu0 0
    %3665 = vmatprep.subr.bf16.mxu0 0
    %3666 = vmatpush1.bf16.msra.mxu0 0
    %3667 = vmatprep.subr.bf16.mxu0 0
    %3668 = vmatpush1.bf16.msra.mxu0 0
    %3669 = vmatprep.subr.bf16.mxu0 0
    %3670 = vmatpush1.bf16.msra.mxu0 0
    %3671 = vmatprep.subr.bf16.mxu0 0
    %3672 = vmatpush1.bf16.msra.mxu0 0
    %3673 = vmatprep.subr.bf16.mxu0 0
    %3674 = vmatpush1.bf16.msra.mxu0 0
    %3675 = vmatprep.subr.bf16.mxu0 0
    %3676 = vmatpush1.bf16.msra.mxu0 0
    %3677 = vmatprep.mubr.bf16.mxu0 0
    %3678 = vmatmul.mubr.bf16.gmra.mrb[0].mxu0 %v674
    %v3679 = vpop.f32.mrb[0].mxu0
    %v3680 = vadd.f32 0.0, %v3679
    %v3681 = vpop.f32.mrb[0].mxu0
    %v3682 = vpop.f32.mrb[0].mxu0
    %v3683 = vadd.f32 0.0, %v3682
    %v3684 = vpop.f32.mrb[0].mxu0
    %3685 = vdwg.mxu0
    %v3686 = vpack.c.bf16 %v3683, %v3680
    %3687 = vrot.lane.b32.xlu0 %v3217, 1
    %v3688 = vpop.permute.xlu0 %3687
    %v3691 = vsel %vm718, %v3686, %v3688
    %v3692 = vld [vmem:[%s12] sm:$0xf]
    %v3693 = vld [vmem:[%s12 + $0x4] sm:$0xf]
    %v3694 = vld [vmem:[%s12 + $0x8] sm:$0x7]
    %v3698 = vunpack.c.l.b16 %v3692
    %v3699 = vunpack.c.l.b16 %v3693
    %v3700 = vunpack.c.l.b16 %v3694
    %v3701 = vpack.c.b16 %v3699, %v3698
    %v3702 = vpack.c.b16 %v3700, %v3700
    %v3704 = vsel %vm734, %v3691, 0
    %v3707 = vand.u32 %v3702, %v740
    %3709 = vmatprep.subr.bf16.mxu0 0
    %3710 = vmatpush1.bf16.msra.mxu0 %v3701
    %3711 = vmatprep.subr.bf16.mxu0 0
    %3712 = vmatpush1.bf16.msra.mxu0 %v3707
    %3713 = vmatprep.subr.bf16.mxu0 0
    %3714 = vmatpush1.bf16.msra.mxu0 0
    %3715 = vmatprep.subr.bf16.mxu0 0
    %3716 = vmatpush1.bf16.msra.mxu0 0
    %3717 = vmatprep.subr.bf16.mxu0 0
    %3718 = vmatpush1.bf16.msra.mxu0 0
    %3719 = vmatprep.subr.bf16.mxu0 0
    %3720 = vmatpush1.bf16.msra.mxu0 0
    %3721 = vmatprep.subr.bf16.mxu0 0
    %3722 = vmatpush1.bf16.msra.mxu0 0
    %3723 = vmatprep.subr.bf16.mxu0 0
    %3724 = vmatpush1.bf16.msra.mxu0 0
    %3725 = vmatprep.subr.bf16.mxu0 0
    %3726 = vmatpush1.bf16.msra.mxu0 0
    %3727 = vmatprep.subr.bf16.mxu0 0
    %3728 = vmatpush1.bf16.msra.mxu0 0
    %3729 = vmatprep.subr.bf16.mxu0 0
    %3730 = vmatpush1.bf16.msra.mxu0 0
    %3731 = vmatprep.subr.bf16.mxu0 0
    %3732 = vmatpush1.bf16.msra.mxu0 0
    %3733 = vmatprep.subr.bf16.mxu0 0
    %3734 = vmatpush1.bf16.msra.mxu0 0
    %3735 = vmatprep.subr.bf16.mxu0 0
    %3736 = vmatpush1.bf16.msra.mxu0 0
    %3737 = vmatprep.subr.bf16.mxu0 0
    %3738 = vmatpush1.bf16.msra.mxu0 0
    %3739 = vmatprep.subr.bf16.mxu0 0
    %3740 = vmatpush1.bf16.msra.mxu0 0
    %3741 = vmatprep.mubr.bf16.mxu0 0
    %3742 = vmatmul.mubr.bf16.gmra.mrb[0].mxu0 %v3704
    %v3743 = vpop.f32.mrb[0].mxu0
    %v3744 = vadd.f32 %v232, %v3743
    %v3745 = vpop.f32.mrb[0].mxu0
    %v3746 = vpop.f32.mrb[0].mxu0
    %v3747 = vadd.f32 %v233, %v3746
    %v3748 = vpop.f32.mrb[0].mxu0
    %3749 = vdwg.mxu0
    %v3750 = vxor.u32 %v3744, 2147483648
    %v3751 = vxor.u32 %v3747, 2147483648
    %v3752 = vmul.f32 %v3750, 1.442695
    %v3753 = vpow.pop %v3752
    %v3754 = vmul.f32 %v3751, 1.442695
    %v3755 = vpow.pop %v3754
    %v3756 = vadd.f32 %v3753, 1.0
    %v3757 = vadd.f32 %v3755, 1.0
    %v3758 = vrcp.pop %v3756
    %v3759 = vmul.f32 1.0, %v3758
    %v3760 = vrcp.pop %v3757
    %v3761 = vmul.f32 1.0, %v3760
    %3764 = vrot.lane.b32.xlu0 %v3744, 98
    %v3765 = vpop.permute.xlu0 %3764
    %3766 = vrot.lane.b32.xlu0 %v3747, 98
    %v3767 = vpop.permute.xlu0 %3766
    %v3770 = vmul.f32 %v3759, %v3765
    %v3771 = vmul.f32 %v3761, %v3767
    %3774 = vrot.lane.b32.xlu0 %v3770, 20
    %v3775 = vpop.permute.xlu0 %3774
    %3776 = vrot.lane.b32.xlu0 %v3771, 20
    %v3777 = vpop.permute.xlu0 %3776
    %v3780 = vadd.f32 %v3744, %v3775
    %v3781 = vadd.f32 %v3747, %v3777
    %v3782 = vtanh.pop %v3780
    %v3783 = vtanh.pop %v3781
    %v3784 = vsub.f32 1.0, %v3759
    %v3785 = vsub.f32 1.0, %v3761
    %3788 = vrot.lane.b32.xlu0 %v3782, 118
    %v3789 = vpop.permute.xlu0 %3788
    %3790 = vrot.lane.b32.xlu0 %v3783, 118
    %v3791 = vpop.permute.xlu0 %3790
    %v3794 = vmul.f32 %v3784, %v3789
    %v3795 = vmul.f32 %v3785, %v3791
    %v3796 = vmul.f32 %v3759, %v3205
    %v3797 = vmul.f32 %v3761, %v3206
    %v3798 = vadd.f32 %v3794, %v3796
    %v3799 = vadd.f32 %v3795, %v3797
    %3802 = vrot.lane.b32.xlu0 %v3798, 118
    %v3803 = vpop.permute.xlu0 %3802
    %3804 = vrot.lane.b32.xlu0 %v3799, 118
    %v3805 = vpop.permute.xlu0 %3804
    %3808 = vst.msk [vmem:[#allocation2 + $0x50] sm:$0xff] %vm325, %v3803
    %3809 = vst.msk [vmem:[#allocation2 + $0x58] sm:$0xff] %vm325, %v3805
    %v3810 = vpack.c.bf16 %v3799, %v3798
    %3812 = vrot.lane.b32.xlu0 %v3810, 118
    %v3813 = vpop.permute.xlu0 %3812
    %3815 = vmatprep.subr.bf16.mxu0 0
    %3816 = vmatpush1.bf16.msra.mxu0 %v3813
    %3817 = vmatprep.subr.bf16.mxu0 0
    %3818 = vmatpush1.bf16.msra.mxu0 0
    %3819 = vmatprep.subr.bf16.mxu0 0
    %3820 = vmatpush1.bf16.msra.mxu0 0
    %3821 = vmatprep.subr.bf16.mxu0 0
    %3822 = vmatpush1.bf16.msra.mxu0 0
    %3823 = vmatprep.subr.bf16.mxu0 0
    %3824 = vmatpush1.bf16.msra.mxu0 0
    %3825 = vmatprep.subr.bf16.mxu0 0
    %3826 = vmatpush1.bf16.msra.mxu0 0
    %3827 = vmatprep.subr.bf16.mxu0 0
    %3828 = vmatpush1.bf16.msra.mxu0 0
    %3829 = vmatprep.subr.bf16.mxu0 0
    %3830 = vmatpush1.bf16.msra.mxu0 0
    %3831 = vmatprep.subr.bf16.mxu0 0
    %3832 = vmatpush1.bf16.msra.mxu0 0
    %3833 = vmatprep.subr.bf16.mxu0 0
    %3834 = vmatpush1.bf16.msra.mxu0 0
    %3835 = vmatprep.subr.bf16.mxu0 0
    %3836 = vmatpush1.bf16.msra.mxu0 0
    %3837 = vmatprep.subr.bf16.mxu0 0
    %3838 = vmatpush1.bf16.msra.mxu0 0
    %3839 = vmatprep.subr.bf16.mxu0 0
    %3840 = vmatpush1.bf16.msra.mxu0 0
    %3841 = vmatprep.subr.bf16.mxu0 0
    %3842 = vmatpush1.bf16.msra.mxu0 0
    %3843 = vmatprep.subr.bf16.mxu0 0
    %3844 = vmatpush1.bf16.msra.mxu0 0
    %3845 = vmatprep.subr.bf16.mxu0 0
    %3846 = vmatpush1.bf16.msra.mxu0 0
    %3847 = vmatprep.mubr.bf16.mxu0 0
    %3848 = vmatmul.mubr.bf16.gmra.mrb[0].mxu0 %v236
    %v3849 = vpop.f32.mrb[0].mxu0
    %v3850 = vadd.f32 0.0, %v3849
    %v3851 = vpop.f32.mrb[0].mxu0
    %v3852 = vpop.f32.mrb[0].mxu0
    %v3853 = vadd.f32 0.0, %v3852
    %v3854 = vpop.f32.mrb[0].mxu0
    %3855 = vmatprep.mubr.bf16.mxu0 0
    %3856 = vmatmul.mubr.bf16.gmra.mrb[0].mxu0 %v239
    %v3857 = vpop.f32.mrb[0].mxu0
    %v3858 = vadd.f32 0.0, %v3857
    %v3859 = vpop.f32.mrb[0].mxu0
    %v3860 = vpop.f32.mrb[0].mxu0
    %v3861 = vadd.f32 0.0, %v3860
    %v3862 = vpop.f32.mrb[0].mxu0
    %3863 = vmatprep.mubr.bf16.mxu0 0
    %3864 = vmatmul.mubr.bf16.gmra.mrb[0].mxu0 %v242
    %v3865 = vpop.f32.mrb[0].mxu0
    %v3866 = vadd.f32 0.0, %v3865
    %v3867 = vpop.f32.mrb[0].mxu0
    %v3868 = vpop.f32.mrb[0].mxu0
    %v3869 = vadd.f32 0.0, %v3868
    %v3870 = vpop.f32.mrb[0].mxu0
    %3871 = vmatprep.mubr.bf16.mxu0 0
    %3872 = vmatmul.mubr.bf16.gmra.mrb[0].mxu0 %v245
    %v3873 = vpop.f32.mrb[0].mxu0
    %v3874 = vadd.f32 0.0, %v3873
    %v3875 = vpop.f32.mrb[0].mxu0
    %v3876 = vpop.f32.mrb[0].mxu0
    %v3877 = vadd.f32 0.0, %v3876
    %v3878 = vpop.f32.mrb[0].mxu0
    %3879 = vdwg.mxu0
    %v3880 = vpack.c.bf16 %v3853, %v3850
    %v3881 = vpack.c.bf16 %v3861, %v3858
    %v3882 = vpack.c.bf16 %v3869, %v3866
    %v3883 = vpack.c.bf16 %v3877, %v3874
    %v3884 = vld [vmem:[%s3] sm:$0xf]
    %v3885 = vld [vmem:[%s3 + $0x4] sm:$0x1]
    %v3886 = vld [vmem:[%s4] sm:$0xf]
    %v3887 = vld [vmem:[%s4 + $0x4] sm:$0x1]
    %v3890 = vunpack.c.l.b16 %v3886
    %v3891 = vunpack.c.l.b16 %v3887
    %v3892 = vpack.c.b16 %v3891, %v3890
    %v3894 = vsel %vm325, %v3882, 0
    %v3897 = vsel %vm325, %v3883, 0
    %v3900 = vsel %vm175, %v3892, 0
    %3902 = vmatprep.subr.bf16.mxu0 0
    %3903 = vmatpush1.bf16.msra.mxu0 %v3900
    %3904 = vmatprep.subr.bf16.mxu0 0
    %3905 = vmatpush1.bf16.msra.mxu0 0
    %3906 = vmatprep.subr.bf16.mxu0 0
    %3907 = vmatpush1.bf16.msra.mxu0 0
    %3908 = vmatprep.subr.bf16.mxu0 0
    %3909 = vmatpush1.bf16.msra.mxu0 0
    %3910 = vmatprep.subr.bf16.mxu0 0
    %3911 = vmatpush1.bf16.msra.mxu0 0
    %3912 = vmatprep.subr.bf16.mxu0 0
    %3913 = vmatpush1.bf16.msra.mxu0 0
    %3914 = vmatprep.subr.bf16.mxu0 0
    %3915 = vmatpush1.bf16.msra.mxu0 0
    %3916 = vmatprep.subr.bf16.mxu0 0
    %3917 = vmatpush1.bf16.msra.mxu0 0
    %3918 = vmatprep.subr.bf16.mxu0 0
    %3919 = vmatpush1.bf16.msra.mxu0 0
    %3920 = vmatprep.subr.bf16.mxu0 0
    %3921 = vmatpush1.bf16.msra.mxu0 0
    %3922 = vmatprep.subr.bf16.mxu0 0
    %3923 = vmatpush1.bf16.msra.mxu0 0
    %3924 = vmatprep.subr.bf16.mxu0 0
    %3925 = vmatpush1.bf16.msra.mxu0 0
    %3926 = vmatprep.subr.bf16.mxu0 0
    %3927 = vmatpush1.bf16.msra.mxu0 0
    %3928 = vmatprep.subr.bf16.mxu0 0
    %3929 = vmatpush1.bf16.msra.mxu0 0
    %3930 = vmatprep.subr.bf16.mxu0 0
    %3931 = vmatpush1.bf16.msra.mxu0 0
    %3932 = vmatprep.subr.bf16.mxu0 0
    %3933 = vmatpush1.bf16.msra.mxu0 0
    %3934 = vmatprep.mubr.bf16.mxu0 0
    %3935 = vmatmul.mubr.bf16.gmra.mrb[0].mxu0 %v3894
    %v3936 = vpop.f32.mrb[0].mxu0
    %v3937 = vadd.f32 0.0, %v3936
    %v3938 = vpop.f32.mrb[0].mxu0
    %v3939 = vpop.f32.mrb[0].mxu0
    %v3940 = vadd.f32 0.0, %v3939
    %v3941 = vpop.f32.mrb[0].mxu0
    %3942 = vmatprep.mubr.bf16.mxu0 0
    %3943 = vmatmul.mubr.bf16.gmra.mrb[0].mxu0 %v3897
    %v3944 = vpop.f32.mrb[0].mxu0
    %v3945 = vadd.f32 0.0, %v3944
    %v3946 = vpop.f32.mrb[0].mxu0
    %v3947 = vpop.f32.mrb[0].mxu0
    %v3948 = vadd.f32 0.0, %v3947
    %v3949 = vpop.f32.mrb[0].mxu0
    %3950 = vdwg.mxu0
    %v3953 = vunpack.c.l.b16 %v3884
    %v3954 = vunpack.c.l.b16 %v3885
    %v3955 = vpack.c.b16 %v3954, %v3953
    %v3957 = vsel %vm325, %v3880, 0
    %v3960 = vsel %vm325, %v3881, 0
    %v3963 = vsel %vm175, %v3955, 0
    %3965 = vmatprep.subr.bf16.mxu0 0
    %3966 = vmatpush1.bf16.msra.mxu0 %v3963
    %3967 = vmatprep.subr.bf16.mxu0 0
    %3968 = vmatpush1.bf16.msra.mxu0 0
    %3969 = vmatprep.subr.bf16.mxu0 0
    %3970 = vmatpush1.bf16.msra.mxu0 0
    %3971 = vmatprep.subr.bf16.mxu0 0
    %3972 = vmatpush1.bf16.msra.mxu0 0
    %3973 = vmatprep.subr.bf16.mxu0 0
    %3974 = vmatpush1.bf16.msra.mxu0 0
    %3975 = vmatprep.subr.bf16.mxu0 0
    %3976 = vmatpush1.bf16.msra.mxu0 0
    %3977 = vmatprep.subr.bf16.mxu0 0
    %3978 = vmatpush1.bf16.msra.mxu0 0
    %3979 = vmatprep.subr.bf16.mxu0 0
    %3980 = vmatpush1.bf16.msra.mxu0 0
    %3981 = vmatprep.subr.bf16.mxu0 0
    %3982 = vmatpush1.bf16.msra.mxu0 0
    %3983 = vmatprep.subr.bf16.mxu0 0
    %3984 = vmatpush1.bf16.msra.mxu0 0
    %3985 = vmatprep.subr.bf16.mxu0 0
    %3986 = vmatpush1.bf16.msra.mxu0 0
    %3987 = vmatprep.subr.bf16.mxu0 0
    %3988 = vmatpush1.bf16.msra.mxu0 0
    %3989 = vmatprep.subr.bf16.mxu0 0
    %3990 = vmatpush1.bf16.msra.mxu0 0
    %3991 = vmatprep.subr.bf16.mxu0 0
    %3992 = vmatpush1.bf16.msra.mxu0 0
    %3993 = vmatprep.subr.bf16.mxu0 0
    %3994 = vmatpush1.bf16.msra.mxu0 0
    %3995 = vmatprep.subr.bf16.mxu0 0
    %3996 = vmatpush1.bf16.msra.mxu0 0
    %3997 = vmatprep.mubr.bf16.mxu0 0
    %3998 = vmatmul.mubr.bf16.gmra.mrb[0].mxu0 %v3957
    %v3999 = vpop.f32.mrb[0].mxu0
    %v4000 = vadd.f32 %v3937, %v3999
    %v4001 = vpop.f32.mrb[0].mxu0
    %v4002 = vpop.f32.mrb[0].mxu0
    %v4003 = vadd.f32 %v3940, %v4002
    %v4004 = vpop.f32.mrb[0].mxu0
    %4005 = vmatprep.mubr.bf16.mxu0 0
    %4006 = vmatmul.mubr.bf16.gmra.mrb[0].mxu0 %v3960
    %v4007 = vpop.f32.mrb[0].mxu0
    %v4008 = vadd.f32 %v3945, %v4007
    %v4009 = vpop.f32.mrb[0].mxu0
    %v4010 = vpop.f32.mrb[0].mxu0
    %v4011 = vadd.f32 %v3948, %v4010
    %v4012 = vpop.f32.mrb[0].mxu0
    %4013 = vdwg.mxu0
    %v4014 = vadd.f32 %v4000, %v137
    %v4015 = vadd.f32 %v4003, %v137
    %v4016 = vadd.f32 %v4008, %v137
    %v4017 = vadd.f32 %v4011, %v137
    %v4018 = vmax.f32 %v4014, 0.0
    %v4019 = vmax.f32 %v4015, 0.0
    %v4020 = vmax.f32 %v4016, 0.0
    %v4021 = vmax.f32 %v4017, 0.0
    %v4022 = vpack.c.bf16 %v4019, %v4018
    %v4023 = vpack.c.bf16 %v4021, %v4020
    %v4024 = vld [vmem:[%s6] sm:$0xf]
    %v4025 = vld [vmem:[%s6 + $0x4] sm:$0xf]
    %v4026 = vld [vmem:[%s6 + $0x8] sm:$0xf]
    %v4027 = vld [vmem:[%s6 + $0xc] sm:$0xf]
    %v4028 = vld [vmem:[%s6 + $0x10] sm:$0xf]
    %v4029 = vld [vmem:[%s6 + $0x14] sm:$0xf]
    %v4030 = vld [vmem:[%s6 + $0x18] sm:$0xf]
    %v4031 = vld [vmem:[%s6 + $0x1c] sm:$0xf]
    %v4032 = vld [vmem:[%s6 + $0x20] sm:$0xf]
    %v4033 = vld [vmem:[%s6 + $0x24] sm:$0xf]
    %v4034 = vld [vmem:[%s6 + $0x28] sm:$0xf]
    %v4035 = vld [vmem:[%s6 + $0x2c] sm:$0xf]
    %v4048 = vunpack.c.l.b16 %v4024
    %v4049 = vunpack.c.l.b16 %v4025
    %v4050 = vunpack.c.l.b16 %v4026
    %v4051 = vunpack.c.l.b16 %v4027
    %v4052 = vunpack.c.l.b16 %v4028
    %v4053 = vunpack.c.l.b16 %v4029
    %v4054 = vunpack.c.l.b16 %v4030
    %v4055 = vunpack.c.l.b16 %v4031
    %v4056 = vunpack.c.l.b16 %v4032
    %v4057 = vunpack.c.l.b16 %v4033
    %v4058 = vunpack.c.l.b16 %v4034
    %v4059 = vunpack.c.l.b16 %v4035
    %v4060 = vpack.c.b16 %v4049, %v4048
    %v4061 = vpack.c.b16 %v4051, %v4050
    %v4062 = vpack.c.b16 %v4053, %v4052
    %v4063 = vpack.c.b16 %v4055, %v4054
    %v4064 = vpack.c.b16 %v4057, %v4056
    %v4065 = vpack.c.b16 %v4059, %v4058
    %v4073 = vsel %vm505, %v4022, 0
    %v4076 = vsel %vm505, %v4023, 0
    %4078 = vmatprep.subr.bf16.mxu0 0
    %4079 = vmatpush1.bf16.msra.mxu0 %v4060
    %4080 = vmatprep.subr.bf16.mxu0 0
    %4081 = vmatpush1.bf16.msra.mxu0 %v4061
    %4082 = vmatprep.subr.bf16.mxu0 0
    %4083 = vmatpush1.bf16.msra.mxu0 %v4062
    %4084 = vmatprep.subr.bf16.mxu0 0
    %4085 = vmatpush1.bf16.msra.mxu0 %v4063
    %4086 = vmatprep.subr.bf16.mxu0 0
    %4087 = vmatpush1.bf16.msra.mxu0 %v4064
    %4088 = vmatprep.subr.bf16.mxu0 0
    %4089 = vmatpush1.bf16.msra.mxu0 %v4065
    %4090 = vmatprep.subr.bf16.mxu0 0
    %4091 = vmatpush1.bf16.msra.mxu0 0
    %4092 = vmatprep.subr.bf16.mxu0 0
    %4093 = vmatpush1.bf16.msra.mxu0 0
    %4094 = vmatprep.subr.bf16.mxu0 0
    %4095 = vmatpush1.bf16.msra.mxu0 0
    %4096 = vmatprep.subr.bf16.mxu0 0
    %4097 = vmatpush1.bf16.msra.mxu0 0
    %4098 = vmatprep.subr.bf16.mxu0 0
    %4099 = vmatpush1.bf16.msra.mxu0 0
    %4100 = vmatprep.subr.bf16.mxu0 0
    %4101 = vmatpush1.bf16.msra.mxu0 0
    %4102 = vmatprep.subr.bf16.mxu0 0
    %4103 = vmatpush1.bf16.msra.mxu0 0
    %4104 = vmatprep.subr.bf16.mxu0 0
    %4105 = vmatpush1.bf16.msra.mxu0 0
    %4106 = vmatprep.subr.bf16.mxu0 0
    %4107 = vmatpush1.bf16.msra.mxu0 0
    %4108 = vmatprep.subr.bf16.mxu0 0
    %4109 = vmatpush1.bf16.msra.mxu0 0
    %4110 = vmatprep.mubr.bf16.mxu0 0
    %4111 = vmatmul.mubr.bf16.gmra.mrb[0].mxu0 %v4073
    %v4112 = vpop.f32.mrb[0].mxu0
    %v4113 = vadd.f32 %v144, %v4112
    %v4114 = vpop.f32.mrb[0].mxu0
    %v4115 = vpop.f32.mrb[0].mxu0
    %v4116 = vadd.f32 %v144, %v4115
    %v4117 = vpop.f32.mrb[0].mxu0
    %4118 = vmatprep.mubr.bf16.mxu0 0
    %4119 = vmatmul.mubr.bf16.gmra.mrb[0].mxu0 %v4076
    %v4120 = vpop.f32.mrb[0].mxu0
    %v4121 = vadd.f32 %v144, %v4120
    %v4122 = vpop.f32.mrb[0].mxu0
    %v4123 = vpop.f32.mrb[0].mxu0
    %v4124 = vadd.f32 %v144, %v4123
    %v4125 = vpop.f32.mrb[0].mxu0
    %4126 = vdwg.mxu0
    %v4127 = vmax.f32 %v4113, 0.0
    %v4128 = vmax.f32 %v4116, 0.0
    %v4129 = vmax.f32 %v4121, 0.0
    %v4130 = vmax.f32 %v4124, 0.0
    %v4131 = vpack.c.bf16 %v4128, %v4127
    %v4132 = vpack.c.bf16 %v4130, %v4129
    %v4133 = vld [vmem:[%s8] sm:$0xf]
    %v4134 = vld [vmem:[%s8 + $0x4] sm:$0xf]
    %v4135 = vld [vmem:[%s8 + $0x8] sm:$0xf]
    %v4136 = vld [vmem:[%s8 + $0xc] sm:$0xf]
    %v4137 = vld [vmem:[%s8 + $0x10] sm:$0xf]
    %v4138 = vld [vmem:[%s8 + $0x14] sm:$0xf]
    %v4139 = vld [vmem:[%s8 + $0x18] sm:$0xf]
    %v4140 = vld [vmem:[%s8 + $0x1c] sm:$0xf]
    %v4141 = vld [vmem:[%s8 + $0x20] sm:$0xf]
    %v4142 = vld [vmem:[%s8 + $0x24] sm:$0xf]
    %v4143 = vld [vmem:[%s8 + $0x28] sm:$0xf]
    %v4144 = vld [vmem:[%s8 + $0x2c] sm:$0xf]
    %v4157 = vunpack.c.l.b16 %v4133
    %v4158 = vunpack.c.l.b16 %v4134
    %v4159 = vunpack.c.l.b16 %v4135
    %v4160 = vunpack.c.l.b16 %v4136
    %v4161 = vunpack.c.l.b16 %v4137
    %v4162 = vunpack.c.l.b16 %v4138
    %v4163 = vunpack.c.l.b16 %v4139
    %v4164 = vunpack.c.l.b16 %v4140
    %v4165 = vunpack.c.l.b16 %v4141
    %v4166 = vunpack.c.l.b16 %v4142
    %v4167 = vunpack.c.l.b16 %v4143
    %v4168 = vunpack.c.l.b16 %v4144
    %v4169 = vpack.c.b16 %v4158, %v4157
    %v4170 = vpack.c.b16 %v4160, %v4159
    %v4171 = vpack.c.b16 %v4162, %v4161
    %v4172 = vpack.c.b16 %v4164, %v4163
    %v4173 = vpack.c.b16 %v4166, %v4165
    %v4174 = vpack.c.b16 %v4168, %v4167
    %v4182 = vsel %vm505, %v4131, 0
    %v4185 = vsel %vm505, %v4132, 0
    %4187 = vmatprep.subr.bf16.mxu0 0
    %4188 = vmatpush1.bf16.msra.mxu0 %v4169
    %4189 = vmatprep.subr.bf16.mxu0 0
    %4190 = vmatpush1.bf16.msra.mxu0 %v4170
    %4191 = vmatprep.subr.bf16.mxu0 0
    %4192 = vmatpush1.bf16.msra.mxu0 %v4171
    %4193 = vmatprep.subr.bf16.mxu0 0
    %4194 = vmatpush1.bf16.msra.mxu0 %v4172
    %4195 = vmatprep.subr.bf16.mxu0 0
    %4196 = vmatpush1.bf16.msra.mxu0 %v4173
    %4197 = vmatprep.subr.bf16.mxu0 0
    %4198 = vmatpush1.bf16.msra.mxu0 %v4174
    %4199 = vmatprep.subr.bf16.mxu0 0
    %4200 = vmatpush1.bf16.msra.mxu0 0
    %4201 = vmatprep.subr.bf16.mxu0 0
    %4202 = vmatpush1.bf16.msra.mxu0 0
    %4203 = vmatprep.subr.bf16.mxu0 0
    %4204 = vmatpush1.bf16.msra.mxu0 0
    %4205 = vmatprep.subr.bf16.mxu0 0
    %4206 = vmatpush1.bf16.msra.mxu0 0
    %4207 = vmatprep.subr.bf16.mxu0 0
    %4208 = vmatpush1.bf16.msra.mxu0 0
    %4209 = vmatprep.subr.bf16.mxu0 0
    %4210 = vmatpush1.bf16.msra.mxu0 0
    %4211 = vmatprep.subr.bf16.mxu0 0
    %4212 = vmatpush1.bf16.msra.mxu0 0
    %4213 = vmatprep.subr.bf16.mxu0 0
    %4214 = vmatpush1.bf16.msra.mxu0 0
    %4215 = vmatprep.subr.bf16.mxu0 0
    %4216 = vmatpush1.bf16.msra.mxu0 0
    %4217 = vmatprep.subr.bf16.mxu0 0
    %4218 = vmatpush1.bf16.msra.mxu0 0
    %4219 = vmatprep.mubr.bf16.mxu0 0
    %4220 = vmatmul.mubr.bf16.gmra.mrb[0].mxu0 %v4182
    %v4221 = vpop.f32.mrb[0].mxu0
    %v4222 = vadd.f32 %v151, %v4221
    %v4223 = vpop.f32.mrb[0].mxu0
    %v4224 = vpop.f32.mrb[0].mxu0
    %v4225 = vadd.f32 %v151, %v4224
    %v4226 = vpop.f32.mrb[0].mxu0
    %4227 = vmatprep.mubr.bf16.mxu0 0
    %4228 = vmatmul.mubr.bf16.gmra.mrb[0].mxu0 %v4185
    %v4229 = vpop.f32.mrb[0].mxu0
    %v4230 = vadd.f32 %v151, %v4229
    %v4231 = vpop.f32.mrb[0].mxu0
    %v4232 = vpop.f32.mrb[0].mxu0
    %v4233 = vadd.f32 %v151, %v4232
    %v4234 = vpop.f32.mrb[0].mxu0
    %4235 = vdwg.mxu0
    %v4236 = vpack.c.bf16 %v4225, %v4222
    %v4237 = vpack.c.bf16 %v4233, %v4230
    %4238 = vmatprep.subr.bf16.mxu0 0
    %4239 = vmatpush1.bf16.msra.mxu0 %v4236
    %4240 = vmatprep.subr.bf16.mxu0 0
    %4241 = vmatpush1.bf16.msra.mxu0 %v4237
    %4242 = vmatprep.subr.bf16.mxu0 0
    %4243 = vmatpush1.bf16.msra.mxu0 0
    %4244 = vmatprep.subr.bf16.mxu0 0
    %4245 = vmatpush1.bf16.msra.mxu0 0
    %4246 = vmatprep.subr.bf16.mxu0 0
    %4247 = vmatpush1.bf16.msra.mxu0 0
    %4248 = vmatprep.subr.bf16.mxu0 0
    %4249 = vmatpush1.bf16.msra.mxu0 0
    %4250 = vmatprep.subr.bf16.mxu0 0
    %4251 = vmatpush1.bf16.msra.mxu0 0
    %4252 = vmatprep.subr.bf16.mxu0 0
    %4253 = vmatpush1.bf16.msra.mxu0 0
    %4254 = vmatprep.subr.bf16.mxu0 0
    %4255 = vmatpush1.bf16.msra.mxu0 0
    %4256 = vmatprep.subr.bf16.mxu0 0
    %4257 = vmatpush1.bf16.msra.mxu0 0
    %4258 = vmatprep.subr.bf16.mxu0 0
    %4259 = vmatpush1.bf16.msra.mxu0 0
    %4260 = vmatprep.subr.bf16.mxu0 0
    %4261 = vmatpush1.bf16.msra.mxu0 0
    %4262 = vmatprep.subr.bf16.mxu0 0
    %4263 = vmatpush1.bf16.msra.mxu0 0
    %4264 = vmatprep.subr.bf16.mxu0 0
    %4265 = vmatpush1.bf16.msra.mxu0 0
    %4266 = vmatprep.subr.bf16.mxu0 0
    %4267 = vmatpush1.bf16.msra.mxu0 0
    %4268 = vmatprep.subr.bf16.mxu0 0
    %4269 = vmatpush1.bf16.msra.mxu0 0
    %4270 = vmatprep.mubr.bf16.mxu0 0
    %4271 = vmatmul.mubr.bf16.gmra.mrb[0].mxu0 %v674
    %v4272 = vpop.f32.mrb[0].mxu0
    %v4273 = vadd.f32 0.0, %v4272
    %v4274 = vpop.f32.mrb[0].mxu0
    %v4275 = vpop.f32.mrb[0].mxu0
    %v4276 = vadd.f32 0.0, %v4275
    %v4277 = vpop.f32.mrb[0].mxu0
    %4278 = vdwg.mxu0
    %v4279 = vpack.c.bf16 %v4276, %v4273
    %4280 = vrot.lane.b32.xlu0 %v3810, 1
    %v4281 = vpop.permute.xlu0 %4280
    %v4284 = vsel %vm718, %v4279, %v4281
    %v4285 = vld [vmem:[%s12] sm:$0xf]
    %v4286 = vld [vmem:[%s12 + $0x4] sm:$0xf]
    %v4287 = vld [vmem:[%s12 + $0x8] sm:$0x7]
    %v4291 = vunpack.c.l.b16 %v4285
    %v4292 = vunpack.c.l.b16 %v4286
    %v4293 = vunpack.c.l.b16 %v4287
    %v4294 = vpack.c.b16 %v4292, %v4291
    %v4295 = vpack.c.b16 %v4293, %v4293
    %v4297 = vsel %vm734, %v4284, 0
    %v4300 = vand.u32 %v4295, %v740
    %4302 = vmatprep.subr.bf16.mxu0 0
    %4303 = vmatpush1.bf16.msra.mxu0 %v4294
    %4304 = vmatprep.subr.bf16.mxu0 0
    %4305 = vmatpush1.bf16.msra.mxu0 %v4300
    %4306 = vmatprep.subr.bf16.mxu0 0
    %4307 = vmatpush1.bf16.msra.mxu0 0
    %4308 = vmatprep.subr.bf16.mxu0 0
    %4309 = vmatpush1.bf16.msra.mxu0 0
    %4310 = vmatprep.subr.bf16.mxu0 0
    %4311 = vmatpush1.bf16.msra.mxu0 0
    %4312 = vmatprep.subr.bf16.mxu0 0
    %4313 = vmatpush1.bf16.msra.mxu0 0
    %4314 = vmatprep.subr.bf16.mxu0 0
    %4315 = vmatpush1.bf16.msra.mxu0 0
    %4316 = vmatprep.subr.bf16.mxu0 0
    %4317 = vmatpush1.bf16.msra.mxu0 0
    %4318 = vmatprep.subr.bf16.mxu0 0
    %4319 = vmatpush1.bf16.msra.mxu0 0
    %4320 = vmatprep.subr.bf16.mxu0 0
    %4321 = vmatpush1.bf16.msra.mxu0 0
    %4322 = vmatprep.subr.bf16.mxu0 0
    %4323 = vmatpush1.bf16.msra.mxu0 0
    %4324 = vmatprep.subr.bf16.mxu0 0
    %4325 = vmatpush1.bf16.msra.mxu0 0
    %4326 = vmatprep.subr.bf16.mxu0 0
    %4327 = vmatpush1.bf16.msra.mxu0 0
    %4328 = vmatprep.subr.bf16.mxu0 0
    %4329 = vmatpush1.bf16.msra.mxu0 0
    %4330 = vmatprep.subr.bf16.mxu0 0
    %4331 = vmatpush1.bf16.msra.mxu0 0
    %4332 = vmatprep.subr.bf16.mxu0 0
    %4333 = vmatpush1.bf16.msra.mxu0 0
    %4334 = vmatprep.mubr.bf16.mxu0 0
    %4335 = vmatmul.mubr.bf16.gmra.mrb[0].mxu0 %v4297
    %v4336 = vpop.f32.mrb[0].mxu0
    %v4337 = vadd.f32 %v232, %v4336
    %v4338 = vpop.f32.mrb[0].mxu0
    %v4339 = vpop.f32.mrb[0].mxu0
    %v4340 = vadd.f32 %v233, %v4339
    %v4341 = vpop.f32.mrb[0].mxu0
    %4342 = vdwg.mxu0
    %v4343 = vxor.u32 %v4337, 2147483648
    %v4344 = vxor.u32 %v4340, 2147483648
    %v4345 = vmul.f32 %v4343, 1.442695
    %v4346 = vpow.pop %v4345
    %v4347 = vmul.f32 %v4344, 1.442695
    %v4348 = vpow.pop %v4347
    %v4349 = vadd.f32 %v4346, 1.0
    %v4350 = vadd.f32 %v4348, 1.0
    %v4351 = vrcp.pop %v4349
    %v4352 = vmul.f32 1.0, %v4351
    %v4353 = vrcp.pop %v4350
    %v4354 = vmul.f32 1.0, %v4353
    %4357 = vrot.lane.b32.xlu0 %v4337, 98
    %v4358 = vpop.permute.xlu0 %4357
    %4359 = vrot.lane.b32.xlu0 %v4340, 98
    %v4360 = vpop.permute.xlu0 %4359
    %v4363 = vmul.f32 %v4352, %v4358
    %v4364 = vmul.f32 %v4354, %v4360
    %4367 = vrot.lane.b32.xlu0 %v4363, 20
    %v4368 = vpop.permute.xlu0 %4367
    %4369 = vrot.lane.b32.xlu0 %v4364, 20
    %v4370 = vpop.permute.xlu0 %4369
    %v4373 = vadd.f32 %v4337, %v4368
    %v4374 = vadd.f32 %v4340, %v4370
    %v4375 = vtanh.pop %v4373
    %v4376 = vtanh.pop %v4374
    %v4377 = vsub.f32 1.0, %v4352
    %v4378 = vsub.f32 1.0, %v4354
    %4381 = vrot.lane.b32.xlu0 %v4375, 118
    %v4382 = vpop.permute.xlu0 %4381
    %4383 = vrot.lane.b32.xlu0 %v4376, 118
    %v4384 = vpop.permute.xlu0 %4383
    %v4387 = vmul.f32 %v4377, %v4382
    %v4388 = vmul.f32 %v4378, %v4384
    %v4389 = vmul.f32 %v4352, %v3798
    %v4390 = vmul.f32 %v4354, %v3799
    %v4391 = vadd.f32 %v4387, %v4389
    %v4392 = vadd.f32 %v4388, %v4390
    %4395 = vrot.lane.b32.xlu0 %v4391, 118
    %v4396 = vpop.permute.xlu0 %4395
    %4397 = vrot.lane.b32.xlu0 %v4392, 118
    %v4398 = vpop.permute.xlu0 %4397
    %4401 = vst.msk [vmem:[#allocation2 + $0x60] sm:$0xff] %vm325, %v4396
    %4402 = vst.msk [vmem:[#allocation2 + $0x68] sm:$0xff] %vm325, %v4398
    %v4403 = vld [vmem:[#allocation2] sm:$0xff]
    %v4404 = vld [vmem:[#allocation2 + $0x8] sm:$0xff]
    %v4405 = vld [vmem:[#allocation2 + $0x10] sm:$0xff]
    %v4406 = vld [vmem:[#allocation2 + $0x18] sm:$0xff]
    %v4407 = vld [vmem:[#allocation2 + $0x20] sm:$0xff]
    %v4408 = vld [vmem:[#allocation2 + $0x28] sm:$0xff]
    %v4409 = vld [vmem:[#allocation2 + $0x30] sm:$0xff]
    %v4410 = vld [vmem:[#allocation2 + $0x38] sm:$0xff]
    %v4411 = vld [vmem:[#allocation2 + $0x40] sm:$0xff]
    %v4412 = vld [vmem:[#allocation2 + $0x48] sm:$0xff]
    %v4413 = vld [vmem:[#allocation2 + $0x50] sm:$0xff]
    %v4414 = vld [vmem:[#allocation2 + $0x58] sm:$0xff]
    %v4415 = vld [vmem:[#allocation2 + $0x60] sm:$0xff]
    %v4416 = vld [vmem:[#allocation2 + $0x68] sm:$0xff]
    %v4417 = vpack.c.bf16 %v4404, %v4403
    %v4418 = vpack.c.bf16 %v4406, %v4405
    %v4419 = vpack.c.bf16 %v4408, %v4407
    %v4420 = vpack.c.bf16 %v4410, %v4409
    %v4421 = vpack.c.bf16 %v4412, %v4411
    %v4422 = vpack.c.bf16 %v4414, %v4413
    %v4423 = vpack.c.bf16 %v4416, %v4415
    %v4424 = vld [vmem:[%s14] sm:$0xf]
    %v4425 = vld [vmem:[%s14 + $0x4] sm:$0x1]
    %v4426 = vld [vmem:[%s15] sm:$0x1]
    %v4428 = vlaneseq
    %v4429 = vshrl.u32 %v4428, 7
    %v4430 = vsub.s32 0, %v4429
    %v4431 = vrot.slane %v4426, %v4430
    %v4435 = vunpack.c.l.b16 %v4424
    %v4436 = vunpack.c.l.b16 %v4425
    %v4437 = vpack.c.b16 %v4436, %v4435
    %v4439 = vsel %vm325, %v4417, 0
    %v4442 = vsel %vm325, %v4418, 0
    %v4445 = vsel %vm325, %v4419, 0
    %v4448 = vsel %vm325, %v4420, 0
    %v4451 = vsel %vm325, %v4421, 0
    %v4454 = vsel %vm325, %v4422, 0
    %v4457 = vsel %vm325, %v4423, 0
    %v4460 = vsel %vm175, %v4437, 0
    %4462 = vmatprep.subr.bf16.mxu0 0
    %4463 = vmatpush1.bf16.msra.mxu0 %v4460
    %4464 = vmatprep.subr.bf16.mxu0 0
    %4465 = vmatpush1.bf16.msra.mxu0 0
    %4466 = vmatprep.subr.bf16.mxu0 0
    %4467 = vmatpush1.bf16.msra.mxu0 0
    %4468 = vmatprep.subr.bf16.mxu0 0
    %4469 = vmatpush1.bf16.msra.mxu0 0
    %4470 = vmatprep.subr.bf16.mxu0 0
    %4471 = vmatpush1.bf16.msra.mxu0 0
    %4472 = vmatprep.subr.bf16.mxu0 0
    %4473 = vmatpush1.bf16.msra.mxu0 0
    %4474 = vmatprep.subr.bf16.mxu0 0
    %4475 = vmatpush1.bf16.msra.mxu0 0
    %4476 = vmatprep.subr.bf16.mxu0 0
    %4477 = vmatpush1.bf16.msra.mxu0 0
    %4478 = vmatprep.subr.bf16.mxu0 0
    %4479 = vmatpush1.bf16.msra.mxu0 0
    %4480 = vmatprep.subr.bf16.mxu0 0
    %4481 = vmatpush1.bf16.msra.mxu0 0
    %4482 = vmatprep.subr.bf16.mxu0 0
    %4483 = vmatpush1.bf16.msra.mxu0 0
    %4484 = vmatprep.subr.bf16.mxu0 0
    %4485 = vmatpush1.bf16.msra.mxu0 0
    %4486 = vmatprep.subr.bf16.mxu0 0
    %4487 = vmatpush1.bf16.msra.mxu0 0
    %4488 = vmatprep.subr.bf16.mxu0 0
    %4489 = vmatpush1.bf16.msra.mxu0 0
    %4490 = vmatprep.subr.bf16.mxu0 0
    %4491 = vmatpush1.bf16.msra.mxu0 0
    %4492 = vmatprep.subr.bf16.mxu0 0
    %4493 = vmatpush1.bf16.msra.mxu0 0
    %4494 = vmatprep.mubr.bf16.mxu0 0
    %4495 = vmatmul.mubr.bf16.gmra.mrb[0].mxu0 %v4439
    %v4496 = vpop.f32.mrb[0].mxu0
    %v4497 = vadd.f32 %v4431, %v4496
    %v4498 = vpop.f32.mrb[0].mxu0
    %v4499 = vpop.f32.mrb[0].mxu0
    %v4500 = vadd.f32 %v4431, %v4499
    %v4501 = vpop.f32.mrb[0].mxu0
    %4502 = vmatprep.mubr.bf16.mxu0 0
    %4503 = vmatmul.mubr.bf16.gmra.mrb[0].mxu0 %v4442
    %v4504 = vpop.f32.mrb[0].mxu0
    %v4505 = vadd.f32 %v4431, %v4504
    %v4506 = vpop.f32.mrb[0].mxu0
    %v4507 = vpop.f32.mrb[0].mxu0
    %v4508 = vadd.f32 %v4431, %v4507
    %v4509 = vpop.f32.mrb[0].mxu0
    %4510 = vmatprep.mubr.bf16.mxu0 0
    %4511 = vmatmul.mubr.bf16.gmra.mrb[0].mxu0 %v4445
    %v4512 = vpop.f32.mrb[0].mxu0
    %v4513 = vadd.f32 %v4431, %v4512
    %v4514 = vpop.f32.mrb[0].mxu0
    %v4515 = vpop.f32.mrb[0].mxu0
    %v4516 = vadd.f32 %v4431, %v4515
    %v4517 = vpop.f32.mrb[0].mxu0
    %4518 = vmatprep.mubr.bf16.mxu0 0
    %4519 = vmatmul.mubr.bf16.gmra.mrb[0].mxu0 %v4448
    %v4520 = vpop.f32.mrb[0].mxu0
    %v4521 = vadd.f32 %v4431, %v4520
    %v4522 = vpop.f32.mrb[0].mxu0
    %v4523 = vpop.f32.mrb[0].mxu0
    %v4524 = vadd.f32 %v4431, %v4523
    %v4525 = vpop.f32.mrb[0].mxu0
    %4526 = vmatprep.mubr.bf16.mxu0 0
    %4527 = vmatmul.mubr.bf16.gmra.mrb[0].mxu0 %v4451
    %v4528 = vpop.f32.mrb[0].mxu0
    %v4529 = vadd.f32 %v4431, %v4528
    %v4530 = vpop.f32.mrb[0].mxu0
    %v4531 = vpop.f32.mrb[0].mxu0
    %v4532 = vadd.f32 %v4431, %v4531
    %v4533 = vpop.f32.mrb[0].mxu0
    %4534 = vmatprep.mubr.bf16.mxu0 0
    %4535 = vmatmul.mubr.bf16.gmra.mrb[0].mxu0 %v4454
    %v4536 = vpop.f32.mrb[0].mxu0
    %v4537 = vadd.f32 %v4431, %v4536
    %v4538 = vpop.f32.mrb[0].mxu0
    %v4539 = vpop.f32.mrb[0].mxu0
    %v4540 = vadd.f32 %v4431, %v4539
    %v4541 = vpop.f32.mrb[0].mxu0
    %4542 = vmatprep.mubr.bf16.mxu0 0
    %4543 = vmatmul.mubr.bf16.gmra.mrb[0].mxu0 %v4457
    %v4544 = vpop.f32.mrb[0].mxu0
    %v4545 = vadd.f32 %v4431, %v4544
    %v4546 = vpop.f32.mrb[0].mxu0
    %v4547 = vpop.f32.mrb[0].mxu0
    %v4548 = vadd.f32 %v4431, %v4547
    %v4549 = vpop.f32.mrb[0].mxu0
    %4550 = vdwg.mxu0
    %4551 = vst [vmem:[#allocation3] sm:$0xff] %v4497
    %4552 = vst [vmem:[#allocation3 + $0x8] sm:$0xff] %v4500
    %4553 = vst [vmem:[#allocation3 + $0x10] sm:$0xff] %v4505
    %4554 = vst [vmem:[#allocation3 + $0x18] sm:$0xff] %v4508
    %4555 = vst [vmem:[#allocation3 + $0x20] sm:$0xff] %v4513
    %4556 = vst [vmem:[#allocation3 + $0x28] sm:$0xff] %v4516
    %4557 = vst [vmem:[#allocation3 + $0x30] sm:$0xff] %v4521
    %4558 = vst [vmem:[#allocation3 + $0x38] sm:$0xff] %v4524
    %4559 = vst [vmem:[#allocation3 + $0x40] sm:$0xff] %v4529
    %4560 = vst [vmem:[#allocation3 + $0x48] sm:$0xff] %v4532
    %4561 = vst [vmem:[#allocation3 + $0x50] sm:$0xff] %v4537
    %4562 = vst [vmem:[#allocation3 + $0x58] sm:$0xff] %v4540
    %4563 = vst [vmem:[#allocation3 + $0x60] sm:$0xff] %v4545
    %4564 = vst [vmem:[#allocation3 + $0x68] sm:$0xff] %v4548
    // Predicated region
    $region66: #{tpu_custom_call.1} parent=1 // pred_check
      _
    $region67: #{tpu_custom_call.1} parent=1 // pred_check_branch
      %4566 = sbr.rel (0) target = $region69
    $region68: #{tpu_custom_call.1} parent=1 // pred_region
      %s4568 = ssub.s32 1792, 1792
      %4569 = vsyncadd [#allocation4], %s4568
      %s4570 = sshll.u32 [#allocation3], 4
      %s4571 = int_to_ptr.vmem [resolvable:$true] %s4570
      %4576 = dma.vmem_to_hbm [thread:$0]  %s4571, 1792, %s16, [#allocation4], 128, 128, 8
    $region69: #{tpu_custom_call.1} parent=1 // pred_fallthru
      _
    // Predicated region
    $region70: #{tpu_custom_call.1} parent=1 // pred_check
      _
    $region71: #{tpu_custom_call.1} parent=1 // pred_check_branch
      %4578 = sbr.rel (0) target = $region73
    $region72: #{tpu_custom_call.1} parent=1 // pred_region
      %4579 = dma.done [#allocation4], 1792
    $region73: #{tpu_custom_call.1} parent=1 // pred_fallthru
      _
    %4580 = vsyncpa [#allocation4], 1

</llo_original>
